<compile_context>
chip_gen: v6e
topology: v6e:2x2x1
jax: 0.10.0
libtpu: 0.0.40
codegen_flags: <defaults>
</compile_context>

<pallas_src>
import jax
import jax.numpy as jnp
from jax.experimental import pallas as pl
from jax.experimental.pallas import tpu as pltpu

CHANNEL = 64
EPS = 1e-5                              # PyTorch BatchNorm2d default eps
VMEM_LIMIT = 48 * 1024 * 1024           # stay well under v7x's 64 MiB physical


def _choose_row_tile(n, c, h, w, max_tile_bytes=2 * 1024 * 1024, min_steps=4):
    """Output-row tile TH: divides H; TH*W is a multiple of 128 lanes (unless
    TH == H); padded input tile fits the per-block VMEM budget; prefer the
    largest TH that still yields >= min_steps grid steps."""
    cands = []
    for th in range(1, h + 1):
        if h % th:
            continue
        if th != h and (th * w) % 128 != 0:
            continue
        if c * ((th + 2) * w + 2) * 4 > max_tile_bytes:
            continue
        cands.append(th)
    if not cands:
        return h  # TODO(synk): odd W would need a masked-store ragged path
    for need in (min_steps, 2, 1):
        ok = [t for t in cands if n * (h // t) >= need]
        if ok:
            return max(ok)
    return max(cands)


def _choose_spatial_tile(n, c, hw, max_tile_bytes=4 * 1024 * 1024, min_steps=4):
    cands = [ts for ts in range(128, hw + 1, 128)
             if hw % ts == 0 and c * ts * 4 <= max_tile_bytes]
    if c * hw * 4 <= max_tile_bytes:
        cands.append(hw)
    cands = sorted(set(cands))
    if not cands:
        return hw
    for need in (min_steps, 2, 1):
        ok = [t for t in cands if n * (hw // t) >= need]
        if ok:
            return max(ok)
    return max(cands)


def _make_conv_stats_kernel(c, w, th):
    """Conv tap-extraction + 9 accumulated MXU matmuls + per-tile centered
    BN partial statistics (XLU cross-lane reduce)."""
    s = th * w                 # output lanes per tile (spatial, >= 128)

    def kernel(xs_ref, w9_ref, b_ref, cm_ref, y_ref, sum_ref, m2_ref):
        # xs_ref: (1, 1, C, L)   L = (TH+2)*W + 2  (1-row halo + 1-elem slack)
        # w9_ref: (9, C, C)      per-tap OI weights
        # b_ref : (C, 1)         conv bias
        # cm_ref: (2, S)         column-validity masks for kw=0 / kw=2 taps
        # y_ref : (1, C, S)      conv output block (channels on sublanes)
        # sum_ref/m2_ref: (1, 1, C, 1) per-tile sum and centered sum-of-squares
        xs = xs_ref[0, 0]                                   # (C, L)
        cm = cm_ref[...]                                    # (2, S)
        acc = jnp.broadcast_to(b_ref[...], (c, s)).astype(jnp.float32)
        for kh in range(3):
            for kw in range(3):
                off = kh * w + kw
                xt = xs[:, off:off + s]                     # flat lane shift
                if kw == 0:
                    xt = xt * cm[0:1, :]                    # zero left-edge cols
                elif kw == 2:
                    xt = xt * cm[1:2, :]                    # zero right-edge cols
                acc = acc + jnp.dot(w9_ref[kh * 3 + kw], xt,
                                    preferred_element_type=jnp.float32)
        y_ref[0] = acc
        tsum = jnp.sum(acc, axis=-1, keepdims=True)         # (C, 1)
        d = acc - tsum * (1.0 / s)                          # centered -> no cancellation
        sum_ref[0, 0] = tsum
        m2_ref[0, 0] = jnp.sum(d * d, axis=-1, keepdims=True)

    return kernel


def _bn_tanh_kernel(y_ref, scale_ref, shift_ref, o_ref):
    # y_ref/o_ref: (1, C, TS2)  channels on sublanes, spatial on lanes
    # scale_ref/shift_ref: (C, 1)
    o_ref[0] = jnp.tanh(y_ref[0] * scale_ref[...] + shift_ref[...])


def cov4_forward(x_nchw, conv_w_oihw, conv_b, bn_gamma, bn_beta):
    n, c, h, w = x_nchw.shape
    hw = h * w
    m = n * hw
    x = x_nchw.astype(jnp.float32)

    # ---- kernel 1 setup: NCHW-native conv, in-kernel tap extraction ---------
    th = _choose_row_tile(n, c, h, w)
    n_rt = h // th
    s = th * w                      # spatial lanes per output block
    l = (th + 2) * w + 2            # flat padded-tile length (halo + slack)

    # zero-pad rows for the conv, flatten spatial, 1-element slack each end so
    # the corner taps' -1/+1 flat offsets stay in bounds (values are masked).
    x_ph = jnp.pad(x, ((0, 0), (0, 0), (1, 1), (0, 0))).reshape(n, c, (h + 2) * w)
    x_ph = jnp.pad(x_ph, ((0, 0), (0, 0), (1, 1)))
    # overlapping row tiles (2 halo rows each): the only wrapper-side copy.
    x_tiles = jnp.stack([x_ph[:, :, r * th * w: r * th * w + l]
                         for r in range(n_rt)], axis=1)      # (N, n_rt, C, L)

    # per-tap (C_out, C_in) weights, tap-major:  w9[kh*3+kw] = W[:, :, kh, kw]
    w9 = jnp.transpose(conv_w_oihw.astype(jnp.float32), (2, 3, 0, 1)).reshape(9, c, c)
    b2 = conv_b.astype(jnp.float32).reshape(c, 1)

    wpos = jnp.arange(s, dtype=jnp.int32) % w
    col_masks = jnp.stack([(wpos != 0).astype(jnp.float32),
                           (wpos != w - 1).astype(jnp.float32)], axis=0)   # (2, S)

    cost1 = pl.CostEstimate(
        flops=2 * m * 9 * c * c,
        transcendentals=0,
        bytes_accessed=4 * (n * n_rt * c * l + 9 * c * c + c + 2 * s
                            + m * c + 2 * n * n_rt * c))

    y, psum, pm2 = pl.pallas_call(
        _make_conv_stats_kernel(c, w, th),
        out_shape=(
            jax.ShapeDtypeStruct((n, c, hw), jnp.float32),
            jax.ShapeDtypeStruct((n, n_rt, c, 1), jnp.float32),
            jax.ShapeDtypeStruct((n, n_rt, c, 1), jnp.float32),
        ),
        grid_spec=pltpu.PrefetchScalarGridSpec(
            num_scalar_prefetch=0,
            grid=(n, n_rt),
            in_specs=[
                pl.BlockSpec((1, 1, c, l), lambda i, r: (i, r, 0, 0)),
                pl.BlockSpec((9, c, c), lambda i, r: (0, 0, 0)),
                pl.BlockSpec((c, 1), lambda i, r: (0, 0)),
                pl.BlockSpec((2, s), lambda i, r: (0, 0)),
            ],
            out_specs=(
                pl.BlockSpec((1, c, s), lambda i, r: (i, 0, r)),
                pl.BlockSpec((1, 1, c, 1), lambda i, r: (i, r, 0, 0)),
                pl.BlockSpec((1, 1, c, 1), lambda i, r: (i, r, 0, 0)),
            ),
        ),
        compiler_params=pltpu.CompilerParams(
            dimension_semantics=("parallel", "parallel"),
            vmem_limit_bytes=VMEM_LIMIT),
        cost_estimate=cost1,
    )(x_tiles, w9, b2, col_masks)

    # ---- BN batch statistics (training-mode, biased var), Chan combine ------
    cnt = jnp.float32(m)
    sf = jnp.float32(s)
    sums = psum[..., 0]                                  # (N, n_rt, C)
    m2s = pm2[..., 0]
    mean = jnp.sum(sums, axis=(0, 1)) / cnt              # (C,)
    tile_mean = sums / sf
    var = (jnp.sum(m2s, axis=(0, 1))
           + sf * jnp.sum((tile_mean - mean) ** 2, axis=(0, 1))) / cnt
    var = jnp.maximum(var, 0.0)
    scale = bn_gamma.astype(jnp.float32) / jnp.sqrt(var + EPS)
    shift = bn_beta.astype(jnp.float32) - mean * scale

    # ---- kernel 2: fused normalize + tanh, NCHW-native, lane-dense ----------
    ts2 = _choose_spatial_tile(n, c, hw)
    cost2 = pl.CostEstimate(flops=2 * m * c, transcendentals=m * c,
                            bytes_accessed=4 * (2 * m * c + 2 * c))
    out = pl.pallas_call(
        _bn_tanh_kernel,
        out_shape=jax.ShapeDtypeStruct((n, c, hw), jnp.float32),
        grid_spec=pltpu.PrefetchScalarGridSpec(
            num_scalar_prefetch=0,
            grid=(n, hw // ts2),
            in_specs=[
                pl.BlockSpec((1, c, ts2), lambda i, j: (i, 0, j)),
                pl.BlockSpec((c, 1), lambda i, j: (0, 0)),
                pl.BlockSpec((c, 1), lambda i, j: (0, 0)),
            ],
            out_specs=pl.BlockSpec((1, c, ts2), lambda i, j: (i, 0, j)),
        ),
        compiler_params=pltpu.CompilerParams(
            dimension_semantics=("parallel", "parallel"),
            vmem_limit_bytes=VMEM_LIMIT),
        cost_estimate=cost2,
    )(y, scale.reshape(c, 1), shift.reshape(c, 1))

    return out.reshape(n, c, h, w)                       # free reshape, no transpose


def _reference(x_nchw, w_oihw, b, gamma, beta):
    y = jax.lax.conv_general_dilated(
        x_nchw, w_oihw, window_strides=(1, 1), padding=((1, 1), (1, 1)),
        dimension_numbers=("NCHW", "OIHW", "NCHW"))
    y = y + b.reshape(1, -1, 1, 1)
    mean = jnp.mean(y, axis=(0, 2, 3), keepdims=True)
    var = jnp.mean((y - mean) ** 2, axis=(0, 2, 3), keepdims=True)
    yhat = (y - mean) / jnp.sqrt(var + EPS)
    return jnp.tanh(yhat * gamma.reshape(1, -1, 1, 1) + beta.reshape(1, -1, 1, 1))


if __name__ == "__main__":
    key = jax.random.PRNGKey(0)
    kx, kw, kb, kg, kbeta = jax.random.split(key, 5)

    N, C, H, W = 2, CHANNEL, 16, 16
    x = jax.random.normal(kx, (N, C, H, W), jnp.float32)

    # deterministic synthetic parameters (shapes from the module __init__)
    conv_w = 0.1 * jax.random.normal(kw, (C, C, 3, 3), jnp.float32)     # OIHW
    conv_b = 0.1 * jax.random.normal(kb, (C,), jnp.float32)
    bn_gamma = 1.0 + 0.1 * jax.random.normal(kg, (C,), jnp.float32)
    bn_beta = 0.1 * jax.random.normal(kbeta, (C,), jnp.float32)

    fwd = jax.jit(cov4_forward)
    out = jax.block_until_ready(fwd(x, conv_w, conv_b, bn_gamma, bn_beta))

    ref = _reference(x, conv_w, conv_b, bn_gamma, bn_beta)
    assert out.shape == (N, C, H, W), out.shape
    err = float(jnp.max(jnp.abs(out - ref)))
    assert jnp.allclose(out, ref, atol=1e-4, rtol=1e-4), err
    print("KERNEL_OK")
</pallas_src>

<mosaic_0001>
module attributes {stable_mosaic.version = 11 : i64} {
  func.func @kernel(%arg0: i32, %arg1: i32, %arg2: memref<1x1x64x162xf32, #tpu.memory_space<vmem>>, %arg3: memref<9x64x64xf32, #tpu.memory_space<vmem>>, %arg4: memref<64x1xf32, #tpu.memory_space<vmem>>, %arg5: memref<2x128xf32, #tpu.memory_space<vmem>>, %arg6: memref<1x64x128xf32, #tpu.memory_space<vmem>>, %arg7: memref<1x1x64x1xf32, #tpu.memory_space<vmem>>, %arg8: memref<1x1x64x1xf32, #tpu.memory_space<vmem>>) attributes {dimension_semantics = [#tpu.dimension_semantics<parallel>, #tpu.dimension_semantics<parallel>], iteration_bounds = array<i64: 2, 2>, scalar_prefetch = 0 : i64, scratch_operands = 0 : i64, tpu.core_type = #tpu.core_type<tc>, window_params = [{transform_indices = @transform_0, window_bounds = array<i64: 1, 1, 64, 162>}, {pipeline_mode = #tpu.pipeline_mode<synchronous>, transform_indices = @transform_1, window_bounds = array<i64: 9, 64, 64>}, {pipeline_mode = #tpu.pipeline_mode<synchronous>, transform_indices = @transform_2, window_bounds = array<i64: 64, 1>}, {pipeline_mode = #tpu.pipeline_mode<synchronous>, transform_indices = @transform_3, window_bounds = array<i64: 2, 128>}, {transform_indices = @transform_4, window_bounds = array<i64: 1, 64, 128>}, {transform_indices = @transform_5, window_bounds = array<i64: 1, 1, 64, 1>}, {transform_indices = @transform_6, window_bounds = array<i64: 1, 1, 64, 1>}]} {
    %c0 = arith.constant 0 : index
    %c0_0 = arith.constant 0 : index
    %c0_1 = arith.constant 0 : index
    %c0_2 = arith.constant 0 : index
    %0 = vector.load %arg2[%c0, %c0_0, %c0_1, %c0_2] : memref<1x1x64x162xf32, #tpu.memory_space<vmem>>, vector<1x1x64x162xf32>
    %1 = vector.shape_cast %0 : vector<1x1x64x162xf32> to vector<64x162xf32>
    %c0_3 = arith.constant 0 : index
    %c0_4 = arith.constant 0 : index
    %2 = vector.load %arg5[%c0_3, %c0_4] : memref<2x128xf32, #tpu.memory_space<vmem>>, vector<2x128xf32>
    %c0_5 = arith.constant 0 : index
    %c0_6 = arith.constant 0 : index
    %3 = vector.load %arg4[%c0_5, %c0_6] : memref<64x1xf32, #tpu.memory_space<vmem>>, vector<64x1xf32>
    %4 = vector.shape_cast %3 : vector<64x1xf32> to vector<64x1xf32>
    %5 = vector.broadcast %4 : vector<64x1xf32> to vector<64x128xf32>
    %6 = vector.extract_strided_slice %1 {offsets = [0, 0], sizes = [64, 128], strides = [1, 1]} : vector<64x162xf32> to vector<64x128xf32>
    %7 = vector.extract_strided_slice %2 {offsets = [0, 0], sizes = [1, 128], strides = [1, 1]} : vector<2x128xf32> to vector<1x128xf32>
    %8 = vector.broadcast %7 : vector<1x128xf32> to vector<64x128xf32>
    %9 = arith.mulf %6, %8 : vector<64x128xf32>
    %c0_7 = arith.constant 0 : index
    %c0_8 = arith.constant 0 : index
    %c0_9 = arith.constant 0 : index
    %10 = vector.load %arg3[%c0_7, %c0_8, %c0_9] : memref<9x64x64xf32, #tpu.memory_space<vmem>>, vector<1x64x64xf32>
    %11 = vector.shape_cast %10 : vector<1x64x64xf32> to vector<64x64xf32>
    %cst = arith.constant dense<0.000000e+00> : vector<64x128xf32>
    %12 = tpu.matmul %11, %9, %cst {dimension_numbers = #tpu.dot_dimension_numbers<[1], [0], [0], [1], [0, 0, 1, 1], [], []>} : vector<64x64xf32>, vector<64x128xf32>, vector<64x128xf32> -> vector<64x128xf32>
    %13 = arith.addf %5, %12 : vector<64x128xf32>
    %14 = vector.extract_strided_slice %1 {offsets = [0, 1], sizes = [64, 128], strides = [1, 1]} : vector<64x162xf32> to vector<64x128xf32>
    %c1 = arith.constant 1 : index
    %c0_10 = arith.constant 0 : index
    %c0_11 = arith.constant 0 : index
    %15 = vector.load %arg3[%c1, %c0_10, %c0_11] : memref<9x64x64xf32, #tpu.memory_space<vmem>>, vector<1x64x64xf32>
    %16 = vector.shape_cast %15 : vector<1x64x64xf32> to vector<64x64xf32>
    %cst_12 = arith.constant dense<0.000000e+00> : vector<64x128xf32>
    %17 = tpu.matmul %16, %14, %cst_12 {dimension_numbers = #tpu.dot_dimension_numbers<[1], [0], [0], [1], [0, 0, 1, 1], [], []>} : vector<64x64xf32>, vector<64x128xf32>, vector<64x128xf32> -> vector<64x128xf32>
    %18 = arith.addf %13, %17 : vector<64x128xf32>
    %19 = vector.extract_strided_slice %1 {offsets = [0, 2], sizes = [64, 128], strides = [1, 1]} : vector<64x162xf32> to vector<64x128xf32>
    %20 = vector.extract_strided_slice %2 {offsets = [1, 0], sizes = [1, 128], strides = [1, 1]} : vector<2x128xf32> to vector<1x128xf32>
    %21 = vector.broadcast %20 : vector<1x128xf32> to vector<64x128xf32>
    %22 = arith.mulf %19, %21 : vector<64x128xf32>
    %c2 = arith.constant 2 : index
    %c0_13 = arith.constant 0 : index
    %c0_14 = arith.constant 0 : index
    %23 = vector.load %arg3[%c2, %c0_13, %c0_14] : memref<9x64x64xf32, #tpu.memory_space<vmem>>, vector<1x64x64xf32>
    %24 = vector.shape_cast %23 : vector<1x64x64xf32> to vector<64x64xf32>
    %cst_15 = arith.constant dense<0.000000e+00> : vector<64x128xf32>
    %25 = tpu.matmul %24, %22, %cst_15 {dimension_numbers = #tpu.dot_dimension_numbers<[1], [0], [0], [1], [0, 0, 1, 1], [], []>} : vector<64x64xf32>, vector<64x128xf32>, vector<64x128xf32> -> vector<64x128xf32>
    %26 = arith.addf %18, %25 : vector<64x128xf32>
    %27 = vector.extract_strided_slice %1 {offsets = [0, 16], sizes = [64, 128], strides = [1, 1]} : vector<64x162xf32> to vector<64x128xf32>
    %28 = vector.extract_strided_slice %2 {offsets = [0, 0], sizes = [1, 128], strides = [1, 1]} : vector<2x128xf32> to vector<1x128xf32>
    %29 = vector.broadcast %28 : vector<1x128xf32> to vector<64x128xf32>
    %30 = arith.mulf %27, %29 : vector<64x128xf32>
    %c3 = arith.constant 3 : index
    %c0_16 = arith.constant 0 : index
    %c0_17 = arith.constant 0 : index
    %31 = vector.load %arg3[%c3, %c0_16, %c0_17] : memref<9x64x64xf32, #tpu.memory_space<vmem>>, vector<1x64x64xf32>
    %32 = vector.shape_cast %31 : vector<1x64x64xf32> to vector<64x64xf32>
    %cst_18 = arith.constant dense<0.000000e+00> : vector<64x128xf32>
    %33 = tpu.matmul %32, %30, %cst_18 {dimension_numbers = #tpu.dot_dimension_numbers<[1], [0], [0], [1], [0, 0, 1, 1], [], []>} : vector<64x64xf32>, vector<64x128xf32>, vector<64x128xf32> -> vector<64x128xf32>
    %34 = arith.addf %26, %33 : vector<64x128xf32>
    %35 = vector.extract_strided_slice %1 {offsets = [0, 17], sizes = [64, 128], strides = [1, 1]} : vector<64x162xf32> to vector<64x128xf32>
    %c4 = arith.constant 4 : index
    %c0_19 = arith.constant 0 : index
    %c0_20 = arith.constant 0 : index
    %36 = vector.load %arg3[%c4, %c0_19, %c0_20] : memref<9x64x64xf32, #tpu.memory_space<vmem>>, vector<1x64x64xf32>
    %37 = vector.shape_cast %36 : vector<1x64x64xf32> to vector<64x64xf32>
    %cst_21 = arith.constant dense<0.000000e+00> : vector<64x128xf32>
    %38 = tpu.matmul %37, %35, %cst_21 {dimension_numbers = #tpu.dot_dimension_numbers<[1], [0], [0], [1], [0, 0, 1, 1], [], []>} : vector<64x64xf32>, vector<64x128xf32>, vector<64x128xf32> -> vector<64x128xf32>
    %39 = arith.addf %34, %38 : vector<64x128xf32>
    %40 = vector.extract_strided_slice %1 {offsets = [0, 18], sizes = [64, 128], strides = [1, 1]} : vector<64x162xf32> to vector<64x128xf32>
    %41 = vector.extract_strided_slice %2 {offsets = [1, 0], sizes = [1, 128], strides = [1, 1]} : vector<2x128xf32> to vector<1x128xf32>
    %42 = vector.broadcast %41 : vector<1x128xf32> to vector<64x128xf32>
    %43 = arith.mulf %40, %42 : vector<64x128xf32>
    %c5 = arith.constant 5 : index
    %c0_22 = arith.constant 0 : index
    %c0_23 = arith.constant 0 : index
    %44 = vector.load %arg3[%c5, %c0_22, %c0_23] : memref<9x64x64xf32, #tpu.memory_space<vmem>>, vector<1x64x64xf32>
    %45 = vector.shape_cast %44 : vector<1x64x64xf32> to vector<64x64xf32>
    %cst_24 = arith.constant dense<0.000000e+00> : vector<64x128xf32>
    %46 = tpu.matmul %45, %43, %cst_24 {dimension_numbers = #tpu.dot_dimension_numbers<[1], [0], [0], [1], [0, 0, 1, 1], [], []>} : vector<64x64xf32>, vector<64x128xf32>, vector<64x128xf32> -> vector<64x128xf32>
    %47 = arith.addf %39, %46 : vector<64x128xf32>
    %48 = vector.extract_strided_slice %1 {offsets = [0, 32], sizes = [64, 128], strides = [1, 1]} : vector<64x162xf32> to vector<64x128xf32>
    %49 = vector.extract_strided_slice %2 {offsets = [0, 0], sizes = [1, 128], strides = [1, 1]} : vector<2x128xf32> to vector<1x128xf32>
    %50 = vector.broadcast %49 : vector<1x128xf32> to vector<64x128xf32>
    %51 = arith.mulf %48, %50 : vector<64x128xf32>
    %c6 = arith.constant 6 : index
    %c0_25 = arith.constant 0 : index
    %c0_26 = arith.constant 0 : index
    %52 = vector.load %arg3[%c6, %c0_25, %c0_26] : memref<9x64x64xf32, #tpu.memory_space<vmem>>, vector<1x64x64xf32>
    %53 = vector.shape_cast %52 : vector<1x64x64xf32> to vector<64x64xf32>
    %cst_27 = arith.constant dense<0.000000e+00> : vector<64x128xf32>
    %54 = tpu.matmul %53, %51, %cst_27 {dimension_numbers = #tpu.dot_dimension_numbers<[1], [0], [0], [1], [0, 0, 1, 1], [], []>} : vector<64x64xf32>, vector<64x128xf32>, vector<64x128xf32> -> vector<64x128xf32>
    %55 = arith.addf %47, %54 : vector<64x128xf32>
    %56 = vector.extract_strided_slice %1 {offsets = [0, 33], sizes = [64, 128], strides = [1, 1]} : vector<64x162xf32> to vector<64x128xf32>
    %c7 = arith.constant 7 : index
    %c0_28 = arith.constant 0 : index
    %c0_29 = arith.constant 0 : index
    %57 = vector.load %arg3[%c7, %c0_28, %c0_29] : memref<9x64x64xf32, #tpu.memory_space<vmem>>, vector<1x64x64xf32>
    %58 = vector.shape_cast %57 : vector<1x64x64xf32> to vector<64x64xf32>
    %cst_30 = arith.constant dense<0.000000e+00> : vector<64x128xf32>
    %59 = tpu.matmul %58, %56, %cst_30 {dimension_numbers = #tpu.dot_dimension_numbers<[1], [0], [0], [1], [0, 0, 1, 1], [], []>} : vector<64x64xf32>, vector<64x128xf32>, vector<64x128xf32> -> vector<64x128xf32>
    %60 = arith.addf %55, %59 : vector<64x128xf32>
    %61 = vector.extract_strided_slice %1 {offsets = [0, 34], sizes = [64, 128], strides = [1, 1]} : vector<64x162xf32> to vector<64x128xf32>
    %62 = vector.extract_strided_slice %2 {offsets = [1, 0], sizes = [1, 128], strides = [1, 1]} : vector<2x128xf32> to vector<1x128xf32>
    %63 = vector.broadcast %62 : vector<1x128xf32> to vector<64x128xf32>
    %64 = arith.mulf %61, %63 : vector<64x128xf32>
    %c8 = arith.constant 8 : index
    %c0_31 = arith.constant 0 : index
    %c0_32 = arith.constant 0 : index
    %65 = vector.load %arg3[%c8, %c0_31, %c0_32] : memref<9x64x64xf32, #tpu.memory_space<vmem>>, vector<1x64x64xf32>
    %66 = vector.shape_cast %65 : vector<1x64x64xf32> to vector<64x64xf32>
    %cst_33 = arith.constant dense<0.000000e+00> : vector<64x128xf32>
    %67 = tpu.matmul %66, %64, %cst_33 {dimension_numbers = #tpu.dot_dimension_numbers<[1], [0], [0], [1], [0, 0, 1, 1], [], []>} : vector<64x64xf32>, vector<64x128xf32>, vector<64x128xf32> -> vector<64x128xf32>
    %68 = arith.addf %60, %67 : vector<64x128xf32>
    %c0_34 = arith.constant 0 : index
    %c0_35 = arith.constant 0 : index
    %c0_36 = arith.constant 0 : index
    %69 = vector.load %arg6[%c0_34, %c0_35, %c0_36] : memref<1x64x128xf32, #tpu.memory_space<vmem>>, vector<1x64x128xf32>
    %70 = vector.shape_cast %69 : vector<1x64x128xf32> to vector<64x128xf32>
    %71 = vector.shape_cast %68 : vector<64x128xf32> to vector<1x64x128xf32>
    tpu.vector_store %arg6[%c0_34, %c0_35, %c0_36], %71 {strides = array<i32>} : memref<1x64x128xf32, #tpu.memory_space<vmem>>, vector<1x64x128xf32>,
    %cst_37 = arith.constant dense<0.000000e+00> : vector<64xf32>
    %72 = vector.multi_reduction <add>, %68, %cst_37 [1] : vector<64x128xf32> to vector<64xf32>
    %73 = vector.shape_cast %72 : vector<64xf32> to vector<64x1xf32>
    %cst_38 = arith.constant 7.812500e-03 : f32
    %74 = vector.broadcast %cst_38 : f32 to vector<64x1xf32>
    %75 = arith.mulf %73, %74 : vector<64x1xf32>
    %76 = vector.broadcast %75 : vector<64x1xf32> to vector<64x128xf32>
    %77 = arith.subf %68, %76 : vector<64x128xf32>
    %c0_39 = arith.constant 0 : index
    %c0_40 = arith.constant 0 : index
    %c0_41 = arith.constant 0 : index
    %c0_42 = arith.constant 0 : index
    %78 = vector.load %arg7[%c0_39, %c0_40, %c0_41, %c0_42] : memref<1x1x64x1xf32, #tpu.memory_space<vmem>>, vector<1x1x64x1xf32>
    %79 = vector.shape_cast %78 : vector<1x1x64x1xf32> to vector<64x1xf32>
    %80 = vector.shape_cast %73 : vector<64x1xf32> to vector<1x1x64x1xf32>
    tpu.vector_store %arg7[%c0_39, %c0_40, %c0_41, %c0_42], %80 {strides = array<i32>} : memref<1x1x64x1xf32, #tpu.memory_space<vmem>>, vector<1x1x64x1xf32>,
    %81 = arith.mulf %77, %77 : vector<64x128xf32>
    %cst_43 = arith.constant dense<0.000000e+00> : vector<64xf32>
    %82 = vector.multi_reduction <add>, %81, %cst_43 [1] : vector<64x128xf32> to vector<64xf32>
    %83 = vector.shape_cast %82 : vector<64xf32> to vector<64x1xf32>
    %c0_44 = arith.constant 0 : index
    %c0_45 = arith.constant 0 : index
    %c0_46 = arith.constant 0 : index
    %c0_47 = arith.constant 0 : index
    %84 = vector.load %arg8[%c0_44, %c0_45, %c0_46, %c0_47] : memref<1x1x64x1xf32, #tpu.memory_space<vmem>>, vector<1x1x64x1xf32>
    %85 = vector.shape_cast %84 : vector<1x1x64x1xf32> to vector<64x1xf32>
    %86 = vector.shape_cast %83 : vector<64x1xf32> to vector<1x1x64x1xf32>
    tpu.vector_store %arg8[%c0_44, %c0_45, %c0_46, %c0_47], %86 {strides = array<i32>} : memref<1x1x64x1xf32, #tpu.memory_space<vmem>>, vector<1x1x64x1xf32>,
    return
  }
  func.func @transform_0(%arg0: i32, %arg1: i32) -> (i32, i32, i32, i32) {
    %c0_i32 = arith.constant 0 : i32
    %c0_i32_0 = arith.constant 0 : i32
    %c0_i32_1 = arith.constant 0 : i32
    return %arg0, %arg1, %c0_i32, %c0_i32_0 : i32, i32, i32, i32
  }
  func.func @transform_1(%arg0: i32, %arg1: i32) -> (i32, i32, i32) {
    %c0_i32 = arith.constant 0 : i32
    %c0_i32_0 = arith.constant 0 : i32
    %c0_i32_1 = arith.constant 0 : i32
    %c0_i32_2 = arith.constant 0 : i32
    return %c0_i32, %c0_i32_0, %c0_i32_1 : i32, i32, i32
  }
  func.func @transform_2(%arg0: i32, %arg1: i32) -> (i32, i32) {
    %c0_i32 = arith.constant 0 : i32
    %c0_i32_0 = arith.constant 0 : i32
    %c0_i32_1 = arith.constant 0 : i32
    return %c0_i32, %c0_i32_0 : i32, i32
  }
  func.func @transform_3(%arg0: i32, %arg1: i32) -> (i32, i32) {
    %c0_i32 = arith.constant 0 : i32
    %c0_i32_0 = arith.constant 0 : i32
    %c0_i32_1 = arith.constant 0 : i32
    return %c0_i32, %c0_i32_0 : i32, i32
  }
  func.func @transform_4(%arg0: i32, %arg1: i32) -> (i32, i32, i32) {
    %c0_i32 = arith.constant 0 : i32
    %c0_i32_0 = arith.constant 0 : i32
    return %arg0, %c0_i32, %arg1 : i32, i32, i32
  }
  func.func @transform_5(%arg0: i32, %arg1: i32) -> (i32, i32, i32, i32) {
    %c0_i32 = arith.constant 0 : i32
    %c0_i32_0 = arith.constant 0 : i32
    %c0_i32_1 = arith.constant 0 : i32
    return %arg0, %arg1, %c0_i32, %c0_i32_0 : i32, i32, i32, i32
  }
  func.func @transform_6(%arg0: i32, %arg1: i32) -> (i32, i32, i32, i32) {
    %c0_i32 = arith.constant 0 : i32
    %c0_i32_0 = arith.constant 0 : i32
    %c0_i32_1 = arith.constant 0 : i32
    return %arg0, %arg1, %c0_i32, %c0_i32_0 : i32, i32, i32, i32
  }
}

module attributes {stable_mosaic.version = 11 : i64} {
  func.func @_bn_tanh_kernel(%arg0: i32, %arg1: i32, %arg2: memref<1x64x128xf32, #tpu.memory_space<vmem>>, %arg3: memref<64x1xf32, #tpu.memory_space<vmem>>, %arg4: memref<64x1xf32, #tpu.memory_space<vmem>>, %arg5: memref<1x64x128xf32, #tpu.memory_space<vmem>>) attributes {dimension_semantics = [#tpu.dimension_semantics<parallel>, #tpu.dimension_semantics<parallel>], iteration_bounds = array<i64: 2, 2>, scalar_prefetch = 0 : i64, scratch_operands = 0 : i64, tpu.core_type = #tpu.core_type<tc>, window_params = [{transform_indices = @transform_0, window_bounds = array<i64: 1, 64, 128>}, {pipeline_mode = #tpu.pipeline_mode<synchronous>, transform_indices = @transform_1, window_bounds = array<i64: 64, 1>}, {pipeline_mode = #tpu.pipeline_mode<synchronous>, transform_indices = @transform_2, window_bounds = array<i64: 64, 1>}, {transform_indices = @transform_3, window_bounds = array<i64: 1, 64, 128>}]} {
    %c0 = arith.constant 0 : index
    %c0_0 = arith.constant 0 : index
    %c0_1 = arith.constant 0 : index
    %0 = vector.load %arg2[%c0, %c0_0, %c0_1] : memref<1x64x128xf32, #tpu.memory_space<vmem>>, vector<1x64x128xf32>
    %1 = vector.shape_cast %0 : vector<1x64x128xf32> to vector<64x128xf32>
    %c0_2 = arith.constant 0 : index
    %c0_3 = arith.constant 0 : index
    %2 = vector.load %arg3[%c0_2, %c0_3] : memref<64x1xf32, #tpu.memory_space<vmem>>, vector<64x1xf32>
    %3 = vector.broadcast %2 : vector<64x1xf32> to vector<64x128xf32>
    %4 = arith.mulf %1, %3 : vector<64x128xf32>
    %c0_4 = arith.constant 0 : index
    %c0_5 = arith.constant 0 : index
    %5 = vector.load %arg4[%c0_4, %c0_5] : memref<64x1xf32, #tpu.memory_space<vmem>>, vector<64x1xf32>
    %6 = vector.broadcast %5 : vector<64x1xf32> to vector<64x128xf32>
    %7 = arith.addf %4, %6 : vector<64x128xf32>
    %8 = math.tanh %7 : vector<64x128xf32>
    %c0_6 = arith.constant 0 : index
    %c0_7 = arith.constant 0 : index
    %c0_8 = arith.constant 0 : index
    %9 = vector.load %arg5[%c0_6, %c0_7, %c0_8] : memref<1x64x128xf32, #tpu.memory_space<vmem>>, vector<1x64x128xf32>
    %10 = vector.shape_cast %9 : vector<1x64x128xf32> to vector<64x128xf32>
    %11 = vector.shape_cast %8 : vector<64x128xf32> to vector<1x64x128xf32>
    tpu.vector_store %arg5[%c0_6, %c0_7, %c0_8], %11 {strides = array<i32>} : memref<1x64x128xf32, #tpu.memory_space<vmem>>, vector<1x64x128xf32>,
    return
  }
  func.func @transform_0(%arg0: i32, %arg1: i32) -> (i32, i32, i32) {
    %c0_i32 = arith.constant 0 : i32
    %c0_i32_0 = arith.constant 0 : i32
    return %arg0, %c0_i32, %arg1 : i32, i32, i32
  }
  func.func @transform_1(%arg0: i32, %arg1: i32) -> (i32, i32) {
    %c0_i32 = arith.constant 0 : i32
    %c0_i32_0 = arith.constant 0 : i32
    %c0_i32_1 = arith.constant 0 : i32
    return %c0_i32, %c0_i32_0 : i32, i32
  }
  func.func @transform_2(%arg0: i32, %arg1: i32) -> (i32, i32) {
    %c0_i32 = arith.constant 0 : i32
    %c0_i32_0 = arith.constant 0 : i32
    %c0_i32_1 = arith.constant 0 : i32
    return %c0_i32, %c0_i32_0 : i32, i32
  }
  func.func @transform_3(%arg0: i32, %arg1: i32) -> (i32, i32, i32) {
    %c0_i32 = arith.constant 0 : i32
    %c0_i32_0 = arith.constant 0 : i32
    return %arg0, %c0_i32, %arg1 : i32, i32, i32
  }
}

</mosaic_0001>

<llo_original>
// kernel: cov4_forward.3
$region0: #{cov4_forward.3}
  #allocation0 [shape = 'u32[]', space=smem, size = 0x4, offset = 0x4, fixed_abs, tag = 'smem constant byte address 0x4 - core index']
  #allocation1 [shape = 'u32[144,128]{1,0:T(1,128)}', space=vmem, size = 0x12000, scoped, tag = 'internal scratch']
  %s0 = inlined_call_operand.vmem [shape: f32[2,64,256], index: 0, kind: input, shape index: {}]
  %s1 = inlined_call_operand.vmem [shape: f32[64,1], index: 1, kind: input, shape index: {}]
  %s2 = inlined_call_operand.vmem [shape: f32[64,1], index: 2, kind: input, shape index: {}]
  %s3 = inlined_call_operand.vmem [shape: f32[2,64,256], index: 3, kind: output, shape index: {}]
  %s4 = sld [smem:[#allocation0]]
  $region117: #{cov4_forward.3} parent=0
    _
  %s6 = ssub.s32 1, %s4
  %s7 = scalar_select 0, %s6, %s4
  $region1: #{cov4_forward.3} parent=0
    #allocation2 [shape = 'u8[65536]{0}', space=vmem, size = 0x10000, scoped, tag = 'input window, operand 0']
    #allocation3 [shape = 'u8[65536]{0}', space=vmem, size = 0x10000, scoped, tag = 'output window, operand 0']
    loop: start=0, step=1, limit=6
    $region2: #{cov4_forward.3} parent=1 // loop_pre_header
      _
    $region3: #{cov4_forward.3} parent=1 // loop_header
      %s9 = sphi 0, %s13
      %p10 = scmp.ge.s32.totalorder %s9, 6
      %s16 = sphi 0, %s28
      %s17 = sphi 0, %s24
      %s18 = sphi 0, %s16
      %s19 = sphi 0, %s17
      %s20 = sphi 0, %s18
      %s21 = sphi 0, %s19
      %s33 = sphi 0, %s35
      %s36 = sphi 0, %s33
      %s37 = sphi 0, %s36
      %s53 = sphi 0, %s37
      %s57 = sphi 0, %s57
      %s59 = sphi 0, %s57
      %s60 = sphi 0, %s59
      %s74 = sphi 0, %s60
      %s78 = sphi 0, %s78
      %s80 = sphi 0, %s78
      %s81 = sphi 0, %s80
      %s95 = sphi 0, %s81
      %s103 = sphi 0, %s105
      %s106 = sphi 0, %s103
      %s107 = sphi 0, %s106
      %s123 = sphi 0, %s107
    $region4: #{cov4_forward.3} parent=1 // loop_header_branch
      %12 = sbr.rel (%p10) target = $region8
    $region5: #{cov4_forward.3} parent=1 // loop_body
      %s14 = ssub.s32 %s9, 1
      %s15 = ssub.s32 %s9, 2
      %s22 = sadd.s32 1, %s17
      %p23 = scmp.ge.s32.totalorder %s22, 2
      %s24 = scalar_select %p23, 0, %s22
      %s25 = sadd.s32 1, %s16
      %s26 = scalar_select %p23, %s25, %s16
      %p27 = scmp.ge.s32.totalorder %s26, 2
      %s28 = scalar_select %p27, 0, %s26
      %s29 = ssub.s32 %s16, %s28
      %s30 = ssub.s32 %s17, %s24
      %s31 = sor.u32 %s29, %s30
      %p32 = scmp.eq.s32.totalorder %s31, 0
      %s34 = sadd.s32 %s33, 1
      %s35 = scalar_select %p32, %s33, %s34
      %p38 = pneg %p32
      %p39 = scmp.eq.s32.totalorder %s9, 3
      %p40 = por %p38, %p39
      %p41 = scmp.ne.s32.totalorder %s33, %s36
      %p42 = scmp.eq.s32.totalorder %s9, 0
      %p43 = por %p41, %p42
      %p44 = scmp.ne.s32.totalorder %s33, %s36
      %p45 = scmp.eq.s32.totalorder %s14, 3
      %p46 = por %p44, %p45
      %p47 = scmp.ne.s32.totalorder %s36, %s37
      %p48 = scmp.eq.s32.totalorder %s14, 0
      %p49 = por %p47, %p48
      %p50 = scmp.ne.s32.totalorder %s36, %s37
      %p51 = scmp.eq.s32.totalorder %s15, 3
      %p52 = por %p50, %p51
      %p54 = scmp.ne.s32.totalorder %s37, %s53
      %p55 = scmp.eq.s32.totalorder %s15, 0
      %p56 = por %p54, %p55
      %s58 = sadd.s32 %s57, 1
      %p61 = scmp.eq.s32.totalorder %s9, 3
      %p62 = scmp.ne.s32.totalorder %s57, %s59
      %p63 = scmp.eq.s32.totalorder %s9, 0
      %p64 = por %p62, %p63
      %p65 = scmp.ne.s32.totalorder %s57, %s59
      %p66 = scmp.eq.s32.totalorder %s14, 3
      %p67 = por %p65, %p66
      %p68 = scmp.ne.s32.totalorder %s59, %s60
      %p69 = scmp.eq.s32.totalorder %s14, 0
      %p70 = por %p68, %p69
      %p71 = scmp.ne.s32.totalorder %s59, %s60
      %p72 = scmp.eq.s32.totalorder %s15, 3
      %p73 = por %p71, %p72
      %p75 = scmp.ne.s32.totalorder %s60, %s74
      %p76 = scmp.eq.s32.totalorder %s15, 0
      %p77 = por %p75, %p76
      %s79 = sadd.s32 %s78, 1
      %p82 = scmp.eq.s32.totalorder %s9, 3
      %p83 = scmp.ne.s32.totalorder %s78, %s80
      %p84 = scmp.eq.s32.totalorder %s9, 0
      %p85 = por %p83, %p84
      %p86 = scmp.ne.s32.totalorder %s78, %s80
      %p87 = scmp.eq.s32.totalorder %s14, 3
      %p88 = por %p86, %p87
      %p89 = scmp.ne.s32.totalorder %s80, %s81
      %p90 = scmp.eq.s32.totalorder %s14, 0
      %p91 = por %p89, %p90
      %p92 = scmp.ne.s32.totalorder %s80, %s81
      %p93 = scmp.eq.s32.totalorder %s15, 3
      %p94 = por %p92, %p93
      %p96 = scmp.ne.s32.totalorder %s81, %s95
      %p97 = scmp.eq.s32.totalorder %s15, 0
      %p98 = por %p96, %p97
      %s99 = ssub.s32 %s16, %s28
      %s100 = ssub.s32 %s17, %s24
      %s101 = sor.u32 %s99, %s100
      %p102 = scmp.eq.s32.totalorder %s101, 0
      %s104 = sadd.s32 %s103, 1
      %s105 = scalar_select %p102, %s103, %s104
      %p108 = pneg %p102
      %p109 = scmp.eq.s32.totalorder %s9, 3
      %p110 = por %p108, %p109
      %p111 = scmp.ne.s32.totalorder %s103, %s106
      %p112 = scmp.eq.s32.totalorder %s9, 0
      %p113 = por %p111, %p112
      %p114 = scmp.ne.s32.totalorder %s103, %s106
      %p115 = scmp.eq.s32.totalorder %s14, 3
      %p116 = por %p114, %p115
      %p117 = scmp.ne.s32.totalorder %s106, %s107
      %p118 = scmp.eq.s32.totalorder %s14, 0
      %p119 = por %p117, %p118
      %p120 = scmp.ne.s32.totalorder %s106, %s107
      %p121 = scmp.eq.s32.totalorder %s15, 3
      %p122 = por %p120, %p121
      %p124 = scmp.ne.s32.totalorder %s107, %s123
      %p125 = scmp.eq.s32.totalorder %s15, 0
      %p126 = por %p124, %p125
      %p127 = scmp.le.s32.totalorder 1, %s9
      %p128 = scmp.lt.s32.totalorder %s9, 5
      %p129 = pnand %p127, %p128
      %p130 = pneg %p129
      // Predicated region
      $region9: #{cov4_forward.3} parent=5 // pred_check
        _
      $region10: #{cov4_forward.3} parent=5 // pred_check_branch
        %132 = sbr.rel (%p129) target = $region12
      $region11: #{cov4_forward.3} parent=5 // pred_region
        %s133 = ssub.s32 %s9, 1
        // Predicated region
        $region13: #{cov4_forward.3} parent=11 // pred_check
          %p134 = pneg %p70
        $region14: #{cov4_forward.3} parent=11 // pred_check_branch
          %136 = sbr.rel (%p134) target = $region16
        $region15: #{cov4_forward.3} parent=11 // pred_region
          _
        $region16: #{cov4_forward.3} parent=11 // pred_fallthru
          _
        // Predicated region
        $region17: #{cov4_forward.3} parent=11 // pred_check
          %p137 = pneg %p91
        $region18: #{cov4_forward.3} parent=11 // pred_check_branch
          %139 = sbr.rel (%p137) target = $region20
        $region19: #{cov4_forward.3} parent=11 // pred_region
          _
        $region20: #{cov4_forward.3} parent=11 // pred_fallthru
          _
      $region12: #{cov4_forward.3} parent=5 // pred_fallthru
        _
      %p140 = scmp.lt.s32.totalorder %s9, 4
      // Predicated region
      $region21: #{cov4_forward.3} parent=5 // pred_check
        %p141 = pneg %p140
      $region22: #{cov4_forward.3} parent=5 // pred_check_branch
        %143 = sbr.rel (%p141) target = $region24
      $region23: #{cov4_forward.3} parent=5 // pred_region
        // Predicated region
        $region25: #{cov4_forward.3} parent=23 // pred_check
          %p144 = pneg %p43
        $region26: #{cov4_forward.3} parent=23 // pred_check_branch
          %146 = sbr.rel (%p144) target = $region28
        $region27: #{cov4_forward.3} parent=23 // pred_region
          %s147 = sand.u32 %s33, 1
          %s148 = sand.u32 %s33, 1
          %s149 = smul.addr %s148, 64
          %s150 = scalar_lea.vmem [#allocation2], %s149
          %s151 = smul.addr %s16, 16
          %s152 = sadd.s32 %s17, %s151
          %s153 = smul.addr %s152, 8
          %s154 = scalar_lea.vmem %s0, %s153
          // Predicated region
          $region29: #{cov4_forward.3} parent=27 // pred_check
            _
          $region30: #{cov4_forward.3} parent=27 // pred_check_branch
            %156 = sbr.rel (0) target = $region32
          $region31: #{cov4_forward.3} parent=27 // pred_region
            // Predicated region
            $region33: #{cov4_forward.3} parent=31 // pred_check
              _
            $region34: #{cov4_forward.3} parent=31 // pred_check_branch
              %158 = sbr.rel (0) target = $region36
            $region35: #{cov4_forward.3} parent=31 // pred_region
              // Predicated region
              $region48: #{cov4_forward.3} parent=35 // pred_check
                _
              $region49: #{cov4_forward.3} parent=35 // pred_check_branch
                %188 = sbr.rel (0) target = $region51
              $region50: #{cov4_forward.3} parent=35 // pred_region
                loop: start=0, step=1, limit=1
                $region52: #{cov4_forward.3} parent=50 // loop_pre_header
                  _
                $region53: #{cov4_forward.3} parent=50 // loop_header
                  %s190 = sphi 0, %s194
                  %p191 = scmp.ge.s32.totalorder %s190, 1
                  %s195 = sphi %s154, %s154
                  %s196 = sphi %s150, %s150
                $region54: #{cov4_forward.3} parent=50 // loop_header_branch
                  %193 = sbr.rel (%p191) target = $region58
                $region55: #{cov4_forward.3} parent=50 // loop_body
                  %v197 = vld [vmem:[%s195] sm:$0xff]
                  %198 = vst [vmem:[%s196] sm:$0xff] %v197
                  %v199 = vld [vmem:[%s195 + $0x10] sm:$0xff]
                  %200 = vst [vmem:[%s196 + $0x8] sm:$0xff] %v199
                  %v201 = vld [vmem:[%s195 + $0x20] sm:$0xff]
                  %202 = vst [vmem:[%s196 + $0x10] sm:$0xff] %v201
                  %v203 = vld [vmem:[%s195 + $0x30] sm:$0xff]
                  %204 = vst [vmem:[%s196 + $0x18] sm:$0xff] %v203
                  %v205 = vld [vmem:[%s195 + $0x40] sm:$0xff]
                  %206 = vst [vmem:[%s196 + $0x20] sm:$0xff] %v205
                  %v207 = vld [vmem:[%s195 + $0x50] sm:$0xff]
                  %208 = vst [vmem:[%s196 + $0x28] sm:$0xff] %v207
                  %v209 = vld [vmem:[%s195 + $0x60] sm:$0xff]
                  %210 = vst [vmem:[%s196 + $0x30] sm:$0xff] %v209
                  %v211 = vld [vmem:[%s195 + $0x70] sm:$0xff]
                  %212 = vst [vmem:[%s196 + $0x38] sm:$0xff] %v211
                $region56: #{cov4_forward.3} parent=50 // loop_footer
                  %s194 = sadd.s32 1, %s190
                $region57: #{cov4_forward.3} parent=50 // loop_footer_branch
                  %189 = sbr.rel target = $region53
                $region58: #{cov4_forward.3} parent=50 // loop_exit
                  _
              $region51: #{cov4_forward.3} parent=35 // pred_fallthru
                _
              // Predicated region
              $region59: #{cov4_forward.3} parent=35 // pred_check
                _
              $region60: #{cov4_forward.3} parent=35 // pred_check_branch
                %214 = sbr.rel target = $region62
              $region61: #{cov4_forward.3} parent=35 // pred_region
                _
              $region62: #{cov4_forward.3} parent=35 // pred_fallthru
                _
            $region36: #{cov4_forward.3} parent=31 // pred_fallthru
              _
            // Predicated region
            $region37: #{cov4_forward.3} parent=31 // pred_check
              _
            $region38: #{cov4_forward.3} parent=31 // pred_check_branch
              %160 = sbr.rel target = $region40
            $region39: #{cov4_forward.3} parent=31 // pred_region
              %s162 = ssub.s32 256, 1
              loop: start=0, step=1, limit=1
              $region41: #{cov4_forward.3} parent=39 // loop_pre_header
                _
              $region42: #{cov4_forward.3} parent=39 // loop_header
                %s164 = sphi 0, %s168
                %p165 = scmp.ge.s32.totalorder %s164, 1
                %s169 = sphi %s154, %s154
                %s170 = sphi %s150, %s150
              $region43: #{cov4_forward.3} parent=39 // loop_header_branch
                %167 = sbr.rel (%p165) target = $region47
              $region44: #{cov4_forward.3} parent=39 // loop_body
                %v171 = vld [vmem:[%s169] sm:%s162]
                %172 = vst [vmem:[%s170] sm:%s162] %v171
                %v173 = vld [vmem:[%s169 + $0x10] sm:%s162]
                %174 = vst [vmem:[%s170 + $0x8] sm:%s162] %v173
                %v175 = vld [vmem:[%s169 + $0x20] sm:%s162]
                %176 = vst [vmem:[%s170 + $0x10] sm:%s162] %v175
                %v177 = vld [vmem:[%s169 + $0x30] sm:%s162]
                %178 = vst [vmem:[%s170 + $0x18] sm:%s162] %v177
                %v179 = vld [vmem:[%s169 + $0x40] sm:%s162]
                %180 = vst [vmem:[%s170 + $0x20] sm:%s162] %v179
                %v181 = vld [vmem:[%s169 + $0x50] sm:%s162]
                %182 = vst [vmem:[%s170 + $0x28] sm:%s162] %v181
                %v183 = vld [vmem:[%s169 + $0x60] sm:%s162]
                %184 = vst [vmem:[%s170 + $0x30] sm:%s162] %v183
                %v185 = vld [vmem:[%s169 + $0x70] sm:%s162]
                %186 = vst [vmem:[%s170 + $0x38] sm:%s162] %v185
              $region45: #{cov4_forward.3} parent=39 // loop_footer
                %s168 = sadd.s32 1, %s164
              $region46: #{cov4_forward.3} parent=39 // loop_footer_branch
                %163 = sbr.rel target = $region42
              $region47: #{cov4_forward.3} parent=39 // loop_exit
                _
            $region40: #{cov4_forward.3} parent=31 // pred_fallthru
              _
          $region32: #{cov4_forward.3} parent=27 // pred_fallthru
            _
          %215 = vnop
        $region28: #{cov4_forward.3} parent=23 // pred_fallthru
          _
      $region24: #{cov4_forward.3} parent=5 // pred_fallthru
        _
      %p216 = scmp.le.s32.totalorder 1, %s9
      %p217 = scmp.lt.s32.totalorder %s9, 5
      %p218 = pnand %p216, %p217
      %p219 = pneg %p218
      // Predicated region
      $region63: #{cov4_forward.3} parent=5 // pred_check
        _
      $region64: #{cov4_forward.3} parent=5 // pred_check_branch
        %221 = sbr.rel (%p218) target = $region66
      $region65: #{cov4_forward.3} parent=5 // pred_region
        %s222 = ssub.s32 %s9, 1
        %s223 = sand.u32 %s36, 1
        %s224 = sand.u32 %s36, 1
        %s225 = smul.addr %s224, 64
        %s226 = scalar_lea.vmem [#allocation2], %s225
        // Predicated region
        $region67: #{cov4_forward.3} parent=65 // pred_check
          %p227 = pneg %p49
        $region68: #{cov4_forward.3} parent=65 // pred_check_branch
          %229 = sbr.rel (%p227) target = $region70
        $region69: #{cov4_forward.3} parent=65 // pred_region
          _
        $region70: #{cov4_forward.3} parent=65 // pred_fallthru
          _
        %s230 = sand.u32 %s36, 1
        %s231 = sand.u32 %s36, 1
        %s232 = smul.addr %s231, 64
        %s233 = scalar_lea.vmem [#allocation2], %s232
        %p234 = pneg %p49
        %p235 = pneg %p46
        %p236 = pneg %p70
        %p237 = pneg %p67
        %p238 = pneg %p91
        %p239 = pneg %p88
        %p240 = pneg %p119
        %p241 = pneg %p116
        %s242 = sand.u32 %s106, 1
        %s243 = sand.u32 %s106, 1
        %s244 = smul.addr %s243, 64
        %s245 = scalar_lea.vmem [#allocation3], %s244
        %v246 = vld [vmem:[%s226] sm:$0xff]
        %v247 = vld [vmem:[%s226 + $0x8] sm:$0xff]
        %v248 = vld [vmem:[%s226 + $0x10] sm:$0xff]
        %v249 = vld [vmem:[%s226 + $0x18] sm:$0xff]
        %v250 = vld [vmem:[%s226 + $0x20] sm:$0xff]
        %v251 = vld [vmem:[%s226 + $0x28] sm:$0xff]
        %v252 = vld [vmem:[%s226 + $0x30] sm:$0xff]
        %v253 = vld [vmem:[%s226 + $0x38] sm:$0xff]
        %v254 = vld [vmem:[%s1] sm:$0xff]
        %v255 = vld [vmem:[%s1 + $0x8] sm:$0xff]
        %v256 = vld [vmem:[%s1 + $0x10] sm:$0xff]
        %v257 = vld [vmem:[%s1 + $0x18] sm:$0xff]
        %v258 = vld [vmem:[%s1 + $0x20] sm:$0xff]
        %v259 = vld [vmem:[%s1 + $0x28] sm:$0xff]
        %v260 = vld [vmem:[%s1 + $0x30] sm:$0xff]
        %v261 = vld [vmem:[%s1 + $0x38] sm:$0xff]
        %263 = vset.pattern.permute.xlu0 0
        %264 = vperm.xlu0 %263, %v254
        %v265 = vpop.permute.xlu0 %264
        %268 = vset.pattern.permute.xlu0 0
        %269 = vperm.xlu0 %268, %v255
        %v270 = vpop.permute.xlu0 %269
        %273 = vset.pattern.permute.xlu0 0
        %274 = vperm.xlu0 %273, %v256
        %v275 = vpop.permute.xlu0 %274
        %278 = vset.pattern.permute.xlu0 0
        %279 = vperm.xlu0 %278, %v257
        %v280 = vpop.permute.xlu0 %279
        %283 = vset.pattern.permute.xlu0 0
        %284 = vperm.xlu0 %283, %v258
        %v285 = vpop.permute.xlu0 %284
        %288 = vset.pattern.permute.xlu0 0
        %289 = vperm.xlu0 %288, %v259
        %v290 = vpop.permute.xlu0 %289
        %293 = vset.pattern.permute.xlu0 0
        %294 = vperm.xlu0 %293, %v260
        %v295 = vpop.permute.xlu0 %294
        %298 = vset.pattern.permute.xlu0 0
        %299 = vperm.xlu0 %298, %v261
        %v300 = vpop.permute.xlu0 %299
        %v302 = vmul.f32 %v246, %v265
        %v303 = vmul.f32 %v247, %v270
        %v304 = vmul.f32 %v248, %v275
        %v305 = vmul.f32 %v249, %v280
        %v306 = vmul.f32 %v250, %v285
        %v307 = vmul.f32 %v251, %v290
        %v308 = vmul.f32 %v252, %v295
        %v309 = vmul.f32 %v253, %v300
        %v310 = vld [vmem:[%s2] sm:$0xff]
        %v311 = vld [vmem:[%s2 + $0x8] sm:$0xff]
        %v312 = vld [vmem:[%s2 + $0x10] sm:$0xff]
        %v313 = vld [vmem:[%s2 + $0x18] sm:$0xff]
        %v314 = vld [vmem:[%s2 + $0x20] sm:$0xff]
        %v315 = vld [vmem:[%s2 + $0x28] sm:$0xff]
        %v316 = vld [vmem:[%s2 + $0x30] sm:$0xff]
        %v317 = vld [vmem:[%s2 + $0x38] sm:$0xff]
        %319 = vset.pattern.permute.xlu0 0
        %320 = vperm.xlu0 %319, %v310
        %v321 = vpop.permute.xlu0 %320
        %324 = vset.pattern.permute.xlu0 0
        %325 = vperm.xlu0 %324, %v311
        %v326 = vpop.permute.xlu0 %325
        %329 = vset.pattern.permute.xlu0 0
        %330 = vperm.xlu0 %329, %v312
        %v331 = vpop.permute.xlu0 %330
        %334 = vset.pattern.permute.xlu0 0
        %335 = vperm.xlu0 %334, %v313
        %v336 = vpop.permute.xlu0 %335
        %339 = vset.pattern.permute.xlu0 0
        %340 = vperm.xlu0 %339, %v314
        %v341 = vpop.permute.xlu0 %340
        %344 = vset.pattern.permute.xlu0 0
        %345 = vperm.xlu0 %344, %v315
        %v346 = vpop.permute.xlu0 %345
        %349 = vset.pattern.permute.xlu0 0
        %350 = vperm.xlu0 %349, %v316
        %v351 = vpop.permute.xlu0 %350
        %354 = vset.pattern.permute.xlu0 0
        %355 = vperm.xlu0 %354, %v317
        %v356 = vpop.permute.xlu0 %355
        %v358 = vadd.f32 %v302, %v321
        %v359 = vadd.f32 %v303, %v326
        %v360 = vadd.f32 %v304, %v331
        %v361 = vadd.f32 %v305, %v336
        %v362 = vadd.f32 %v306, %v341
        %v363 = vadd.f32 %v307, %v346
        %v364 = vadd.f32 %v308, %v351
        %v365 = vadd.f32 %v309, %v356
        %v366 = vtanh.pop %v358
        %v367 = vtanh.pop %v359
        %v368 = vtanh.pop %v360
        %v369 = vtanh.pop %v361
        %v370 = vtanh.pop %v362
        %v371 = vtanh.pop %v363
        %v372 = vtanh.pop %v364
        %v373 = vtanh.pop %v365
        %374 = vst [vmem:[%s245] sm:$0xff] %v366
        %375 = vst [vmem:[%s245 + $0x8] sm:$0xff] %v367
        %376 = vst [vmem:[%s245 + $0x10] sm:$0xff] %v368
        %377 = vst [vmem:[%s245 + $0x18] sm:$0xff] %v369
        %378 = vst [vmem:[%s245 + $0x20] sm:$0xff] %v370
        %379 = vst [vmem:[%s245 + $0x28] sm:$0xff] %v371
        %380 = vst [vmem:[%s245 + $0x30] sm:$0xff] %v372
        %381 = vst [vmem:[%s245 + $0x38] sm:$0xff] %v373
        %s382 = sand.u32 %s106, 1
        %s383 = sand.u32 %s106, 1
        %s384 = smul.addr %s383, 64
        %s385 = scalar_lea.vmem [#allocation3], %s384
        // Predicated region
        $region71: #{cov4_forward.3} parent=65 // pred_check
          %p386 = pneg %p116
        $region72: #{cov4_forward.3} parent=65 // pred_check_branch
          %388 = sbr.rel (%p386) target = $region74
        $region73: #{cov4_forward.3} parent=65 // pred_region
          %s389 = smul.addr %s18, 16
          %s390 = sadd.s32 %s19, %s389
          %s391 = smul.addr %s390, 8
          %s392 = scalar_lea.vmem %s3, %s391
          // Predicated region
          $region75: #{cov4_forward.3} parent=73 // pred_check
            _
          $region76: #{cov4_forward.3} parent=73 // pred_check_branch
            %394 = sbr.rel (0) target = $region78
          $region77: #{cov4_forward.3} parent=73 // pred_region
            // Predicated region
            $region79: #{cov4_forward.3} parent=77 // pred_check
              _
            $region80: #{cov4_forward.3} parent=77 // pred_check_branch
              %396 = sbr.rel (0) target = $region82
            $region81: #{cov4_forward.3} parent=77 // pred_region
              // Predicated region
              $region94: #{cov4_forward.3} parent=81 // pred_check
                _
              $region95: #{cov4_forward.3} parent=81 // pred_check_branch
                %426 = sbr.rel (0) target = $region97
              $region96: #{cov4_forward.3} parent=81 // pred_region
                loop: start=0, step=1, limit=1
                $region98: #{cov4_forward.3} parent=96 // loop_pre_header
                  _
                $region99: #{cov4_forward.3} parent=96 // loop_header
                  %s428 = sphi 0, %s432
                  %p429 = scmp.ge.s32.totalorder %s428, 1
                  %s433 = sphi %s385, %s385
                  %s434 = sphi %s392, %s392
                $region100: #{cov4_forward.3} parent=96 // loop_header_branch
                  %431 = sbr.rel (%p429) target = $region104
                $region101: #{cov4_forward.3} parent=96 // loop_body
                  %v435 = vld [vmem:[%s433] sm:$0xff]
                  %436 = vst [vmem:[%s434] sm:$0xff] %v435
                  %v437 = vld [vmem:[%s433 + $0x8] sm:$0xff]
                  %438 = vst [vmem:[%s434 + $0x10] sm:$0xff] %v437
                  %v439 = vld [vmem:[%s433 + $0x10] sm:$0xff]
                  %440 = vst [vmem:[%s434 + $0x20] sm:$0xff] %v439
                  %v441 = vld [vmem:[%s433 + $0x18] sm:$0xff]
                  %442 = vst [vmem:[%s434 + $0x30] sm:$0xff] %v441
                  %v443 = vld [vmem:[%s433 + $0x20] sm:$0xff]
                  %444 = vst [vmem:[%s434 + $0x40] sm:$0xff] %v443
                  %v445 = vld [vmem:[%s433 + $0x28] sm:$0xff]
                  %446 = vst [vmem:[%s434 + $0x50] sm:$0xff] %v445
                  %v447 = vld [vmem:[%s433 + $0x30] sm:$0xff]
                  %448 = vst [vmem:[%s434 + $0x60] sm:$0xff] %v447
                  %v449 = vld [vmem:[%s433 + $0x38] sm:$0xff]
                  %450 = vst [vmem:[%s434 + $0x70] sm:$0xff] %v449
                $region102: #{cov4_forward.3} parent=96 // loop_footer
                  %s432 = sadd.s32 1, %s428
                $region103: #{cov4_forward.3} parent=96 // loop_footer_branch
                  %427 = sbr.rel target = $region99
                $region104: #{cov4_forward.3} parent=96 // loop_exit
                  _
              $region97: #{cov4_forward.3} parent=81 // pred_fallthru
                _
              // Predicated region
              $region105: #{cov4_forward.3} parent=81 // pred_check
                _
              $region106: #{cov4_forward.3} parent=81 // pred_check_branch
                %452 = sbr.rel target = $region108
              $region107: #{cov4_forward.3} parent=81 // pred_region
                _
              $region108: #{cov4_forward.3} parent=81 // pred_fallthru
                _
            $region82: #{cov4_forward.3} parent=77 // pred_fallthru
              _
            // Predicated region
            $region83: #{cov4_forward.3} parent=77 // pred_check
              _
            $region84: #{cov4_forward.3} parent=77 // pred_check_branch
              %398 = sbr.rel target = $region86
            $region85: #{cov4_forward.3} parent=77 // pred_region
              %s400 = ssub.s32 256, 1
              loop: start=0, step=1, limit=1
              $region87: #{cov4_forward.3} parent=85 // loop_pre_header
                _
              $region88: #{cov4_forward.3} parent=85 // loop_header
                %s402 = sphi 0, %s406
                %p403 = scmp.ge.s32.totalorder %s402, 1
                %s407 = sphi %s385, %s385
                %s408 = sphi %s392, %s392
              $region89: #{cov4_forward.3} parent=85 // loop_header_branch
                %405 = sbr.rel (%p403) target = $region93
              $region90: #{cov4_forward.3} parent=85 // loop_body
                %v409 = vld [vmem:[%s407] sm:%s400]
                %410 = vst [vmem:[%s408] sm:%s400] %v409
                %v411 = vld [vmem:[%s407 + $0x8] sm:%s400]
                %412 = vst [vmem:[%s408 + $0x10] sm:%s400] %v411
                %v413 = vld [vmem:[%s407 + $0x10] sm:%s400]
                %414 = vst [vmem:[%s408 + $0x20] sm:%s400] %v413
                %v415 = vld [vmem:[%s407 + $0x18] sm:%s400]
                %416 = vst [vmem:[%s408 + $0x30] sm:%s400] %v415
                %v417 = vld [vmem:[%s407 + $0x20] sm:%s400]
                %418 = vst [vmem:[%s408 + $0x40] sm:%s400] %v417
                %v419 = vld [vmem:[%s407 + $0x28] sm:%s400]
                %420 = vst [vmem:[%s408 + $0x50] sm:%s400] %v419
                %v421 = vld [vmem:[%s407 + $0x30] sm:%s400]
                %422 = vst [vmem:[%s408 + $0x60] sm:%s400] %v421
                %v423 = vld [vmem:[%s407 + $0x38] sm:%s400]
                %424 = vst [vmem:[%s408 + $0x70] sm:%s400] %v423
              $region91: #{cov4_forward.3} parent=85 // loop_footer
                %s406 = sadd.s32 1, %s402
              $region92: #{cov4_forward.3} parent=85 // loop_footer_branch
                %401 = sbr.rel target = $region88
              $region93: #{cov4_forward.3} parent=85 // loop_exit
                _
            $region86: #{cov4_forward.3} parent=77 // pred_fallthru
              _
          $region78: #{cov4_forward.3} parent=73 // pred_fallthru
            _
          %453 = vnop
        $region74: #{cov4_forward.3} parent=65 // pred_fallthru
          _
      $region66: #{cov4_forward.3} parent=5 // pred_fallthru
        _
      %p454 = scmp.le.s32.totalorder 2, %s9
      // Predicated region
      $region109: #{cov4_forward.3} parent=5 // pred_check
        %p455 = pneg %p454
      $region110: #{cov4_forward.3} parent=5 // pred_check_branch
        %457 = sbr.rel (%p455) target = $region112
      $region111: #{cov4_forward.3} parent=5 // pred_region
        %s458 = ssub.s32 %s9, 2
        // Predicated region
        $region113: #{cov4_forward.3} parent=111 // pred_check
          %p459 = pneg %p122
        $region114: #{cov4_forward.3} parent=111 // pred_check_branch
          %461 = sbr.rel (%p459) target = $region116
        $region115: #{cov4_forward.3} parent=111 // pred_region
          %s462 = sand.u32 %s107, 1
          %s463 = sand.u32 %s107, 1
          %s464 = smul.addr %s463, 64
          %s465 = scalar_lea.vmem [#allocation3], %s464
        $region116: #{cov4_forward.3} parent=111 // pred_fallthru
          _
      $region112: #{cov4_forward.3} parent=5 // pred_fallthru
        _
    $region6: #{cov4_forward.3} parent=1 // loop_footer
      %s13 = sadd.s32 1, %s9
    $region7: #{cov4_forward.3} parent=1 // loop_footer_branch
      %8 = sbr.rel target = $region3
    $region8: #{cov4_forward.3} parent=1 // loop_exit
      _

// kernel: cov4_forward.2
$region0: #{cov4_forward.2}
  #allocation0 [shape = 'u32[]', space=smem, size = 0x4, offset = 0x4, fixed_abs, tag = 'smem constant byte address 0x4 - core index']
  #allocation1 [shape = 'u32[144,128]{1,0:T(1,128)}', space=vmem, size = 0x12000, scoped, tag = 'internal scratch']
  %s0 = inlined_call_operand.vmem [shape: f32[2,2,64,162], index: 0, kind: input, shape index: {}]
  %s1 = inlined_call_operand.vmem [shape: f32[9,64,64], index: 1, kind: input, shape index: {}]
  %s2 = inlined_call_operand.vmem [shape: f32[64,1], index: 2, kind: input, shape index: {}]
  %s3 = inlined_call_operand.vmem [shape: f32[2,128], index: 3, kind: input, shape index: {}]
  %s4 = inlined_call_operand.vmem [shape: f32[2,64,256], index: 4, kind: output, shape index: {0}]
  %s5 = inlined_call_operand.vmem [shape: f32[2,2,64,1], index: 5, kind: output, shape index: {1}]
  %s6 = inlined_call_operand.vmem [shape: f32[2,2,64,1], index: 6, kind: output, shape index: {2}]
  %7 = xla_tuple %s4, %s5, %s6
  %s8 = sld [smem:[#allocation0]]
  $region99: #{cov4_forward.2} parent=0
    _
  %s10 = ssub.s32 1, %s8
  %s11 = scalar_select 0, %s10, %s8
  $region1: #{cov4_forward.2} parent=0
    #allocation2 [shape = 'u8[65536]{0}', space=vmem, size = 0x10000, scoped, tag = 'output window, operand 0']
    loop: start=0, step=1, limit=6
    $region2: #{cov4_forward.2} parent=1 // loop_pre_header
      _
    $region3: #{cov4_forward.2} parent=1 // loop_header
      %s13 = sphi 0, %s17
      %p14 = scmp.ge.s32.totalorder %s13, 6
      %s20 = sphi 0, %s32
      %s21 = sphi 0, %s28
      %s22 = sphi 0, %s20
      %s23 = sphi 0, %s21
      %s24 = sphi 0, %s22
      %s25 = sphi 0, %s23
      %s37 = sphi 0, %s39
      %s40 = sphi 0, %s37
      %s41 = sphi 0, %s40
      %s57 = sphi 0, %s41
      %s61 = sphi 0, %s61
      %s63 = sphi 0, %s61
      %s64 = sphi 0, %s63
      %s78 = sphi 0, %s64
      %s82 = sphi 0, %s82
      %s84 = sphi 0, %s82
      %s85 = sphi 0, %s84
      %s99 = sphi 0, %s85
      %s103 = sphi 0, %s103
      %s105 = sphi 0, %s103
      %s106 = sphi 0, %s105
      %s120 = sphi 0, %s106
      %s128 = sphi 0, %s130
      %s131 = sphi 0, %s128
      %s132 = sphi 0, %s131
      %s148 = sphi 0, %s132
      %s156 = sphi 0, %s158
      %s159 = sphi 0, %s156
      %s160 = sphi 0, %s159
      %s176 = sphi 0, %s160
      %s184 = sphi 0, %s186
      %s187 = sphi 0, %s184
      %s188 = sphi 0, %s187
      %s204 = sphi 0, %s188
    $region4: #{cov4_forward.2} parent=1 // loop_header_branch
      %16 = sbr.rel (%p14) target = $region8
    $region5: #{cov4_forward.2} parent=1 // loop_body
      %s18 = ssub.s32 %s13, 1
      %s19 = ssub.s32 %s13, 2
      %s26 = sadd.s32 1, %s21
      %p27 = scmp.ge.s32.totalorder %s26, 2
      %s28 = scalar_select %p27, 0, %s26
      %s29 = sadd.s32 1, %s20
      %s30 = scalar_select %p27, %s29, %s20
      %p31 = scmp.ge.s32.totalorder %s30, 2
      %s32 = scalar_select %p31, 0, %s30
      %s33 = ssub.s32 %s20, %s32
      %s34 = ssub.s32 %s21, %s28
      %s35 = sor.u32 %s33, %s34
      %p36 = scmp.eq.s32.totalorder %s35, 0
      %s38 = sadd.s32 %s37, 1
      %s39 = scalar_select %p36, %s37, %s38
      %p42 = pneg %p36
      %p43 = scmp.eq.s32.totalorder %s13, 3
      %p44 = por %p42, %p43
      %p45 = scmp.ne.s32.totalorder %s37, %s40
      %p46 = scmp.eq.s32.totalorder %s13, 0
      %p47 = por %p45, %p46
      %p48 = scmp.ne.s32.totalorder %s37, %s40
      %p49 = scmp.eq.s32.totalorder %s18, 3
      %p50 = por %p48, %p49
      %p51 = scmp.ne.s32.totalorder %s40, %s41
      %p52 = scmp.eq.s32.totalorder %s18, 0
      %p53 = por %p51, %p52
      %p54 = scmp.ne.s32.totalorder %s40, %s41
      %p55 = scmp.eq.s32.totalorder %s19, 3
      %p56 = por %p54, %p55
      %p58 = scmp.ne.s32.totalorder %s41, %s57
      %p59 = scmp.eq.s32.totalorder %s19, 0
      %p60 = por %p58, %p59
      %s62 = sadd.s32 %s61, 1
      %p65 = scmp.eq.s32.totalorder %s13, 3
      %p66 = scmp.ne.s32.totalorder %s61, %s63
      %p67 = scmp.eq.s32.totalorder %s13, 0
      %p68 = por %p66, %p67
      %p69 = scmp.ne.s32.totalorder %s61, %s63
      %p70 = scmp.eq.s32.totalorder %s18, 3
      %p71 = por %p69, %p70
      %p72 = scmp.ne.s32.totalorder %s63, %s64
      %p73 = scmp.eq.s32.totalorder %s18, 0
      %p74 = por %p72, %p73
      %p75 = scmp.ne.s32.totalorder %s63, %s64
      %p76 = scmp.eq.s32.totalorder %s19, 3
      %p77 = por %p75, %p76
      %p79 = scmp.ne.s32.totalorder %s64, %s78
      %p80 = scmp.eq.s32.totalorder %s19, 0
      %p81 = por %p79, %p80
      %s83 = sadd.s32 %s82, 1
      %p86 = scmp.eq.s32.totalorder %s13, 3
      %p87 = scmp.ne.s32.totalorder %s82, %s84
      %p88 = scmp.eq.s32.totalorder %s13, 0
      %p89 = por %p87, %p88
      %p90 = scmp.ne.s32.totalorder %s82, %s84
      %p91 = scmp.eq.s32.totalorder %s18, 3
      %p92 = por %p90, %p91
      %p93 = scmp.ne.s32.totalorder %s84, %s85
      %p94 = scmp.eq.s32.totalorder %s18, 0
      %p95 = por %p93, %p94
      %p96 = scmp.ne.s32.totalorder %s84, %s85
      %p97 = scmp.eq.s32.totalorder %s19, 3
      %p98 = por %p96, %p97
      %p100 = scmp.ne.s32.totalorder %s85, %s99
      %p101 = scmp.eq.s32.totalorder %s19, 0
      %p102 = por %p100, %p101
      %s104 = sadd.s32 %s103, 1
      %p107 = scmp.eq.s32.totalorder %s13, 3
      %p108 = scmp.ne.s32.totalorder %s103, %s105
      %p109 = scmp.eq.s32.totalorder %s13, 0
      %p110 = por %p108, %p109
      %p111 = scmp.ne.s32.totalorder %s103, %s105
      %p112 = scmp.eq.s32.totalorder %s18, 3
      %p113 = por %p111, %p112
      %p114 = scmp.ne.s32.totalorder %s105, %s106
      %p115 = scmp.eq.s32.totalorder %s18, 0
      %p116 = por %p114, %p115
      %p117 = scmp.ne.s32.totalorder %s105, %s106
      %p118 = scmp.eq.s32.totalorder %s19, 3
      %p119 = por %p117, %p118
      %p121 = scmp.ne.s32.totalorder %s106, %s120
      %p122 = scmp.eq.s32.totalorder %s19, 0
      %p123 = por %p121, %p122
      %s124 = ssub.s32 %s20, %s32
      %s125 = ssub.s32 %s21, %s28
      %s126 = sor.u32 %s124, %s125
      %p127 = scmp.eq.s32.totalorder %s126, 0
      %s129 = sadd.s32 %s128, 1
      %s130 = scalar_select %p127, %s128, %s129
      %p133 = pneg %p127
      %p134 = scmp.eq.s32.totalorder %s13, 3
      %p135 = por %p133, %p134
      %p136 = scmp.ne.s32.totalorder %s128, %s131
      %p137 = scmp.eq.s32.totalorder %s13, 0
      %p138 = por %p136, %p137
      %p139 = scmp.ne.s32.totalorder %s128, %s131
      %p140 = scmp.eq.s32.totalorder %s18, 3
      %p141 = por %p139, %p140
      %p142 = scmp.ne.s32.totalorder %s131, %s132
      %p143 = scmp.eq.s32.totalorder %s18, 0
      %p144 = por %p142, %p143
      %p145 = scmp.ne.s32.totalorder %s131, %s132
      %p146 = scmp.eq.s32.totalorder %s19, 3
      %p147 = por %p145, %p146
      %p149 = scmp.ne.s32.totalorder %s132, %s148
      %p150 = scmp.eq.s32.totalorder %s19, 0
      %p151 = por %p149, %p150
      %s152 = ssub.s32 %s20, %s32
      %s153 = ssub.s32 %s21, %s28
      %s154 = sor.u32 %s152, %s153
      %p155 = scmp.eq.s32.totalorder %s154, 0
      %s157 = sadd.s32 %s156, 1
      %s158 = scalar_select %p155, %s156, %s157
      %p161 = pneg %p155
      %p162 = scmp.eq.s32.totalorder %s13, 3
      %p163 = por %p161, %p162
      %p164 = scmp.ne.s32.totalorder %s156, %s159
      %p165 = scmp.eq.s32.totalorder %s13, 0
      %p166 = por %p164, %p165
      %p167 = scmp.ne.s32.totalorder %s156, %s159
      %p168 = scmp.eq.s32.totalorder %s18, 3
      %p169 = por %p167, %p168
      %p170 = scmp.ne.s32.totalorder %s159, %s160
      %p171 = scmp.eq.s32.totalorder %s18, 0
      %p172 = por %p170, %p171
      %p173 = scmp.ne.s32.totalorder %s159, %s160
      %p174 = scmp.eq.s32.totalorder %s19, 3
      %p175 = por %p173, %p174
      %p177 = scmp.ne.s32.totalorder %s160, %s176
      %p178 = scmp.eq.s32.totalorder %s19, 0
      %p179 = por %p177, %p178
      %s180 = ssub.s32 %s20, %s32
      %s181 = ssub.s32 %s21, %s28
      %s182 = sor.u32 %s180, %s181
      %p183 = scmp.eq.s32.totalorder %s182, 0
      %s185 = sadd.s32 %s184, 1
      %s186 = scalar_select %p183, %s184, %s185
      %p189 = pneg %p183
      %p190 = scmp.eq.s32.totalorder %s13, 3
      %p191 = por %p189, %p190
      %p192 = scmp.ne.s32.totalorder %s184, %s187
      %p193 = scmp.eq.s32.totalorder %s13, 0
      %p194 = por %p192, %p193
      %p195 = scmp.ne.s32.totalorder %s184, %s187
      %p196 = scmp.eq.s32.totalorder %s18, 3
      %p197 = por %p195, %p196
      %p198 = scmp.ne.s32.totalorder %s187, %s188
      %p199 = scmp.eq.s32.totalorder %s18, 0
      %p200 = por %p198, %p199
      %p201 = scmp.ne.s32.totalorder %s187, %s188
      %p202 = scmp.eq.s32.totalorder %s19, 3
      %p203 = por %p201, %p202
      %p205 = scmp.ne.s32.totalorder %s188, %s204
      %p206 = scmp.eq.s32.totalorder %s19, 0
      %p207 = por %p205, %p206
      %p208 = scmp.le.s32.totalorder 1, %s13
      %p209 = scmp.lt.s32.totalorder %s13, 5
      %p210 = pnand %p208, %p209
      %p211 = pneg %p210
      // Predicated region
      $region9: #{cov4_forward.2} parent=5 // pred_check
        _
      $region10: #{cov4_forward.2} parent=5 // pred_check_branch
        %213 = sbr.rel (%p210) target = $region12
      $region11: #{cov4_forward.2} parent=5 // pred_region
        %s214 = ssub.s32 %s13, 1
        // Predicated region
        $region13: #{cov4_forward.2} parent=11 // pred_check
          %p215 = pneg %p74
        $region14: #{cov4_forward.2} parent=11 // pred_check_branch
          %217 = sbr.rel (%p215) target = $region16
        $region15: #{cov4_forward.2} parent=11 // pred_region
          _
        $region16: #{cov4_forward.2} parent=11 // pred_fallthru
          _
        // Predicated region
        $region17: #{cov4_forward.2} parent=11 // pred_check
          %p218 = pneg %p95
        $region18: #{cov4_forward.2} parent=11 // pred_check_branch
          %220 = sbr.rel (%p218) target = $region20
        $region19: #{cov4_forward.2} parent=11 // pred_region
          _
        $region20: #{cov4_forward.2} parent=11 // pred_fallthru
          _
        // Predicated region
        $region21: #{cov4_forward.2} parent=11 // pred_check
          %p221 = pneg %p116
        $region22: #{cov4_forward.2} parent=11 // pred_check_branch
          %223 = sbr.rel (%p221) target = $region24
        $region23: #{cov4_forward.2} parent=11 // pred_region
          _
        $region24: #{cov4_forward.2} parent=11 // pred_fallthru
          _
      $region12: #{cov4_forward.2} parent=5 // pred_fallthru
        _
      %p224 = scmp.lt.s32.totalorder %s13, 4
      // Predicated region
      $region25: #{cov4_forward.2} parent=5 // pred_check
        %p225 = pneg %p224
      $region26: #{cov4_forward.2} parent=5 // pred_check_branch
        %227 = sbr.rel (%p225) target = $region28
      $region27: #{cov4_forward.2} parent=5 // pred_region
        // Predicated region
        $region29: #{cov4_forward.2} parent=27 // pred_check
          %p228 = pneg %p47
        $region30: #{cov4_forward.2} parent=27 // pred_check_branch
          %230 = sbr.rel (%p228) target = $region32
        $region31: #{cov4_forward.2} parent=27 // pred_region
          %p231 = scmp.lt.s32.totalorder %s20, 1
          %s232 = scalar_select %p231, %s20, 1
          %p233 = scmp.lt.s32.totalorder %s21, 1
          %s234 = scalar_select %p233, %s21, 1
          %s235 = smul.addr %s234, 16
          %s236 = smul.addr %s232, 32
          %s237 = sadd.s32 %s235, %s236
          %s238 = smul.addr %s237, 8
          %s239 = scalar_lea.vmem %s0, %s238
        $region32: #{cov4_forward.2} parent=27 // pred_fallthru
          _
      $region28: #{cov4_forward.2} parent=5 // pred_fallthru
        _
      %p240 = scmp.le.s32.totalorder 1, %s13
      %p241 = scmp.lt.s32.totalorder %s13, 5
      %p242 = pnand %p240, %p241
      %p243 = pneg %p242
      // Predicated region
      $region33: #{cov4_forward.2} parent=5 // pred_check
        _
      $region34: #{cov4_forward.2} parent=5 // pred_check_branch
        %245 = sbr.rel (%p242) target = $region36
      $region35: #{cov4_forward.2} parent=5 // pred_region
        %s246 = ssub.s32 %s13, 1
        %p247 = scmp.lt.s32.totalorder %s22, 1
        %s248 = scalar_select %p247, %s22, 1
        %p249 = scmp.lt.s32.totalorder %s23, 1
        %s250 = scalar_select %p249, %s23, 1
        %s251 = smul.addr %s250, 16
        %s252 = smul.addr %s248, 32
        %s253 = sadd.s32 %s251, %s252
        %s254 = smul.addr %s253, 8
        %s255 = scalar_lea.vmem %s0, %s254
        %p256 = pneg %p53
        %p257 = pneg %p50
        %p258 = pneg %p74
        %p259 = pneg %p71
        %p260 = pneg %p95
        %p261 = pneg %p92
        %p262 = pneg %p116
        %p263 = pneg %p113
        %p264 = pneg %p144
        %p265 = pneg %p141
        %s266 = sand.u32 %s131, 1
        %s267 = sand.u32 %s131, 1
        %s268 = smul.addr %s267, 64
        %s269 = scalar_lea.vmem [#allocation2], %s268
        %p270 = pneg %p172
        %p271 = pneg %p169
        %p272 = scmp.lt.s32.totalorder %s22, 1
        %s273 = scalar_select %p272, %s22, 1
        %p274 = scmp.lt.s32.totalorder %s23, 1
        %s275 = scalar_select %p274, %s23, 1
        %s276 = smul.addr %s275, 8
        %s277 = smul.addr %s273, 16
        %s278 = sadd.s32 %s276, %s277
        %s279 = smul.addr %s278, 8
        %s280 = scalar_lea.vmem %s5, %s279
        %p281 = pneg %p200
        %p282 = pneg %p197
        %p283 = scmp.lt.s32.totalorder %s22, 1
        %s284 = scalar_select %p283, %s22, 1
        %p285 = scmp.lt.s32.totalorder %s23, 1
        %s286 = scalar_select %p285, %s23, 1
        %s287 = smul.addr %s286, 8
        %s288 = smul.addr %s284, 16
        %s289 = sadd.s32 %s287, %s288
        %s290 = smul.addr %s289, 8
        %s291 = scalar_lea.vmem %s6, %s290
        %p292 = scmp.lt.s32.totalorder %s22, 1
        %s293 = scalar_select %p292, %s22, 1
        %p294 = scmp.lt.s32.totalorder %s23, 1
        %s295 = scalar_select %p294, %s23, 1
        %s296 = smul.addr %s295, 16
        %s297 = smul.addr %s293, 32
        %s298 = sadd.s32 %s296, %s297
        %s299 = smul.addr %s298, 8
        %s300 = scalar_lea.vmem %s0, %s299
        %p301 = scmp.lt.s32.totalorder %s22, 1
        %s302 = scalar_select %p301, %s22, 1
        %p303 = scmp.lt.s32.totalorder %s23, 1
        %s304 = scalar_select %p303, %s23, 1
        %s305 = smul.addr %s304, 8
        %s306 = smul.addr %s302, 16
        %s307 = sadd.s32 %s305, %s306
        %s308 = smul.addr %s307, 8
        %s309 = scalar_lea.vmem %s5, %s308
        %p310 = scmp.lt.s32.totalorder %s22, 1
        %s311 = scalar_select %p310, %s22, 1
        %p312 = scmp.lt.s32.totalorder %s23, 1
        %s313 = scalar_select %p312, %s23, 1
        %s314 = smul.addr %s313, 8
        %s315 = smul.addr %s311, 16
        %s316 = sadd.s32 %s314, %s315
        %s317 = smul.addr %s316, 8
        %s318 = scalar_lea.vmem %s6, %s317
        %v319 = vld [vmem:[%s300] sm:$0xff]
        %v320 = vld [vmem:[%s300 + $0x8] sm:$0xff]
        %v321 = vld [vmem:[%s300 + $0x10] sm:$0xff]
        %v322 = vld [vmem:[%s300 + $0x18] sm:$0xff]
        %v323 = vld [vmem:[%s300 + $0x20] sm:$0xff]
        %v324 = vld [vmem:[%s300 + $0x28] sm:$0xff]
        %v325 = vld [vmem:[%s300 + $0x30] sm:$0xff]
        %v326 = vld [vmem:[%s300 + $0x38] sm:$0xff]
        %v327 = vld [vmem:[%s300 + $0x40] sm:$0xff]
        %v328 = vld [vmem:[%s300 + $0x48] sm:$0xff]
        %v329 = vld [vmem:[%s300 + $0x50] sm:$0xff]
        %v330 = vld [vmem:[%s300 + $0x58] sm:$0xff]
        %v331 = vld [vmem:[%s300 + $0x60] sm:$0xff]
        %v332 = vld [vmem:[%s300 + $0x68] sm:$0xff]
        %v333 = vld [vmem:[%s300 + $0x70] sm:$0xff]
        %v334 = vld [vmem:[%s300 + $0x78] sm:$0xff]
        %v335 = vld [vmem:[%s3] sm:$0x3]
        %v336 = vld [vmem:[%s2] sm:$0xff]
        %v337 = vld [vmem:[%s2 + $0x8] sm:$0xff]
        %v338 = vld [vmem:[%s2 + $0x10] sm:$0xff]
        %v339 = vld [vmem:[%s2 + $0x18] sm:$0xff]
        %v340 = vld [vmem:[%s2 + $0x20] sm:$0xff]
        %v341 = vld [vmem:[%s2 + $0x28] sm:$0xff]
        %v342 = vld [vmem:[%s2 + $0x30] sm:$0xff]
        %v343 = vld [vmem:[%s2 + $0x38] sm:$0xff]
        %345 = vset.pattern.permute.xlu0 0
        %346 = vperm.xlu0 %345, %v336
        %v347 = vpop.permute.xlu0 %346
        %350 = vset.pattern.permute.xlu0 0
        %351 = vperm.xlu0 %350, %v337
        %v352 = vpop.permute.xlu0 %351
        %355 = vset.pattern.permute.xlu0 0
        %356 = vperm.xlu0 %355, %v338
        %v357 = vpop.permute.xlu0 %356
        %360 = vset.pattern.permute.xlu0 0
        %361 = vperm.xlu0 %360, %v339
        %v362 = vpop.permute.xlu0 %361
        %365 = vset.pattern.permute.xlu0 0
        %366 = vperm.xlu0 %365, %v340
        %v367 = vpop.permute.xlu0 %366
        %370 = vset.pattern.permute.xlu0 0
        %371 = vperm.xlu0 %370, %v341
        %v372 = vpop.permute.xlu0 %371
        %375 = vset.pattern.permute.xlu0 0
        %376 = vperm.xlu0 %375, %v342
        %v377 = vpop.permute.xlu0 %376
        %380 = vset.pattern.permute.xlu0 0
        %381 = vperm.xlu0 %380, %v343
        %v382 = vpop.permute.xlu0 %381
        %v384 = vlaneseq
        %v385 = vshrl.u32 %v384, 7
        %v386 = vsub.s32 0, %v385
        %v387 = vrot.slane %v335, %v386
        %v388 = vmul.f32 %v319, %v387
        %v389 = vmul.f32 %v321, %v387
        %v390 = vmul.f32 %v323, %v387
        %v391 = vmul.f32 %v325, %v387
        %v392 = vmul.f32 %v327, %v387
        %v393 = vmul.f32 %v329, %v387
        %v394 = vmul.f32 %v331, %v387
        %v395 = vmul.f32 %v333, %v387
        %v396 = vld [vmem:[%s1] sm:$0xff]
        %v397 = vld [vmem:[%s1 + $0x8] sm:$0xff]
        %v398 = vld [vmem:[%s1 + $0x10] sm:$0xff]
        %v399 = vld [vmem:[%s1 + $0x18] sm:$0xff]
        %v400 = vld [vmem:[%s1 + $0x20] sm:$0xff]
        %v401 = vld [vmem:[%s1 + $0x28] sm:$0xff]
        %v402 = vld [vmem:[%s1 + $0x30] sm:$0xff]
        %v403 = vld [vmem:[%s1 + $0x38] sm:$0xff]
        %vm404 = vcmask 523264
        %v406 = vsel %vm404, %v396, 0
        %v409 = vsel %vm404, %v397, 0
        %v412 = vsel %vm404, %v398, 0
        %v415 = vsel %vm404, %v399, 0
        %v418 = vsel %vm404, %v400, 0
        %v421 = vsel %vm404, %v401, 0
        %v424 = vsel %vm404, %v402, 0
        %v427 = vsel %vm404, %v403, 0
        %429 = vmatprep.subr.mxu0 0.0
        %430 = vmatpush1.msra.mxu0 0.0
        %431 = vmatprep.subr.mxu0 0.0
        %432 = vmatpush1.msra.mxu0 0.0
        %433 = vmatprep.subr.mxu0 0.0
        %434 = vmatpush1.msra.mxu0 0.0
        %435 = vmatprep.subr.mxu0 0.0
        %436 = vmatpush1.msra.mxu0 0.0
        %437 = vmatprep.subr.mxu0 0.0
        %438 = vmatpush1.msra.mxu0 0.0
        %439 = vmatprep.subr.mxu0 0.0
        %440 = vmatpush1.msra.mxu0 0.0
        %441 = vmatprep.subr.mxu0 0.0
        %442 = vmatpush1.msra.mxu0 0.0
        %443 = vmatprep.subr.mxu0 0.0
        %444 = vmatpush1.msra.mxu0 0.0
        %445 = vmatprep.subr.mxu0 0.0
        %446 = vmatpush1.msra.mxu0 %v395
        %447 = vmatprep.subr.mxu0 0.0
        %448 = vmatpush1.msra.mxu0 %v394
        %449 = vmatprep.subr.mxu0 0.0
        %450 = vmatpush1.msra.mxu0 %v393
        %451 = vmatprep.subr.mxu0 0.0
        %452 = vmatpush1.msra.mxu0 %v392
        %453 = vmatprep.subr.mxu0 0.0
        %454 = vmatpush1.msra.mxu0 %v391
        %455 = vmatprep.subr.mxu0 0.0
        %456 = vmatpush1.msra.mxu0 %v390
        %457 = vmatprep.subr.mxu0 0.0
        %458 = vmatpush1.msra.mxu0 %v389
        %459 = vmatprep.subr.mxu0 0.0
        %460 = vmatpush1.msra.mxu0 %v388
        %461 = vmatprep.subr.mxu0 0.0
        %462 = vmatpush2.msra.mxu0 0.0
        %463 = vmatprep.subr.mxu0 0.0
        %464 = vmatpush2.msra.mxu0 0.0
        %465 = vmatprep.subr.mxu0 0.0
        %466 = vmatpush2.msra.mxu0 0.0
        %467 = vmatprep.subr.mxu0 0.0
        %468 = vmatpush2.msra.mxu0 0.0
        %469 = vmatprep.subr.mxu0 0.0
        %470 = vmatpush2.msra.mxu0 0.0
        %471 = vmatprep.subr.mxu0 0.0
        %472 = vmatpush2.msra.mxu0 0.0
        %473 = vmatprep.subr.mxu0 0.0
        %474 = vmatpush2.msra.mxu0 0.0
        %475 = vmatprep.subr.mxu0 0.0
        %476 = vmatpush2.msra.mxu0 0.0
        %477 = vmatprep.subr.mxu0 0.0
        %478 = vmatpush2.msra.mxu0 0.0
        %479 = vmatprep.subr.mxu0 0.0
        %480 = vmatpush2.msra.mxu0 0.0
        %481 = vmatprep.subr.mxu0 0.0
        %482 = vmatpush2.msra.mxu0 0.0
        %483 = vmatprep.subr.mxu0 0.0
        %484 = vmatpush2.msra.mxu0 0.0
        %485 = vmatprep.subr.mxu0 0.0
        %486 = vmatpush2.msra.mxu0 0.0
        %487 = vmatprep.subr.mxu0 0.0
        %488 = vmatpush2.msra.mxu0 0.0
        %489 = vmatprep.subr.mxu0 0.0
        %490 = vmatpush2.msra.mxu0 0.0
        %491 = vmatprep.subr.mxu0 0.0
        %492 = vmatpush2.msra.mxu0 0.0
        %493 = vmatprep.mubr.f32.mxu0 0.0
        %494 = vmatmul.mubr.f32.gmra.mxu0 %v406
        %v495 = vpop.f32.mrf.mxu0
        %v496 = vadd.f32 0.0, %v495
        %v497 = vpop.f32.mrf.mxu0
        %498 = vmatprep.mubr.f32.mxu0 0.0
        %499 = vmatmul.mubr.f32.gmra.mxu0 %v409
        %v500 = vpop.f32.mrf.mxu0
        %v501 = vadd.f32 0.0, %v500
        %v502 = vpop.f32.mrf.mxu0
        %503 = vmatprep.mubr.f32.mxu0 0.0
        %504 = vmatmul.mubr.f32.gmra.mxu0 %v412
        %v505 = vpop.f32.mrf.mxu0
        %v506 = vadd.f32 0.0, %v505
        %v507 = vpop.f32.mrf.mxu0
        %508 = vmatprep.mubr.f32.mxu0 0.0
        %509 = vmatmul.mubr.f32.gmra.mxu0 %v415
        %v510 = vpop.f32.mrf.mxu0
        %v511 = vadd.f32 0.0, %v510
        %v512 = vpop.f32.mrf.mxu0
        %513 = vmatprep.mubr.f32.mxu0 0.0
        %514 = vmatmul.mubr.f32.gmra.mxu0 %v418
        %v515 = vpop.f32.mrf.mxu0
        %v516 = vadd.f32 0.0, %v515
        %v517 = vpop.f32.mrf.mxu0
        %518 = vmatprep.mubr.f32.mxu0 0.0
        %519 = vmatmul.mubr.f32.gmra.mxu0 %v421
        %v520 = vpop.f32.mrf.mxu0
        %v521 = vadd.f32 0.0, %v520
        %v522 = vpop.f32.mrf.mxu0
        %523 = vmatprep.mubr.f32.mxu0 0.0
        %524 = vmatmul.mubr.f32.gmra.mxu0 %v424
        %v525 = vpop.f32.mrf.mxu0
        %v526 = vadd.f32 0.0, %v525
        %v527 = vpop.f32.mrf.mxu0
        %528 = vmatprep.mubr.f32.mxu0 0.0
        %529 = vmatmul.mubr.f32.gmra.mxu0 %v427
        %v530 = vpop.f32.mrf.mxu0
        %v531 = vadd.f32 0.0, %v530
        %v532 = vpop.f32.mrf.mxu0
        %533 = vdwg.mxu0
        %v534 = vadd.f32 %v347, %v496
        %v535 = vadd.f32 %v352, %v501
        %v536 = vadd.f32 %v357, %v506
        %v537 = vadd.f32 %v362, %v511
        %v538 = vadd.f32 %v367, %v516
        %v539 = vadd.f32 %v372, %v521
        %v540 = vadd.f32 %v377, %v526
        %v541 = vadd.f32 %v382, %v531
        %s542 = scalar_lea.vmem %s1, 64
        %v543 = vld [vmem:[%s542] sm:$0xff]
        %v544 = vld [vmem:[%s542 + $0x8] sm:$0xff]
        %v545 = vld [vmem:[%s542 + $0x10] sm:$0xff]
        %v546 = vld [vmem:[%s542 + $0x18] sm:$0xff]
        %v547 = vld [vmem:[%s542 + $0x20] sm:$0xff]
        %v548 = vld [vmem:[%s542 + $0x28] sm:$0xff]
        %v549 = vld [vmem:[%s542 + $0x30] sm:$0xff]
        %v550 = vld [vmem:[%s542 + $0x38] sm:$0xff]
        %567 = vrot.lane.b32.xlu0 %v319, 127
        %v568 = vpop.permute.xlu0 %567
        %569 = vrot.lane.b32.xlu0 %v320, 127
        %v570 = vpop.permute.xlu0 %569
        %571 = vrot.lane.b32.xlu0 %v321, 127
        %v572 = vpop.permute.xlu0 %571
        %573 = vrot.lane.b32.xlu0 %v322, 127
        %v574 = vpop.permute.xlu0 %573
        %575 = vrot.lane.b32.xlu0 %v323, 127
        %v576 = vpop.permute.xlu0 %575
        %577 = vrot.lane.b32.xlu0 %v324, 127
        %v578 = vpop.permute.xlu0 %577
        %579 = vrot.lane.b32.xlu0 %v325, 127
        %v580 = vpop.permute.xlu0 %579
        %581 = vrot.lane.b32.xlu0 %v326, 127
        %v582 = vpop.permute.xlu0 %581
        %583 = vrot.lane.b32.xlu0 %v327, 127
        %v584 = vpop.permute.xlu0 %583
        %585 = vrot.lane.b32.xlu0 %v328, 127
        %v586 = vpop.permute.xlu0 %585
        %587 = vrot.lane.b32.xlu0 %v329, 127
        %v588 = vpop.permute.xlu0 %587
        %589 = vrot.lane.b32.xlu0 %v330, 127
        %v590 = vpop.permute.xlu0 %589
        %591 = vrot.lane.b32.xlu0 %v331, 127
        %v592 = vpop.permute.xlu0 %591
        %593 = vrot.lane.b32.xlu0 %v332, 127
        %v594 = vpop.permute.xlu0 %593
        %595 = vrot.lane.b32.xlu0 %v333, 127
        %v596 = vpop.permute.xlu0 %595
        %597 = vrot.lane.b32.xlu0 %v334, 127
        %v598 = vpop.permute.xlu0 %597
        %vm599 = vcmask 1039360
        %v600 = vsel %vm599, %v568, %v570
        %v601 = vsel %vm599, %v572, %v574
        %v602 = vsel %vm599, %v576, %v578
        %v603 = vsel %vm599, %v580, %v582
        %v604 = vsel %vm599, %v584, %v586
        %v605 = vsel %vm599, %v588, %v590
        %v606 = vsel %vm599, %v592, %v594
        %v607 = vsel %vm599, %v596, %v598
        %v617 = vsel %vm404, %v543, 0
        %v620 = vsel %vm404, %v544, 0
        %v623 = vsel %vm404, %v545, 0
        %v626 = vsel %vm404, %v546, 0
        %v629 = vsel %vm404, %v547, 0
        %v632 = vsel %vm404, %v548, 0
        %v635 = vsel %vm404, %v549, 0
        %v638 = vsel %vm404, %v550, 0
        %640 = vmatprep.subr.mxu0 0.0
        %641 = vmatpush1.msra.mxu0 0.0
        %642 = vmatprep.subr.mxu0 0.0
        %643 = vmatpush1.msra.mxu0 0.0
        %644 = vmatprep.subr.mxu0 0.0
        %645 = vmatpush1.msra.mxu0 0.0
        %646 = vmatprep.subr.mxu0 0.0
        %647 = vmatpush1.msra.mxu0 0.0
        %648 = vmatprep.subr.mxu0 0.0
        %649 = vmatpush1.msra.mxu0 0.0
        %650 = vmatprep.subr.mxu0 0.0
        %651 = vmatpush1.msra.mxu0 0.0
        %652 = vmatprep.subr.mxu0 0.0
        %653 = vmatpush1.msra.mxu0 0.0
        %654 = vmatprep.subr.mxu0 0.0
        %655 = vmatpush1.msra.mxu0 0.0
        %656 = vmatprep.subr.mxu0 0.0
        %657 = vmatpush1.msra.mxu0 %v607
        %658 = vmatprep.subr.mxu0 0.0
        %659 = vmatpush1.msra.mxu0 %v606
        %660 = vmatprep.subr.mxu0 0.0
        %661 = vmatpush1.msra.mxu0 %v605
        %662 = vmatprep.subr.mxu0 0.0
        %663 = vmatpush1.msra.mxu0 %v604
        %664 = vmatprep.subr.mxu0 0.0
        %665 = vmatpush1.msra.mxu0 %v603
        %666 = vmatprep.subr.mxu0 0.0
        %667 = vmatpush1.msra.mxu0 %v602
        %668 = vmatprep.subr.mxu0 0.0
        %669 = vmatpush1.msra.mxu0 %v601
        %670 = vmatprep.subr.mxu0 0.0
        %671 = vmatpush1.msra.mxu0 %v600
        %672 = vmatprep.subr.mxu0 0.0
        %673 = vmatpush2.msra.mxu0 0.0
        %674 = vmatprep.subr.mxu0 0.0
        %675 = vmatpush2.msra.mxu0 0.0
        %676 = vmatprep.subr.mxu0 0.0
        %677 = vmatpush2.msra.mxu0 0.0
        %678 = vmatprep.subr.mxu0 0.0
        %679 = vmatpush2.msra.mxu0 0.0
        %680 = vmatprep.subr.mxu0 0.0
        %681 = vmatpush2.msra.mxu0 0.0
        %682 = vmatprep.subr.mxu0 0.0
        %683 = vmatpush2.msra.mxu0 0.0
        %684 = vmatprep.subr.mxu0 0.0
        %685 = vmatpush2.msra.mxu0 0.0
        %686 = vmatprep.subr.mxu0 0.0
        %687 = vmatpush2.msra.mxu0 0.0
        %688 = vmatprep.subr.mxu0 0.0
        %689 = vmatpush2.msra.mxu0 0.0
        %690 = vmatprep.subr.mxu0 0.0
        %691 = vmatpush2.msra.mxu0 0.0
        %692 = vmatprep.subr.mxu0 0.0
        %693 = vmatpush2.msra.mxu0 0.0
        %694 = vmatprep.subr.mxu0 0.0
        %695 = vmatpush2.msra.mxu0 0.0
        %696 = vmatprep.subr.mxu0 0.0
        %697 = vmatpush2.msra.mxu0 0.0
        %698 = vmatprep.subr.mxu0 0.0
        %699 = vmatpush2.msra.mxu0 0.0
        %700 = vmatprep.subr.mxu0 0.0
        %701 = vmatpush2.msra.mxu0 0.0
        %702 = vmatprep.subr.mxu0 0.0
        %703 = vmatpush2.msra.mxu0 0.0
        %704 = vmatprep.mubr.f32.mxu0 0.0
        %705 = vmatmul.mubr.f32.gmra.mxu0 %v617
        %v706 = vpop.f32.mrf.mxu0
        %v707 = vadd.f32 0.0, %v706
        %v708 = vpop.f32.mrf.mxu0
        %709 = vmatprep.mubr.f32.mxu0 0.0
        %710 = vmatmul.mubr.f32.gmra.mxu0 %v620
        %v711 = vpop.f32.mrf.mxu0
        %v712 = vadd.f32 0.0, %v711
        %v713 = vpop.f32.mrf.mxu0
        %714 = vmatprep.mubr.f32.mxu0 0.0
        %715 = vmatmul.mubr.f32.gmra.mxu0 %v623
        %v716 = vpop.f32.mrf.mxu0
        %v717 = vadd.f32 0.0, %v716
        %v718 = vpop.f32.mrf.mxu0
        %719 = vmatprep.mubr.f32.mxu0 0.0
        %720 = vmatmul.mubr.f32.gmra.mxu0 %v626
        %v721 = vpop.f32.mrf.mxu0
        %v722 = vadd.f32 0.0, %v721
        %v723 = vpop.f32.mrf.mxu0
        %724 = vmatprep.mubr.f32.mxu0 0.0
        %725 = vmatmul.mubr.f32.gmra.mxu0 %v629
        %v726 = vpop.f32.mrf.mxu0
        %v727 = vadd.f32 0.0, %v726
        %v728 = vpop.f32.mrf.mxu0
        %729 = vmatprep.mubr.f32.mxu0 0.0
        %730 = vmatmul.mubr.f32.gmra.mxu0 %v632
        %v731 = vpop.f32.mrf.mxu0
        %v732 = vadd.f32 0.0, %v731
        %v733 = vpop.f32.mrf.mxu0
        %734 = vmatprep.mubr.f32.mxu0 0.0
        %735 = vmatmul.mubr.f32.gmra.mxu0 %v635
        %v736 = vpop.f32.mrf.mxu0
        %v737 = vadd.f32 0.0, %v736
        %v738 = vpop.f32.mrf.mxu0
        %739 = vmatprep.mubr.f32.mxu0 0.0
        %740 = vmatmul.mubr.f32.gmra.mxu0 %v638
        %v741 = vpop.f32.mrf.mxu0
        %v742 = vadd.f32 0.0, %v741
        %v743 = vpop.f32.mrf.mxu0
        %744 = vdwg.mxu0
        %v745 = vadd.f32 %v534, %v707
        %v746 = vadd.f32 %v535, %v712
        %v747 = vadd.f32 %v536, %v717
        %v748 = vadd.f32 %v537, %v722
        %v749 = vadd.f32 %v538, %v727
        %v750 = vadd.f32 %v539, %v732
        %v751 = vadd.f32 %v540, %v737
        %v752 = vadd.f32 %v541, %v742
        %v753 = vlaneseq
        %v754 = vshrl.u32 %v753, 7
        %v755 = vsub.s32 1, %v754
        %v756 = vrot.slane %v335, %v755
        %758 = vrot.lane.b32.xlu0 %v756, 2
        %v759 = vpop.permute.xlu0 %758
        %v761 = vmul.f32 %v319, %v759
        %v762 = vmul.f32 %v320, %v759
        %v763 = vmul.f32 %v321, %v759
        %v764 = vmul.f32 %v322, %v759
        %v765 = vmul.f32 %v323, %v759
        %v766 = vmul.f32 %v324, %v759
        %v767 = vmul.f32 %v325, %v759
        %v768 = vmul.f32 %v326, %v759
        %v769 = vmul.f32 %v327, %v759
        %v770 = vmul.f32 %v328, %v759
        %v771 = vmul.f32 %v329, %v759
        %v772 = vmul.f32 %v330, %v759
        %v773 = vmul.f32 %v331, %v759
        %v774 = vmul.f32 %v332, %v759
        %v775 = vmul.f32 %v333, %v759
        %v776 = vmul.f32 %v334, %v759
        %s777 = scalar_lea.vmem %s1, 128
        %v778 = vld [vmem:[%s777] sm:$0xff]
        %v779 = vld [vmem:[%s777 + $0x8] sm:$0xff]
        %v780 = vld [vmem:[%s777 + $0x10] sm:$0xff]
        %v781 = vld [vmem:[%s777 + $0x18] sm:$0xff]
        %v782 = vld [vmem:[%s777 + $0x20] sm:$0xff]
        %v783 = vld [vmem:[%s777 + $0x28] sm:$0xff]
        %v784 = vld [vmem:[%s777 + $0x30] sm:$0xff]
        %v785 = vld [vmem:[%s777 + $0x38] sm:$0xff]
        %802 = vrot.lane.b32.xlu0 %v761, 126
        %v803 = vpop.permute.xlu0 %802
        %804 = vrot.lane.b32.xlu0 %v762, 126
        %v805 = vpop.permute.xlu0 %804
        %806 = vrot.lane.b32.xlu0 %v763, 126
        %v807 = vpop.permute.xlu0 %806
        %808 = vrot.lane.b32.xlu0 %v764, 126
        %v809 = vpop.permute.xlu0 %808
        %810 = vrot.lane.b32.xlu0 %v765, 126
        %v811 = vpop.permute.xlu0 %810
        %812 = vrot.lane.b32.xlu0 %v766, 126
        %v813 = vpop.permute.xlu0 %812
        %814 = vrot.lane.b32.xlu0 %v767, 126
        %v815 = vpop.permute.xlu0 %814
        %816 = vrot.lane.b32.xlu0 %v768, 126
        %v817 = vpop.permute.xlu0 %816
        %818 = vrot.lane.b32.xlu0 %v769, 126
        %v819 = vpop.permute.xlu0 %818
        %820 = vrot.lane.b32.xlu0 %v770, 126
        %v821 = vpop.permute.xlu0 %820
        %822 = vrot.lane.b32.xlu0 %v771, 126
        %v823 = vpop.permute.xlu0 %822
        %824 = vrot.lane.b32.xlu0 %v772, 126
        %v825 = vpop.permute.xlu0 %824
        %826 = vrot.lane.b32.xlu0 %v773, 126
        %v827 = vpop.permute.xlu0 %826
        %828 = vrot.lane.b32.xlu0 %v774, 126
        %v829 = vpop.permute.xlu0 %828
        %830 = vrot.lane.b32.xlu0 %v775, 126
        %v831 = vpop.permute.xlu0 %830
        %832 = vrot.lane.b32.xlu0 %v776, 126
        %v833 = vpop.permute.xlu0 %832
        %vm834 = vcmask 1031168
        %v835 = vsel %vm834, %v803, %v805
        %v836 = vsel %vm834, %v807, %v809
        %v837 = vsel %vm834, %v811, %v813
        %v838 = vsel %vm834, %v815, %v817
        %v839 = vsel %vm834, %v819, %v821
        %v840 = vsel %vm834, %v823, %v825
        %v841 = vsel %vm834, %v827, %v829
        %v842 = vsel %vm834, %v831, %v833
        %v852 = vsel %vm404, %v778, 0
        %v855 = vsel %vm404, %v779, 0
        %v858 = vsel %vm404, %v780, 0
        %v861 = vsel %vm404, %v781, 0
        %v864 = vsel %vm404, %v782, 0
        %v867 = vsel %vm404, %v783, 0
        %v870 = vsel %vm404, %v784, 0
        %v873 = vsel %vm404, %v785, 0
        %875 = vmatprep.subr.mxu0 0.0
        %876 = vmatpush1.msra.mxu0 0.0
        %877 = vmatprep.subr.mxu0 0.0
        %878 = vmatpush1.msra.mxu0 0.0
        %879 = vmatprep.subr.mxu0 0.0
        %880 = vmatpush1.msra.mxu0 0.0
        %881 = vmatprep.subr.mxu0 0.0
        %882 = vmatpush1.msra.mxu0 0.0
        %883 = vmatprep.subr.mxu0 0.0
        %884 = vmatpush1.msra.mxu0 0.0
        %885 = vmatprep.subr.mxu0 0.0
        %886 = vmatpush1.msra.mxu0 0.0
        %887 = vmatprep.subr.mxu0 0.0
        %888 = vmatpush1.msra.mxu0 0.0
        %889 = vmatprep.subr.mxu0 0.0
        %890 = vmatpush1.msra.mxu0 0.0
        %891 = vmatprep.subr.mxu0 0.0
        %892 = vmatpush1.msra.mxu0 %v842
        %893 = vmatprep.subr.mxu0 0.0
        %894 = vmatpush1.msra.mxu0 %v841
        %895 = vmatprep.subr.mxu0 0.0
        %896 = vmatpush1.msra.mxu0 %v840
        %897 = vmatprep.subr.mxu0 0.0
        %898 = vmatpush1.msra.mxu0 %v839
        %899 = vmatprep.subr.mxu0 0.0
        %900 = vmatpush1.msra.mxu0 %v838
        %901 = vmatprep.subr.mxu0 0.0
        %902 = vmatpush1.msra.mxu0 %v837
        %903 = vmatprep.subr.mxu0 0.0
        %904 = vmatpush1.msra.mxu0 %v836
        %905 = vmatprep.subr.mxu0 0.0
        %906 = vmatpush1.msra.mxu0 %v835
        %907 = vmatprep.subr.mxu0 0.0
        %908 = vmatpush2.msra.mxu0 0.0
        %909 = vmatprep.subr.mxu0 0.0
        %910 = vmatpush2.msra.mxu0 0.0
        %911 = vmatprep.subr.mxu0 0.0
        %912 = vmatpush2.msra.mxu0 0.0
        %913 = vmatprep.subr.mxu0 0.0
        %914 = vmatpush2.msra.mxu0 0.0
        %915 = vmatprep.subr.mxu0 0.0
        %916 = vmatpush2.msra.mxu0 0.0
        %917 = vmatprep.subr.mxu0 0.0
        %918 = vmatpush2.msra.mxu0 0.0
        %919 = vmatprep.subr.mxu0 0.0
        %920 = vmatpush2.msra.mxu0 0.0
        %921 = vmatprep.subr.mxu0 0.0
        %922 = vmatpush2.msra.mxu0 0.0
        %923 = vmatprep.subr.mxu0 0.0
        %924 = vmatpush2.msra.mxu0 0.0
        %925 = vmatprep.subr.mxu0 0.0
        %926 = vmatpush2.msra.mxu0 0.0
        %927 = vmatprep.subr.mxu0 0.0
        %928 = vmatpush2.msra.mxu0 0.0
        %929 = vmatprep.subr.mxu0 0.0
        %930 = vmatpush2.msra.mxu0 0.0
        %931 = vmatprep.subr.mxu0 0.0
        %932 = vmatpush2.msra.mxu0 0.0
        %933 = vmatprep.subr.mxu0 0.0
        %934 = vmatpush2.msra.mxu0 0.0
        %935 = vmatprep.subr.mxu0 0.0
        %936 = vmatpush2.msra.mxu0 0.0
        %937 = vmatprep.subr.mxu0 0.0
        %938 = vmatpush2.msra.mxu0 0.0
        %939 = vmatprep.mubr.f32.mxu0 0.0
        %940 = vmatmul.mubr.f32.gmra.mxu0 %v852
        %v941 = vpop.f32.mrf.mxu0
        %v942 = vadd.f32 0.0, %v941
        %v943 = vpop.f32.mrf.mxu0
        %944 = vmatprep.mubr.f32.mxu0 0.0
        %945 = vmatmul.mubr.f32.gmra.mxu0 %v855
        %v946 = vpop.f32.mrf.mxu0
        %v947 = vadd.f32 0.0, %v946
        %v948 = vpop.f32.mrf.mxu0
        %949 = vmatprep.mubr.f32.mxu0 0.0
        %950 = vmatmul.mubr.f32.gmra.mxu0 %v858
        %v951 = vpop.f32.mrf.mxu0
        %v952 = vadd.f32 0.0, %v951
        %v953 = vpop.f32.mrf.mxu0
        %954 = vmatprep.mubr.f32.mxu0 0.0
        %955 = vmatmul.mubr.f32.gmra.mxu0 %v861
        %v956 = vpop.f32.mrf.mxu0
        %v957 = vadd.f32 0.0, %v956
        %v958 = vpop.f32.mrf.mxu0
        %959 = vmatprep.mubr.f32.mxu0 0.0
        %960 = vmatmul.mubr.f32.gmra.mxu0 %v864
        %v961 = vpop.f32.mrf.mxu0
        %v962 = vadd.f32 0.0, %v961
        %v963 = vpop.f32.mrf.mxu0
        %964 = vmatprep.mubr.f32.mxu0 0.0
        %965 = vmatmul.mubr.f32.gmra.mxu0 %v867
        %v966 = vpop.f32.mrf.mxu0
        %v967 = vadd.f32 0.0, %v966
        %v968 = vpop.f32.mrf.mxu0
        %969 = vmatprep.mubr.f32.mxu0 0.0
        %970 = vmatmul.mubr.f32.gmra.mxu0 %v870
        %v971 = vpop.f32.mrf.mxu0
        %v972 = vadd.f32 0.0, %v971
        %v973 = vpop.f32.mrf.mxu0
        %974 = vmatprep.mubr.f32.mxu0 0.0
        %975 = vmatmul.mubr.f32.gmra.mxu0 %v873
        %v976 = vpop.f32.mrf.mxu0
        %v977 = vadd.f32 0.0, %v976
        %v978 = vpop.f32.mrf.mxu0
        %979 = vdwg.mxu0
        %v980 = vadd.f32 %v745, %v942
        %v981 = vadd.f32 %v746, %v947
        %v982 = vadd.f32 %v747, %v952
        %v983 = vadd.f32 %v748, %v957
        %v984 = vadd.f32 %v749, %v962
        %v985 = vadd.f32 %v750, %v967
        %v986 = vadd.f32 %v751, %v972
        %v987 = vadd.f32 %v752, %v977
        %989 = vrot.lane.b32.xlu0 %v387, 16
        %v990 = vpop.permute.xlu0 %989
        %v992 = vmul.f32 %v319, %v990
        %v993 = vmul.f32 %v320, %v990
        %v994 = vmul.f32 %v321, %v990
        %v995 = vmul.f32 %v322, %v990
        %v996 = vmul.f32 %v323, %v990
        %v997 = vmul.f32 %v324, %v990
        %v998 = vmul.f32 %v325, %v990
        %v999 = vmul.f32 %v326, %v990
        %v1000 = vmul.f32 %v327, %v990
        %v1001 = vmul.f32 %v328, %v990
        %v1002 = vmul.f32 %v329, %v990
        %v1003 = vmul.f32 %v330, %v990
        %v1004 = vmul.f32 %v331, %v990
        %v1005 = vmul.f32 %v332, %v990
        %v1006 = vmul.f32 %v333, %v990
        %v1007 = vmul.f32 %v334, %v990
        %s1008 = scalar_lea.vmem %s1, 192
        %v1009 = vld [vmem:[%s1008] sm:$0xff]
        %v1010 = vld [vmem:[%s1008 + $0x8] sm:$0xff]
        %v1011 = vld [vmem:[%s1008 + $0x10] sm:$0xff]
        %v1012 = vld [vmem:[%s1008 + $0x18] sm:$0xff]
        %v1013 = vld [vmem:[%s1008 + $0x20] sm:$0xff]
        %v1014 = vld [vmem:[%s1008 + $0x28] sm:$0xff]
        %v1015 = vld [vmem:[%s1008 + $0x30] sm:$0xff]
        %v1016 = vld [vmem:[%s1008 + $0x38] sm:$0xff]
        %1033 = vrot.lane.b32.xlu0 %v992, 112
        %v1034 = vpop.permute.xlu0 %1033
        %1035 = vrot.lane.b32.xlu0 %v993, 112
        %v1036 = vpop.permute.xlu0 %1035
        %1037 = vrot.lane.b32.xlu0 %v994, 112
        %v1038 = vpop.permute.xlu0 %1037
        %1039 = vrot.lane.b32.xlu0 %v995, 112
        %v1040 = vpop.permute.xlu0 %1039
        %1041 = vrot.lane.b32.xlu0 %v996, 112
        %v1042 = vpop.permute.xlu0 %1041
        %1043 = vrot.lane.b32.xlu0 %v997, 112
        %v1044 = vpop.permute.xlu0 %1043
        %1045 = vrot.lane.b32.xlu0 %v998, 112
        %v1046 = vpop.permute.xlu0 %1045
        %1047 = vrot.lane.b32.xlu0 %v999, 112
        %v1048 = vpop.permute.xlu0 %1047
        %1049 = vrot.lane.b32.xlu0 %v1000, 112
        %v1050 = vpop.permute.xlu0 %1049
        %1051 = vrot.lane.b32.xlu0 %v1001, 112
        %v1052 = vpop.permute.xlu0 %1051
        %1053 = vrot.lane.b32.xlu0 %v1002, 112
        %v1054 = vpop.permute.xlu0 %1053
        %1055 = vrot.lane.b32.xlu0 %v1003, 112
        %v1056 = vpop.permute.xlu0 %1055
        %1057 = vrot.lane.b32.xlu0 %v1004, 112
        %v1058 = vpop.permute.xlu0 %1057
        %1059 = vrot.lane.b32.xlu0 %v1005, 112
        %v1060 = vpop.permute.xlu0 %1059
        %1061 = vrot.lane.b32.xlu0 %v1006, 112
        %v1062 = vpop.permute.xlu0 %1061
        %1063 = vrot.lane.b32.xlu0 %v1007, 112
        %v1064 = vpop.permute.xlu0 %1063
        %vm1065 = vcmask 916480
        %v1066 = vsel %vm1065, %v1034, %v1036
        %v1067 = vsel %vm1065, %v1038, %v1040
        %v1068 = vsel %vm1065, %v1042, %v1044
        %v1069 = vsel %vm1065, %v1046, %v1048
        %v1070 = vsel %vm1065, %v1050, %v1052
        %v1071 = vsel %vm1065, %v1054, %v1056
        %v1072 = vsel %vm1065, %v1058, %v1060
        %v1073 = vsel %vm1065, %v1062, %v1064
        %v1083 = vsel %vm404, %v1009, 0
        %v1086 = vsel %vm404, %v1010, 0
        %v1089 = vsel %vm404, %v1011, 0
        %v1092 = vsel %vm404, %v1012, 0
        %v1095 = vsel %vm404, %v1013, 0
        %v1098 = vsel %vm404, %v1014, 0
        %v1101 = vsel %vm404, %v1015, 0
        %v1104 = vsel %vm404, %v1016, 0
        %1106 = vmatprep.subr.mxu0 0.0
        %1107 = vmatpush1.msra.mxu0 0.0
        %1108 = vmatprep.subr.mxu0 0.0
        %1109 = vmatpush1.msra.mxu0 0.0
        %1110 = vmatprep.subr.mxu0 0.0
        %1111 = vmatpush1.msra.mxu0 0.0
        %1112 = vmatprep.subr.mxu0 0.0
        %1113 = vmatpush1.msra.mxu0 0.0
        %1114 = vmatprep.subr.mxu0 0.0
        %1115 = vmatpush1.msra.mxu0 0.0
        %1116 = vmatprep.subr.mxu0 0.0
        %1117 = vmatpush1.msra.mxu0 0.0
        %1118 = vmatprep.subr.mxu0 0.0
        %1119 = vmatpush1.msra.mxu0 0.0
        %1120 = vmatprep.subr.mxu0 0.0
        %1121 = vmatpush1.msra.mxu0 0.0
        %1122 = vmatprep.subr.mxu0 0.0
        %1123 = vmatpush1.msra.mxu0 %v1073
        %1124 = vmatprep.subr.mxu0 0.0
        %1125 = vmatpush1.msra.mxu0 %v1072
        %1126 = vmatprep.subr.mxu0 0.0
        %1127 = vmatpush1.msra.mxu0 %v1071
        %1128 = vmatprep.subr.mxu0 0.0
        %1129 = vmatpush1.msra.mxu0 %v1070
        %1130 = vmatprep.subr.mxu0 0.0
        %1131 = vmatpush1.msra.mxu0 %v1069
        %1132 = vmatprep.subr.mxu0 0.0
        %1133 = vmatpush1.msra.mxu0 %v1068
        %1134 = vmatprep.subr.mxu0 0.0
        %1135 = vmatpush1.msra.mxu0 %v1067
        %1136 = vmatprep.subr.mxu0 0.0
        %1137 = vmatpush1.msra.mxu0 %v1066
        %1138 = vmatprep.subr.mxu0 0.0
        %1139 = vmatpush2.msra.mxu0 0.0
        %1140 = vmatprep.subr.mxu0 0.0
        %1141 = vmatpush2.msra.mxu0 0.0
        %1142 = vmatprep.subr.mxu0 0.0
        %1143 = vmatpush2.msra.mxu0 0.0
        %1144 = vmatprep.subr.mxu0 0.0
        %1145 = vmatpush2.msra.mxu0 0.0
        %1146 = vmatprep.subr.mxu0 0.0
        %1147 = vmatpush2.msra.mxu0 0.0
        %1148 = vmatprep.subr.mxu0 0.0
        %1149 = vmatpush2.msra.mxu0 0.0
        %1150 = vmatprep.subr.mxu0 0.0
        %1151 = vmatpush2.msra.mxu0 0.0
        %1152 = vmatprep.subr.mxu0 0.0
        %1153 = vmatpush2.msra.mxu0 0.0
        %1154 = vmatprep.subr.mxu0 0.0
        %1155 = vmatpush2.msra.mxu0 0.0
        %1156 = vmatprep.subr.mxu0 0.0
        %1157 = vmatpush2.msra.mxu0 0.0
        %1158 = vmatprep.subr.mxu0 0.0
        %1159 = vmatpush2.msra.mxu0 0.0
        %1160 = vmatprep.subr.mxu0 0.0
        %1161 = vmatpush2.msra.mxu0 0.0
        %1162 = vmatprep.subr.mxu0 0.0
        %1163 = vmatpush2.msra.mxu0 0.0
        %1164 = vmatprep.subr.mxu0 0.0
        %1165 = vmatpush2.msra.mxu0 0.0
        %1166 = vmatprep.subr.mxu0 0.0
        %1167 = vmatpush2.msra.mxu0 0.0
        %1168 = vmatprep.subr.mxu0 0.0
        %1169 = vmatpush2.msra.mxu0 0.0
        %1170 = vmatprep.mubr.f32.mxu0 0.0
        %1171 = vmatmul.mubr.f32.gmra.mxu0 %v1083
        %v1172 = vpop.f32.mrf.mxu0
        %v1173 = vadd.f32 0.0, %v1172
        %v1174 = vpop.f32.mrf.mxu0
        %1175 = vmatprep.mubr.f32.mxu0 0.0
        %1176 = vmatmul.mubr.f32.gmra.mxu0 %v1086
        %v1177 = vpop.f32.mrf.mxu0
        %v1178 = vadd.f32 0.0, %v1177
        %v1179 = vpop.f32.mrf.mxu0
        %1180 = vmatprep.mubr.f32.mxu0 0.0
        %1181 = vmatmul.mubr.f32.gmra.mxu0 %v1089
        %v1182 = vpop.f32.mrf.mxu0
        %v1183 = vadd.f32 0.0, %v1182
        %v1184 = vpop.f32.mrf.mxu0
        %1185 = vmatprep.mubr.f32.mxu0 0.0
        %1186 = vmatmul.mubr.f32.gmra.mxu0 %v1092
        %v1187 = vpop.f32.mrf.mxu0
        %v1188 = vadd.f32 0.0, %v1187
        %v1189 = vpop.f32.mrf.mxu0
        %1190 = vmatprep.mubr.f32.mxu0 0.0
        %1191 = vmatmul.mubr.f32.gmra.mxu0 %v1095
        %v1192 = vpop.f32.mrf.mxu0
        %v1193 = vadd.f32 0.0, %v1192
        %v1194 = vpop.f32.mrf.mxu0
        %1195 = vmatprep.mubr.f32.mxu0 0.0
        %1196 = vmatmul.mubr.f32.gmra.mxu0 %v1098
        %v1197 = vpop.f32.mrf.mxu0
        %v1198 = vadd.f32 0.0, %v1197
        %v1199 = vpop.f32.mrf.mxu0
        %1200 = vmatprep.mubr.f32.mxu0 0.0
        %1201 = vmatmul.mubr.f32.gmra.mxu0 %v1101
        %v1202 = vpop.f32.mrf.mxu0
        %v1203 = vadd.f32 0.0, %v1202
        %v1204 = vpop.f32.mrf.mxu0
        %1205 = vmatprep.mubr.f32.mxu0 0.0
        %1206 = vmatmul.mubr.f32.gmra.mxu0 %v1104
        %v1207 = vpop.f32.mrf.mxu0
        %v1208 = vadd.f32 0.0, %v1207
        %v1209 = vpop.f32.mrf.mxu0
        %1210 = vdwg.mxu0
        %v1211 = vadd.f32 %v980, %v1173
        %v1212 = vadd.f32 %v981, %v1178
        %v1213 = vadd.f32 %v982, %v1183
        %v1214 = vadd.f32 %v983, %v1188
        %v1215 = vadd.f32 %v984, %v1193
        %v1216 = vadd.f32 %v985, %v1198
        %v1217 = vadd.f32 %v986, %v1203
        %v1218 = vadd.f32 %v987, %v1208
        %s1219 = scalar_lea.vmem %s1, 256
        %v1220 = vld [vmem:[%s1219] sm:$0xff]
        %v1221 = vld [vmem:[%s1219 + $0x8] sm:$0xff]
        %v1222 = vld [vmem:[%s1219 + $0x10] sm:$0xff]
        %v1223 = vld [vmem:[%s1219 + $0x18] sm:$0xff]
        %v1224 = vld [vmem:[%s1219 + $0x20] sm:$0xff]
        %v1225 = vld [vmem:[%s1219 + $0x28] sm:$0xff]
        %v1226 = vld [vmem:[%s1219 + $0x30] sm:$0xff]
        %v1227 = vld [vmem:[%s1219 + $0x38] sm:$0xff]
        %1228 = vrot.lane.b32.xlu0 %v319, 111
        %v1229 = vpop.permute.xlu0 %1228
        %1230 = vrot.lane.b32.xlu0 %v320, 111
        %v1231 = vpop.permute.xlu0 %1230
        %1232 = vrot.lane.b32.xlu0 %v321, 111
        %v1233 = vpop.permute.xlu0 %1232
        %1234 = vrot.lane.b32.xlu0 %v322, 111
        %v1235 = vpop.permute.xlu0 %1234
        %1236 = vrot.lane.b32.xlu0 %v323, 111
        %v1237 = vpop.permute.xlu0 %1236
        %1238 = vrot.lane.b32.xlu0 %v324, 111
        %v1239 = vpop.permute.xlu0 %1238
        %1240 = vrot.lane.b32.xlu0 %v325, 111
        %v1241 = vpop.permute.xlu0 %1240
        %1242 = vrot.lane.b32.xlu0 %v326, 111
        %v1243 = vpop.permute.xlu0 %1242
        %1244 = vrot.lane.b32.xlu0 %v327, 111
        %v1245 = vpop.permute.xlu0 %1244
        %1246 = vrot.lane.b32.xlu0 %v328, 111
        %v1247 = vpop.permute.xlu0 %1246
        %1248 = vrot.lane.b32.xlu0 %v329, 111
        %v1249 = vpop.permute.xlu0 %1248
        %1250 = vrot.lane.b32.xlu0 %v330, 111
        %v1251 = vpop.permute.xlu0 %1250
        %1252 = vrot.lane.b32.xlu0 %v331, 111
        %v1253 = vpop.permute.xlu0 %1252
        %1254 = vrot.lane.b32.xlu0 %v332, 111
        %v1255 = vpop.permute.xlu0 %1254
        %1256 = vrot.lane.b32.xlu0 %v333, 111
        %v1257 = vpop.permute.xlu0 %1256
        %1258 = vrot.lane.b32.xlu0 %v334, 111
        %v1259 = vpop.permute.xlu0 %1258
        %vm1260 = vcmask 908288
        %v1261 = vsel %vm1260, %v1229, %v1231
        %v1262 = vsel %vm1260, %v1233, %v1235
        %v1263 = vsel %vm1260, %v1237, %v1239
        %v1264 = vsel %vm1260, %v1241, %v1243
        %v1265 = vsel %vm1260, %v1245, %v1247
        %v1266 = vsel %vm1260, %v1249, %v1251
        %v1267 = vsel %vm1260, %v1253, %v1255
        %v1268 = vsel %vm1260, %v1257, %v1259
        %v1278 = vsel %vm404, %v1220, 0
        %v1281 = vsel %vm404, %v1221, 0
        %v1284 = vsel %vm404, %v1222, 0
        %v1287 = vsel %vm404, %v1223, 0
        %v1290 = vsel %vm404, %v1224, 0
        %v1293 = vsel %vm404, %v1225, 0
        %v1296 = vsel %vm404, %v1226, 0
        %v1299 = vsel %vm404, %v1227, 0
        %1301 = vmatprep.subr.mxu0 0.0
        %1302 = vmatpush1.msra.mxu0 0.0
        %1303 = vmatprep.subr.mxu0 0.0
        %1304 = vmatpush1.msra.mxu0 0.0
        %1305 = vmatprep.subr.mxu0 0.0
        %1306 = vmatpush1.msra.mxu0 0.0
        %1307 = vmatprep.subr.mxu0 0.0
        %1308 = vmatpush1.msra.mxu0 0.0
        %1309 = vmatprep.subr.mxu0 0.0
        %1310 = vmatpush1.msra.mxu0 0.0
        %1311 = vmatprep.subr.mxu0 0.0
        %1312 = vmatpush1.msra.mxu0 0.0
        %1313 = vmatprep.subr.mxu0 0.0
        %1314 = vmatpush1.msra.mxu0 0.0
        %1315 = vmatprep.subr.mxu0 0.0
        %1316 = vmatpush1.msra.mxu0 0.0
        %1317 = vmatprep.subr.mxu0 0.0
        %1318 = vmatpush1.msra.mxu0 %v1268
        %1319 = vmatprep.subr.mxu0 0.0
        %1320 = vmatpush1.msra.mxu0 %v1267
        %1321 = vmatprep.subr.mxu0 0.0
        %1322 = vmatpush1.msra.mxu0 %v1266
        %1323 = vmatprep.subr.mxu0 0.0
        %1324 = vmatpush1.msra.mxu0 %v1265
        %1325 = vmatprep.subr.mxu0 0.0
        %1326 = vmatpush1.msra.mxu0 %v1264
        %1327 = vmatprep.subr.mxu0 0.0
        %1328 = vmatpush1.msra.mxu0 %v1263
        %1329 = vmatprep.subr.mxu0 0.0
        %1330 = vmatpush1.msra.mxu0 %v1262
        %1331 = vmatprep.subr.mxu0 0.0
        %1332 = vmatpush1.msra.mxu0 %v1261
        %1333 = vmatprep.subr.mxu0 0.0
        %1334 = vmatpush2.msra.mxu0 0.0
        %1335 = vmatprep.subr.mxu0 0.0
        %1336 = vmatpush2.msra.mxu0 0.0
        %1337 = vmatprep.subr.mxu0 0.0
        %1338 = vmatpush2.msra.mxu0 0.0
        %1339 = vmatprep.subr.mxu0 0.0
        %1340 = vmatpush2.msra.mxu0 0.0
        %1341 = vmatprep.subr.mxu0 0.0
        %1342 = vmatpush2.msra.mxu0 0.0
        %1343 = vmatprep.subr.mxu0 0.0
        %1344 = vmatpush2.msra.mxu0 0.0
        %1345 = vmatprep.subr.mxu0 0.0
        %1346 = vmatpush2.msra.mxu0 0.0
        %1347 = vmatprep.subr.mxu0 0.0
        %1348 = vmatpush2.msra.mxu0 0.0
        %1349 = vmatprep.subr.mxu0 0.0
        %1350 = vmatpush2.msra.mxu0 0.0
        %1351 = vmatprep.subr.mxu0 0.0
        %1352 = vmatpush2.msra.mxu0 0.0
        %1353 = vmatprep.subr.mxu0 0.0
        %1354 = vmatpush2.msra.mxu0 0.0
        %1355 = vmatprep.subr.mxu0 0.0
        %1356 = vmatpush2.msra.mxu0 0.0
        %1357 = vmatprep.subr.mxu0 0.0
        %1358 = vmatpush2.msra.mxu0 0.0
        %1359 = vmatprep.subr.mxu0 0.0
        %1360 = vmatpush2.msra.mxu0 0.0
        %1361 = vmatprep.subr.mxu0 0.0
        %1362 = vmatpush2.msra.mxu0 0.0
        %1363 = vmatprep.subr.mxu0 0.0
        %1364 = vmatpush2.msra.mxu0 0.0
        %1365 = vmatprep.mubr.f32.mxu0 0.0
        %1366 = vmatmul.mubr.f32.gmra.mxu0 %v1278
        %v1367 = vpop.f32.mrf.mxu0
        %v1368 = vadd.f32 0.0, %v1367
        %v1369 = vpop.f32.mrf.mxu0
        %1370 = vmatprep.mubr.f32.mxu0 0.0
        %1371 = vmatmul.mubr.f32.gmra.mxu0 %v1281
        %v1372 = vpop.f32.mrf.mxu0
        %v1373 = vadd.f32 0.0, %v1372
        %v1374 = vpop.f32.mrf.mxu0
        %1375 = vmatprep.mubr.f32.mxu0 0.0
        %1376 = vmatmul.mubr.f32.gmra.mxu0 %v1284
        %v1377 = vpop.f32.mrf.mxu0
        %v1378 = vadd.f32 0.0, %v1377
        %v1379 = vpop.f32.mrf.mxu0
        %1380 = vmatprep.mubr.f32.mxu0 0.0
        %1381 = vmatmul.mubr.f32.gmra.mxu0 %v1287
        %v1382 = vpop.f32.mrf.mxu0
        %v1383 = vadd.f32 0.0, %v1382
        %v1384 = vpop.f32.mrf.mxu0
        %1385 = vmatprep.mubr.f32.mxu0 0.0
        %1386 = vmatmul.mubr.f32.gmra.mxu0 %v1290
        %v1387 = vpop.f32.mrf.mxu0
        %v1388 = vadd.f32 0.0, %v1387
        %v1389 = vpop.f32.mrf.mxu0
        %1390 = vmatprep.mubr.f32.mxu0 0.0
        %1391 = vmatmul.mubr.f32.gmra.mxu0 %v1293
        %v1392 = vpop.f32.mrf.mxu0
        %v1393 = vadd.f32 0.0, %v1392
        %v1394 = vpop.f32.mrf.mxu0
        %1395 = vmatprep.mubr.f32.mxu0 0.0
        %1396 = vmatmul.mubr.f32.gmra.mxu0 %v1296
        %v1397 = vpop.f32.mrf.mxu0
        %v1398 = vadd.f32 0.0, %v1397
        %v1399 = vpop.f32.mrf.mxu0
        %1400 = vmatprep.mubr.f32.mxu0 0.0
        %1401 = vmatmul.mubr.f32.gmra.mxu0 %v1299
        %v1402 = vpop.f32.mrf.mxu0
        %v1403 = vadd.f32 0.0, %v1402
        %v1404 = vpop.f32.mrf.mxu0
        %1405 = vdwg.mxu0
        %v1406 = vadd.f32 %v1211, %v1368
        %v1407 = vadd.f32 %v1212, %v1373
        %v1408 = vadd.f32 %v1213, %v1378
        %v1409 = vadd.f32 %v1214, %v1383
        %v1410 = vadd.f32 %v1215, %v1388
        %v1411 = vadd.f32 %v1216, %v1393
        %v1412 = vadd.f32 %v1217, %v1398
        %v1413 = vadd.f32 %v1218, %v1403
        %1414 = vrot.lane.b32.xlu0 %v756, 18
        %v1415 = vpop.permute.xlu0 %1414
        %v1417 = vmul.f32 %v319, %v1415
        %v1418 = vmul.f32 %v320, %v1415
        %v1419 = vmul.f32 %v321, %v1415
        %v1420 = vmul.f32 %v322, %v1415
        %v1421 = vmul.f32 %v323, %v1415
        %v1422 = vmul.f32 %v324, %v1415
        %v1423 = vmul.f32 %v325, %v1415
        %v1424 = vmul.f32 %v326, %v1415
        %v1425 = vmul.f32 %v327, %v1415
        %v1426 = vmul.f32 %v328, %v1415
        %v1427 = vmul.f32 %v329, %v1415
        %v1428 = vmul.f32 %v330, %v1415
        %v1429 = vmul.f32 %v331, %v1415
        %v1430 = vmul.f32 %v332, %v1415
        %v1431 = vmul.f32 %v333, %v1415
        %v1432 = vmul.f32 %v334, %v1415
        %s1433 = scalar_lea.vmem %s1, 320
        %v1434 = vld [vmem:[%s1433] sm:$0xff]
        %v1435 = vld [vmem:[%s1433 + $0x8] sm:$0xff]
        %v1436 = vld [vmem:[%s1433 + $0x10] sm:$0xff]
        %v1437 = vld [vmem:[%s1433 + $0x18] sm:$0xff]
        %v1438 = vld [vmem:[%s1433 + $0x20] sm:$0xff]
        %v1439 = vld [vmem:[%s1433 + $0x28] sm:$0xff]
        %v1440 = vld [vmem:[%s1433 + $0x30] sm:$0xff]
        %v1441 = vld [vmem:[%s1433 + $0x38] sm:$0xff]
        %1458 = vrot.lane.b32.xlu0 %v1417, 110
        %v1459 = vpop.permute.xlu0 %1458
        %1460 = vrot.lane.b32.xlu0 %v1418, 110
        %v1461 = vpop.permute.xlu0 %1460
        %1462 = vrot.lane.b32.xlu0 %v1419, 110
        %v1463 = vpop.permute.xlu0 %1462
        %1464 = vrot.lane.b32.xlu0 %v1420, 110
        %v1465 = vpop.permute.xlu0 %1464
        %1466 = vrot.lane.b32.xlu0 %v1421, 110
        %v1467 = vpop.permute.xlu0 %1466
        %1468 = vrot.lane.b32.xlu0 %v1422, 110
        %v1469 = vpop.permute.xlu0 %1468
        %1470 = vrot.lane.b32.xlu0 %v1423, 110
        %v1471 = vpop.permute.xlu0 %1470
        %1472 = vrot.lane.b32.xlu0 %v1424, 110
        %v1473 = vpop.permute.xlu0 %1472
        %1474 = vrot.lane.b32.xlu0 %v1425, 110
        %v1475 = vpop.permute.xlu0 %1474
        %1476 = vrot.lane.b32.xlu0 %v1426, 110
        %v1477 = vpop.permute.xlu0 %1476
        %1478 = vrot.lane.b32.xlu0 %v1427, 110
        %v1479 = vpop.permute.xlu0 %1478
        %1480 = vrot.lane.b32.xlu0 %v1428, 110
        %v1481 = vpop.permute.xlu0 %1480
        %1482 = vrot.lane.b32.xlu0 %v1429, 110
        %v1483 = vpop.permute.xlu0 %1482
        %1484 = vrot.lane.b32.xlu0 %v1430, 110
        %v1485 = vpop.permute.xlu0 %1484
        %1486 = vrot.lane.b32.xlu0 %v1431, 110
        %v1487 = vpop.permute.xlu0 %1486
        %1488 = vrot.lane.b32.xlu0 %v1432, 110
        %v1489 = vpop.permute.xlu0 %1488
        %vm1490 = vcmask 900096
        %v1491 = vsel %vm1490, %v1459, %v1461
        %v1492 = vsel %vm1490, %v1463, %v1465
        %v1493 = vsel %vm1490, %v1467, %v1469
        %v1494 = vsel %vm1490, %v1471, %v1473
        %v1495 = vsel %vm1490, %v1475, %v1477
        %v1496 = vsel %vm1490, %v1479, %v1481
        %v1497 = vsel %vm1490, %v1483, %v1485
        %v1498 = vsel %vm1490, %v1487, %v1489
        %v1508 = vsel %vm404, %v1434, 0
        %v1511 = vsel %vm404, %v1435, 0
        %v1514 = vsel %vm404, %v1436, 0
        %v1517 = vsel %vm404, %v1437, 0
        %v1520 = vsel %vm404, %v1438, 0
        %v1523 = vsel %vm404, %v1439, 0
        %v1526 = vsel %vm404, %v1440, 0
        %v1529 = vsel %vm404, %v1441, 0
        %1531 = vmatprep.subr.mxu0 0.0
        %1532 = vmatpush1.msra.mxu0 0.0
        %1533 = vmatprep.subr.mxu0 0.0
        %1534 = vmatpush1.msra.mxu0 0.0
        %1535 = vmatprep.subr.mxu0 0.0
        %1536 = vmatpush1.msra.mxu0 0.0
        %1537 = vmatprep.subr.mxu0 0.0
        %1538 = vmatpush1.msra.mxu0 0.0
        %1539 = vmatprep.subr.mxu0 0.0
        %1540 = vmatpush1.msra.mxu0 0.0
        %1541 = vmatprep.subr.mxu0 0.0
        %1542 = vmatpush1.msra.mxu0 0.0
        %1543 = vmatprep.subr.mxu0 0.0
        %1544 = vmatpush1.msra.mxu0 0.0
        %1545 = vmatprep.subr.mxu0 0.0
        %1546 = vmatpush1.msra.mxu0 0.0
        %1547 = vmatprep.subr.mxu0 0.0
        %1548 = vmatpush1.msra.mxu0 %v1498
        %1549 = vmatprep.subr.mxu0 0.0
        %1550 = vmatpush1.msra.mxu0 %v1497
        %1551 = vmatprep.subr.mxu0 0.0
        %1552 = vmatpush1.msra.mxu0 %v1496
        %1553 = vmatprep.subr.mxu0 0.0
        %1554 = vmatpush1.msra.mxu0 %v1495
        %1555 = vmatprep.subr.mxu0 0.0
        %1556 = vmatpush1.msra.mxu0 %v1494
        %1557 = vmatprep.subr.mxu0 0.0
        %1558 = vmatpush1.msra.mxu0 %v1493
        %1559 = vmatprep.subr.mxu0 0.0
        %1560 = vmatpush1.msra.mxu0 %v1492
        %1561 = vmatprep.subr.mxu0 0.0
        %1562 = vmatpush1.msra.mxu0 %v1491
        %1563 = vmatprep.subr.mxu0 0.0
        %1564 = vmatpush2.msra.mxu0 0.0
        %1565 = vmatprep.subr.mxu0 0.0
        %1566 = vmatpush2.msra.mxu0 0.0
        %1567 = vmatprep.subr.mxu0 0.0
        %1568 = vmatpush2.msra.mxu0 0.0
        %1569 = vmatprep.subr.mxu0 0.0
        %1570 = vmatpush2.msra.mxu0 0.0
        %1571 = vmatprep.subr.mxu0 0.0
        %1572 = vmatpush2.msra.mxu0 0.0
        %1573 = vmatprep.subr.mxu0 0.0
        %1574 = vmatpush2.msra.mxu0 0.0
        %1575 = vmatprep.subr.mxu0 0.0
        %1576 = vmatpush2.msra.mxu0 0.0
        %1577 = vmatprep.subr.mxu0 0.0
        %1578 = vmatpush2.msra.mxu0 0.0
        %1579 = vmatprep.subr.mxu0 0.0
        %1580 = vmatpush2.msra.mxu0 0.0
        %1581 = vmatprep.subr.mxu0 0.0
        %1582 = vmatpush2.msra.mxu0 0.0
        %1583 = vmatprep.subr.mxu0 0.0
        %1584 = vmatpush2.msra.mxu0 0.0
        %1585 = vmatprep.subr.mxu0 0.0
        %1586 = vmatpush2.msra.mxu0 0.0
        %1587 = vmatprep.subr.mxu0 0.0
        %1588 = vmatpush2.msra.mxu0 0.0
        %1589 = vmatprep.subr.mxu0 0.0
        %1590 = vmatpush2.msra.mxu0 0.0
        %1591 = vmatprep.subr.mxu0 0.0
        %1592 = vmatpush2.msra.mxu0 0.0
        %1593 = vmatprep.subr.mxu0 0.0
        %1594 = vmatpush2.msra.mxu0 0.0
        %1595 = vmatprep.mubr.f32.mxu0 0.0
        %1596 = vmatmul.mubr.f32.gmra.mxu0 %v1508
        %v1597 = vpop.f32.mrf.mxu0
        %v1598 = vadd.f32 0.0, %v1597
        %v1599 = vpop.f32.mrf.mxu0
        %1600 = vmatprep.mubr.f32.mxu0 0.0
        %1601 = vmatmul.mubr.f32.gmra.mxu0 %v1511
        %v1602 = vpop.f32.mrf.mxu0
        %v1603 = vadd.f32 0.0, %v1602
        %v1604 = vpop.f32.mrf.mxu0
        %1605 = vmatprep.mubr.f32.mxu0 0.0
        %1606 = vmatmul.mubr.f32.gmra.mxu0 %v1514
        %v1607 = vpop.f32.mrf.mxu0
        %v1608 = vadd.f32 0.0, %v1607
        %v1609 = vpop.f32.mrf.mxu0
        %1610 = vmatprep.mubr.f32.mxu0 0.0
        %1611 = vmatmul.mubr.f32.gmra.mxu0 %v1517
        %v1612 = vpop.f32.mrf.mxu0
        %v1613 = vadd.f32 0.0, %v1612
        %v1614 = vpop.f32.mrf.mxu0
        %1615 = vmatprep.mubr.f32.mxu0 0.0
        %1616 = vmatmul.mubr.f32.gmra.mxu0 %v1520
        %v1617 = vpop.f32.mrf.mxu0
        %v1618 = vadd.f32 0.0, %v1617
        %v1619 = vpop.f32.mrf.mxu0
        %1620 = vmatprep.mubr.f32.mxu0 0.0
        %1621 = vmatmul.mubr.f32.gmra.mxu0 %v1523
        %v1622 = vpop.f32.mrf.mxu0
        %v1623 = vadd.f32 0.0, %v1622
        %v1624 = vpop.f32.mrf.mxu0
        %1625 = vmatprep.mubr.f32.mxu0 0.0
        %1626 = vmatmul.mubr.f32.gmra.mxu0 %v1526
        %v1627 = vpop.f32.mrf.mxu0
        %v1628 = vadd.f32 0.0, %v1627
        %v1629 = vpop.f32.mrf.mxu0
        %1630 = vmatprep.mubr.f32.mxu0 0.0
        %1631 = vmatmul.mubr.f32.gmra.mxu0 %v1529
        %v1632 = vpop.f32.mrf.mxu0
        %v1633 = vadd.f32 0.0, %v1632
        %v1634 = vpop.f32.mrf.mxu0
        %1635 = vdwg.mxu0
        %v1636 = vadd.f32 %v1406, %v1598
        %v1637 = vadd.f32 %v1407, %v1603
        %v1638 = vadd.f32 %v1408, %v1608
        %v1639 = vadd.f32 %v1409, %v1613
        %v1640 = vadd.f32 %v1410, %v1618
        %v1641 = vadd.f32 %v1411, %v1623
        %v1642 = vadd.f32 %v1412, %v1628
        %v1643 = vadd.f32 %v1413, %v1633
        %1644 = vrot.lane.b32.xlu0 %v387, 32
        %v1645 = vpop.permute.xlu0 %1644
        %v1647 = vmul.f32 %v319, %v1645
        %v1648 = vmul.f32 %v320, %v1645
        %v1649 = vmul.f32 %v321, %v1645
        %v1650 = vmul.f32 %v322, %v1645
        %v1651 = vmul.f32 %v323, %v1645
        %v1652 = vmul.f32 %v324, %v1645
        %v1653 = vmul.f32 %v325, %v1645
        %v1654 = vmul.f32 %v326, %v1645
        %v1655 = vmul.f32 %v327, %v1645
        %v1656 = vmul.f32 %v328, %v1645
        %v1657 = vmul.f32 %v329, %v1645
        %v1658 = vmul.f32 %v330, %v1645
        %v1659 = vmul.f32 %v331, %v1645
        %v1660 = vmul.f32 %v332, %v1645
        %v1661 = vmul.f32 %v333, %v1645
        %v1662 = vmul.f32 %v334, %v1645
        %s1663 = scalar_lea.vmem %s1, 384
        %v1664 = vld [vmem:[%s1663] sm:$0xff]
        %v1665 = vld [vmem:[%s1663 + $0x8] sm:$0xff]
        %v1666 = vld [vmem:[%s1663 + $0x10] sm:$0xff]
        %v1667 = vld [vmem:[%s1663 + $0x18] sm:$0xff]
        %v1668 = vld [vmem:[%s1663 + $0x20] sm:$0xff]
        %v1669 = vld [vmem:[%s1663 + $0x28] sm:$0xff]
        %v1670 = vld [vmem:[%s1663 + $0x30] sm:$0xff]
        %v1671 = vld [vmem:[%s1663 + $0x38] sm:$0xff]
        %1688 = vrot.lane.b32.xlu0 %v1647, 96
        %v1689 = vpop.permute.xlu0 %1688
        %1690 = vrot.lane.b32.xlu0 %v1648, 96
        %v1691 = vpop.permute.xlu0 %1690
        %1692 = vrot.lane.b32.xlu0 %v1649, 96
        %v1693 = vpop.permute.xlu0 %1692
        %1694 = vrot.lane.b32.xlu0 %v1650, 96
        %v1695 = vpop.permute.xlu0 %1694
        %1696 = vrot.lane.b32.xlu0 %v1651, 96
        %v1697 = vpop.permute.xlu0 %1696
        %1698 = vrot.lane.b32.xlu0 %v1652, 96
        %v1699 = vpop.permute.xlu0 %1698
        %1700 = vrot.lane.b32.xlu0 %v1653, 96
        %v1701 = vpop.permute.xlu0 %1700
        %1702 = vrot.lane.b32.xlu0 %v1654, 96
        %v1703 = vpop.permute.xlu0 %1702
        %1704 = vrot.lane.b32.xlu0 %v1655, 96
        %v1705 = vpop.permute.xlu0 %1704
        %1706 = vrot.lane.b32.xlu0 %v1656, 96
        %v1707 = vpop.permute.xlu0 %1706
        %1708 = vrot.lane.b32.xlu0 %v1657, 96
        %v1709 = vpop.permute.xlu0 %1708
        %1710 = vrot.lane.b32.xlu0 %v1658, 96
        %v1711 = vpop.permute.xlu0 %1710
        %1712 = vrot.lane.b32.xlu0 %v1659, 96
        %v1713 = vpop.permute.xlu0 %1712
        %1714 = vrot.lane.b32.xlu0 %v1660, 96
        %v1715 = vpop.permute.xlu0 %1714
        %1716 = vrot.lane.b32.xlu0 %v1661, 96
        %v1717 = vpop.permute.xlu0 %1716
        %1718 = vrot.lane.b32.xlu0 %v1662, 96
        %v1719 = vpop.permute.xlu0 %1718
        %vm1720 = vcmask 785408
        %v1721 = vsel %vm1720, %v1689, %v1691
        %v1722 = vsel %vm1720, %v1693, %v1695
        %v1723 = vsel %vm1720, %v1697, %v1699
        %v1724 = vsel %vm1720, %v1701, %v1703
        %v1725 = vsel %vm1720, %v1705, %v1707
        %v1726 = vsel %vm1720, %v1709, %v1711
        %v1727 = vsel %vm1720, %v1713, %v1715
        %v1728 = vsel %vm1720, %v1717, %v1719
        %v1738 = vsel %vm404, %v1664, 0
        %v1741 = vsel %vm404, %v1665, 0
        %v1744 = vsel %vm404, %v1666, 0
        %v1747 = vsel %vm404, %v1667, 0
        %v1750 = vsel %vm404, %v1668, 0
        %v1753 = vsel %vm404, %v1669, 0
        %v1756 = vsel %vm404, %v1670, 0
        %v1759 = vsel %vm404, %v1671, 0
        %1761 = vmatprep.subr.mxu0 0.0
        %1762 = vmatpush1.msra.mxu0 0.0
        %1763 = vmatprep.subr.mxu0 0.0
        %1764 = vmatpush1.msra.mxu0 0.0
        %1765 = vmatprep.subr.mxu0 0.0
        %1766 = vmatpush1.msra.mxu0 0.0
        %1767 = vmatprep.subr.mxu0 0.0
        %1768 = vmatpush1.msra.mxu0 0.0
        %1769 = vmatprep.subr.mxu0 0.0
        %1770 = vmatpush1.msra.mxu0 0.0
        %1771 = vmatprep.subr.mxu0 0.0
        %1772 = vmatpush1.msra.mxu0 0.0
        %1773 = vmatprep.subr.mxu0 0.0
        %1774 = vmatpush1.msra.mxu0 0.0
        %1775 = vmatprep.subr.mxu0 0.0
        %1776 = vmatpush1.msra.mxu0 0.0
        %1777 = vmatprep.subr.mxu0 0.0
        %1778 = vmatpush1.msra.mxu0 %v1728
        %1779 = vmatprep.subr.mxu0 0.0
        %1780 = vmatpush1.msra.mxu0 %v1727
        %1781 = vmatprep.subr.mxu0 0.0
        %1782 = vmatpush1.msra.mxu0 %v1726
        %1783 = vmatprep.subr.mxu0 0.0
        %1784 = vmatpush1.msra.mxu0 %v1725
        %1785 = vmatprep.subr.mxu0 0.0
        %1786 = vmatpush1.msra.mxu0 %v1724
        %1787 = vmatprep.subr.mxu0 0.0
        %1788 = vmatpush1.msra.mxu0 %v1723
        %1789 = vmatprep.subr.mxu0 0.0
        %1790 = vmatpush1.msra.mxu0 %v1722
        %1791 = vmatprep.subr.mxu0 0.0
        %1792 = vmatpush1.msra.mxu0 %v1721
        %1793 = vmatprep.subr.mxu0 0.0
        %1794 = vmatpush2.msra.mxu0 0.0
        %1795 = vmatprep.subr.mxu0 0.0
        %1796 = vmatpush2.msra.mxu0 0.0
        %1797 = vmatprep.subr.mxu0 0.0
        %1798 = vmatpush2.msra.mxu0 0.0
        %1799 = vmatprep.subr.mxu0 0.0
        %1800 = vmatpush2.msra.mxu0 0.0
        %1801 = vmatprep.subr.mxu0 0.0
        %1802 = vmatpush2.msra.mxu0 0.0
        %1803 = vmatprep.subr.mxu0 0.0
        %1804 = vmatpush2.msra.mxu0 0.0
        %1805 = vmatprep.subr.mxu0 0.0
        %1806 = vmatpush2.msra.mxu0 0.0
        %1807 = vmatprep.subr.mxu0 0.0
        %1808 = vmatpush2.msra.mxu0 0.0
        %1809 = vmatprep.subr.mxu0 0.0
        %1810 = vmatpush2.msra.mxu0 0.0
        %1811 = vmatprep.subr.mxu0 0.0
        %1812 = vmatpush2.msra.mxu0 0.0
        %1813 = vmatprep.subr.mxu0 0.0
        %1814 = vmatpush2.msra.mxu0 0.0
        %1815 = vmatprep.subr.mxu0 0.0
        %1816 = vmatpush2.msra.mxu0 0.0
        %1817 = vmatprep.subr.mxu0 0.0
        %1818 = vmatpush2.msra.mxu0 0.0
        %1819 = vmatprep.subr.mxu0 0.0
        %1820 = vmatpush2.msra.mxu0 0.0
        %1821 = vmatprep.subr.mxu0 0.0
        %1822 = vmatpush2.msra.mxu0 0.0
        %1823 = vmatprep.subr.mxu0 0.0
        %1824 = vmatpush2.msra.mxu0 0.0
        %1825 = vmatprep.mubr.f32.mxu0 0.0
        %1826 = vmatmul.mubr.f32.gmra.mxu0 %v1738
        %v1827 = vpop.f32.mrf.mxu0
        %v1828 = vadd.f32 0.0, %v1827
        %v1829 = vpop.f32.mrf.mxu0
        %1830 = vmatprep.mubr.f32.mxu0 0.0
        %1831 = vmatmul.mubr.f32.gmra.mxu0 %v1741
        %v1832 = vpop.f32.mrf.mxu0
        %v1833 = vadd.f32 0.0, %v1832
        %v1834 = vpop.f32.mrf.mxu0
        %1835 = vmatprep.mubr.f32.mxu0 0.0
        %1836 = vmatmul.mubr.f32.gmra.mxu0 %v1744
        %v1837 = vpop.f32.mrf.mxu0
        %v1838 = vadd.f32 0.0, %v1837
        %v1839 = vpop.f32.mrf.mxu0
        %1840 = vmatprep.mubr.f32.mxu0 0.0
        %1841 = vmatmul.mubr.f32.gmra.mxu0 %v1747
        %v1842 = vpop.f32.mrf.mxu0
        %v1843 = vadd.f32 0.0, %v1842
        %v1844 = vpop.f32.mrf.mxu0
        %1845 = vmatprep.mubr.f32.mxu0 0.0
        %1846 = vmatmul.mubr.f32.gmra.mxu0 %v1750
        %v1847 = vpop.f32.mrf.mxu0
        %v1848 = vadd.f32 0.0, %v1847
        %v1849 = vpop.f32.mrf.mxu0
        %1850 = vmatprep.mubr.f32.mxu0 0.0
        %1851 = vmatmul.mubr.f32.gmra.mxu0 %v1753
        %v1852 = vpop.f32.mrf.mxu0
        %v1853 = vadd.f32 0.0, %v1852
        %v1854 = vpop.f32.mrf.mxu0
        %1855 = vmatprep.mubr.f32.mxu0 0.0
        %1856 = vmatmul.mubr.f32.gmra.mxu0 %v1756
        %v1857 = vpop.f32.mrf.mxu0
        %v1858 = vadd.f32 0.0, %v1857
        %v1859 = vpop.f32.mrf.mxu0
        %1860 = vmatprep.mubr.f32.mxu0 0.0
        %1861 = vmatmul.mubr.f32.gmra.mxu0 %v1759
        %v1862 = vpop.f32.mrf.mxu0
        %v1863 = vadd.f32 0.0, %v1862
        %v1864 = vpop.f32.mrf.mxu0
        %1865 = vdwg.mxu0
        %v1866 = vadd.f32 %v1636, %v1828
        %v1867 = vadd.f32 %v1637, %v1833
        %v1868 = vadd.f32 %v1638, %v1838
        %v1869 = vadd.f32 %v1639, %v1843
        %v1870 = vadd.f32 %v1640, %v1848
        %v1871 = vadd.f32 %v1641, %v1853
        %v1872 = vadd.f32 %v1642, %v1858
        %v1873 = vadd.f32 %v1643, %v1863
        %s1874 = scalar_lea.vmem %s1, 448
        %v1875 = vld [vmem:[%s1874] sm:$0xff]
        %v1876 = vld [vmem:[%s1874 + $0x8] sm:$0xff]
        %v1877 = vld [vmem:[%s1874 + $0x10] sm:$0xff]
        %v1878 = vld [vmem:[%s1874 + $0x18] sm:$0xff]
        %v1879 = vld [vmem:[%s1874 + $0x20] sm:$0xff]
        %v1880 = vld [vmem:[%s1874 + $0x28] sm:$0xff]
        %v1881 = vld [vmem:[%s1874 + $0x30] sm:$0xff]
        %v1882 = vld [vmem:[%s1874 + $0x38] sm:$0xff]
        %1883 = vrot.lane.b32.xlu0 %v319, 95
        %v1884 = vpop.permute.xlu0 %1883
        %1885 = vrot.lane.b32.xlu0 %v320, 95
        %v1886 = vpop.permute.xlu0 %1885
        %1887 = vrot.lane.b32.xlu0 %v321, 95
        %v1888 = vpop.permute.xlu0 %1887
        %1889 = vrot.lane.b32.xlu0 %v322, 95
        %v1890 = vpop.permute.xlu0 %1889
        %1891 = vrot.lane.b32.xlu0 %v323, 95
        %v1892 = vpop.permute.xlu0 %1891
        %1893 = vrot.lane.b32.xlu0 %v324, 95
        %v1894 = vpop.permute.xlu0 %1893
        %1895 = vrot.lane.b32.xlu0 %v325, 95
        %v1896 = vpop.permute.xlu0 %1895
        %1897 = vrot.lane.b32.xlu0 %v326, 95
        %v1898 = vpop.permute.xlu0 %1897
        %1899 = vrot.lane.b32.xlu0 %v327, 95
        %v1900 = vpop.permute.xlu0 %1899
        %1901 = vrot.lane.b32.xlu0 %v328, 95
        %v1902 = vpop.permute.xlu0 %1901
        %1903 = vrot.lane.b32.xlu0 %v329, 95
        %v1904 = vpop.permute.xlu0 %1903
        %1905 = vrot.lane.b32.xlu0 %v330, 95
        %v1906 = vpop.permute.xlu0 %1905
        %1907 = vrot.lane.b32.xlu0 %v331, 95
        %v1908 = vpop.permute.xlu0 %1907
        %1909 = vrot.lane.b32.xlu0 %v332, 95
        %v1910 = vpop.permute.xlu0 %1909
        %1911 = vrot.lane.b32.xlu0 %v333, 95
        %v1912 = vpop.permute.xlu0 %1911
        %1913 = vrot.lane.b32.xlu0 %v334, 95
        %v1914 = vpop.permute.xlu0 %1913
        %vm1915 = vcmask 777216
        %v1916 = vsel %vm1915, %v1884, %v1886
        %v1917 = vsel %vm1915, %v1888, %v1890
        %v1918 = vsel %vm1915, %v1892, %v1894
        %v1919 = vsel %vm1915, %v1896, %v1898
        %v1920 = vsel %vm1915, %v1900, %v1902
        %v1921 = vsel %vm1915, %v1904, %v1906
        %v1922 = vsel %vm1915, %v1908, %v1910
        %v1923 = vsel %vm1915, %v1912, %v1914
        %v1933 = vsel %vm404, %v1875, 0
        %v1936 = vsel %vm404, %v1876, 0
        %v1939 = vsel %vm404, %v1877, 0
        %v1942 = vsel %vm404, %v1878, 0
        %v1945 = vsel %vm404, %v1879, 0
        %v1948 = vsel %vm404, %v1880, 0
        %v1951 = vsel %vm404, %v1881, 0
        %v1954 = vsel %vm404, %v1882, 0
        %1956 = vmatprep.subr.mxu0 0.0
        %1957 = vmatpush1.msra.mxu0 0.0
        %1958 = vmatprep.subr.mxu0 0.0
        %1959 = vmatpush1.msra.mxu0 0.0
        %1960 = vmatprep.subr.mxu0 0.0
        %1961 = vmatpush1.msra.mxu0 0.0
        %1962 = vmatprep.subr.mxu0 0.0
        %1963 = vmatpush1.msra.mxu0 0.0
        %1964 = vmatprep.subr.mxu0 0.0
        %1965 = vmatpush1.msra.mxu0 0.0
        %1966 = vmatprep.subr.mxu0 0.0
        %1967 = vmatpush1.msra.mxu0 0.0
        %1968 = vmatprep.subr.mxu0 0.0
        %1969 = vmatpush1.msra.mxu0 0.0
        %1970 = vmatprep.subr.mxu0 0.0
        %1971 = vmatpush1.msra.mxu0 0.0
        %1972 = vmatprep.subr.mxu0 0.0
        %1973 = vmatpush1.msra.mxu0 %v1923
        %1974 = vmatprep.subr.mxu0 0.0
        %1975 = vmatpush1.msra.mxu0 %v1922
        %1976 = vmatprep.subr.mxu0 0.0
        %1977 = vmatpush1.msra.mxu0 %v1921
        %1978 = vmatprep.subr.mxu0 0.0
        %1979 = vmatpush1.msra.mxu0 %v1920
        %1980 = vmatprep.subr.mxu0 0.0
        %1981 = vmatpush1.msra.mxu0 %v1919
        %1982 = vmatprep.subr.mxu0 0.0
        %1983 = vmatpush1.msra.mxu0 %v1918
        %1984 = vmatprep.subr.mxu0 0.0
        %1985 = vmatpush1.msra.mxu0 %v1917
        %1986 = vmatprep.subr.mxu0 0.0
        %1987 = vmatpush1.msra.mxu0 %v1916
        %1988 = vmatprep.subr.mxu0 0.0
        %1989 = vmatpush2.msra.mxu0 0.0
        %1990 = vmatprep.subr.mxu0 0.0
        %1991 = vmatpush2.msra.mxu0 0.0
        %1992 = vmatprep.subr.mxu0 0.0
        %1993 = vmatpush2.msra.mxu0 0.0
        %1994 = vmatprep.subr.mxu0 0.0
        %1995 = vmatpush2.msra.mxu0 0.0
        %1996 = vmatprep.subr.mxu0 0.0
        %1997 = vmatpush2.msra.mxu0 0.0
        %1998 = vmatprep.subr.mxu0 0.0
        %1999 = vmatpush2.msra.mxu0 0.0
        %2000 = vmatprep.subr.mxu0 0.0
        %2001 = vmatpush2.msra.mxu0 0.0
        %2002 = vmatprep.subr.mxu0 0.0
        %2003 = vmatpush2.msra.mxu0 0.0
        %2004 = vmatprep.subr.mxu0 0.0
        %2005 = vmatpush2.msra.mxu0 0.0
        %2006 = vmatprep.subr.mxu0 0.0
        %2007 = vmatpush2.msra.mxu0 0.0
        %2008 = vmatprep.subr.mxu0 0.0
        %2009 = vmatpush2.msra.mxu0 0.0
        %2010 = vmatprep.subr.mxu0 0.0
        %2011 = vmatpush2.msra.mxu0 0.0
        %2012 = vmatprep.subr.mxu0 0.0
        %2013 = vmatpush2.msra.mxu0 0.0
        %2014 = vmatprep.subr.mxu0 0.0
        %2015 = vmatpush2.msra.mxu0 0.0
        %2016 = vmatprep.subr.mxu0 0.0
        %2017 = vmatpush2.msra.mxu0 0.0
        %2018 = vmatprep.subr.mxu0 0.0
        %2019 = vmatpush2.msra.mxu0 0.0
        %2020 = vmatprep.mubr.f32.mxu0 0.0
        %2021 = vmatmul.mubr.f32.gmra.mxu0 %v1933
        %v2022 = vpop.f32.mrf.mxu0
        %v2023 = vadd.f32 0.0, %v2022
        %v2024 = vpop.f32.mrf.mxu0
        %2025 = vmatprep.mubr.f32.mxu0 0.0
        %2026 = vmatmul.mubr.f32.gmra.mxu0 %v1936
        %v2027 = vpop.f32.mrf.mxu0
        %v2028 = vadd.f32 0.0, %v2027
        %v2029 = vpop.f32.mrf.mxu0
        %2030 = vmatprep.mubr.f32.mxu0 0.0
        %2031 = vmatmul.mubr.f32.gmra.mxu0 %v1939
        %v2032 = vpop.f32.mrf.mxu0
        %v2033 = vadd.f32 0.0, %v2032
        %v2034 = vpop.f32.mrf.mxu0
        %2035 = vmatprep.mubr.f32.mxu0 0.0
        %2036 = vmatmul.mubr.f32.gmra.mxu0 %v1942
        %v2037 = vpop.f32.mrf.mxu0
        %v2038 = vadd.f32 0.0, %v2037
        %v2039 = vpop.f32.mrf.mxu0
        %2040 = vmatprep.mubr.f32.mxu0 0.0
        %2041 = vmatmul.mubr.f32.gmra.mxu0 %v1945
        %v2042 = vpop.f32.mrf.mxu0
        %v2043 = vadd.f32 0.0, %v2042
        %v2044 = vpop.f32.mrf.mxu0
        %2045 = vmatprep.mubr.f32.mxu0 0.0
        %2046 = vmatmul.mubr.f32.gmra.mxu0 %v1948
        %v2047 = vpop.f32.mrf.mxu0
        %v2048 = vadd.f32 0.0, %v2047
        %v2049 = vpop.f32.mrf.mxu0
        %2050 = vmatprep.mubr.f32.mxu0 0.0
        %2051 = vmatmul.mubr.f32.gmra.mxu0 %v1951
        %v2052 = vpop.f32.mrf.mxu0
        %v2053 = vadd.f32 0.0, %v2052
        %v2054 = vpop.f32.mrf.mxu0
        %2055 = vmatprep.mubr.f32.mxu0 0.0
        %2056 = vmatmul.mubr.f32.gmra.mxu0 %v1954
        %v2057 = vpop.f32.mrf.mxu0
        %v2058 = vadd.f32 0.0, %v2057
        %v2059 = vpop.f32.mrf.mxu0
        %2060 = vdwg.mxu0
        %v2061 = vadd.f32 %v1866, %v2023
        %v2062 = vadd.f32 %v1867, %v2028
        %v2063 = vadd.f32 %v1868, %v2033
        %v2064 = vadd.f32 %v1869, %v2038
        %v2065 = vadd.f32 %v1870, %v2043
        %v2066 = vadd.f32 %v1871, %v2048
        %v2067 = vadd.f32 %v1872, %v2053
        %v2068 = vadd.f32 %v1873, %v2058
        %2069 = vrot.lane.b32.xlu0 %v756, 34
        %v2070 = vpop.permute.xlu0 %2069
        %v2072 = vmul.f32 %v319, %v2070
        %v2073 = vmul.f32 %v320, %v2070
        %v2074 = vmul.f32 %v321, %v2070
        %v2075 = vmul.f32 %v322, %v2070
        %v2076 = vmul.f32 %v323, %v2070
        %v2077 = vmul.f32 %v324, %v2070
        %v2078 = vmul.f32 %v325, %v2070
        %v2079 = vmul.f32 %v326, %v2070
        %v2080 = vmul.f32 %v327, %v2070
        %v2081 = vmul.f32 %v328, %v2070
        %v2082 = vmul.f32 %v329, %v2070
        %v2083 = vmul.f32 %v330, %v2070
        %v2084 = vmul.f32 %v331, %v2070
        %v2085 = vmul.f32 %v332, %v2070
        %v2086 = vmul.f32 %v333, %v2070
        %v2087 = vmul.f32 %v334, %v2070
        %s2088 = scalar_lea.vmem %s1, 512
        %v2089 = vld [vmem:[%s2088] sm:$0xff]
        %v2090 = vld [vmem:[%s2088 + $0x8] sm:$0xff]
        %v2091 = vld [vmem:[%s2088 + $0x10] sm:$0xff]
        %v2092 = vld [vmem:[%s2088 + $0x18] sm:$0xff]
        %v2093 = vld [vmem:[%s2088 + $0x20] sm:$0xff]
        %v2094 = vld [vmem:[%s2088 + $0x28] sm:$0xff]
        %v2095 = vld [vmem:[%s2088 + $0x30] sm:$0xff]
        %v2096 = vld [vmem:[%s2088 + $0x38] sm:$0xff]
        %2113 = vrot.lane.b32.xlu0 %v2072, 94
        %v2114 = vpop.permute.xlu0 %2113
        %2115 = vrot.lane.b32.xlu0 %v2073, 94
        %v2116 = vpop.permute.xlu0 %2115
        %2117 = vrot.lane.b32.xlu0 %v2074, 94
        %v2118 = vpop.permute.xlu0 %2117
        %2119 = vrot.lane.b32.xlu0 %v2075, 94
        %v2120 = vpop.permute.xlu0 %2119
        %2121 = vrot.lane.b32.xlu0 %v2076, 94
        %v2122 = vpop.permute.xlu0 %2121
        %2123 = vrot.lane.b32.xlu0 %v2077, 94
        %v2124 = vpop.permute.xlu0 %2123
        %2125 = vrot.lane.b32.xlu0 %v2078, 94
        %v2126 = vpop.permute.xlu0 %2125
        %2127 = vrot.lane.b32.xlu0 %v2079, 94
        %v2128 = vpop.permute.xlu0 %2127
        %2129 = vrot.lane.b32.xlu0 %v2080, 94
        %v2130 = vpop.permute.xlu0 %2129
        %2131 = vrot.lane.b32.xlu0 %v2081, 94
        %v2132 = vpop.permute.xlu0 %2131
        %2133 = vrot.lane.b32.xlu0 %v2082, 94
        %v2134 = vpop.permute.xlu0 %2133
        %2135 = vrot.lane.b32.xlu0 %v2083, 94
        %v2136 = vpop.permute.xlu0 %2135
        %2137 = vrot.lane.b32.xlu0 %v2084, 94
        %v2138 = vpop.permute.xlu0 %2137
        %2139 = vrot.lane.b32.xlu0 %v2085, 94
        %v2140 = vpop.permute.xlu0 %2139
        %2141 = vrot.lane.b32.xlu0 %v2086, 94
        %v2142 = vpop.permute.xlu0 %2141
        %2143 = vrot.lane.b32.xlu0 %v2087, 94
        %v2144 = vpop.permute.xlu0 %2143
        %vm2145 = vcmask 769024
        %v2146 = vsel %vm2145, %v2114, %v2116
        %v2147 = vsel %vm2145, %v2118, %v2120
        %v2148 = vsel %vm2145, %v2122, %v2124
        %v2149 = vsel %vm2145, %v2126, %v2128
        %v2150 = vsel %vm2145, %v2130, %v2132
        %v2151 = vsel %vm2145, %v2134, %v2136
        %v2152 = vsel %vm2145, %v2138, %v2140
        %v2153 = vsel %vm2145, %v2142, %v2144
        %v2163 = vsel %vm404, %v2089, 0
        %v2166 = vsel %vm404, %v2090, 0
        %v2169 = vsel %vm404, %v2091, 0
        %v2172 = vsel %vm404, %v2092, 0
        %v2175 = vsel %vm404, %v2093, 0
        %v2178 = vsel %vm404, %v2094, 0
        %v2181 = vsel %vm404, %v2095, 0
        %v2184 = vsel %vm404, %v2096, 0
        %2186 = vmatprep.subr.mxu0 0.0
        %2187 = vmatpush1.msra.mxu0 0.0
        %2188 = vmatprep.subr.mxu0 0.0
        %2189 = vmatpush1.msra.mxu0 0.0
        %2190 = vmatprep.subr.mxu0 0.0
        %2191 = vmatpush1.msra.mxu0 0.0
        %2192 = vmatprep.subr.mxu0 0.0
        %2193 = vmatpush1.msra.mxu0 0.0
        %2194 = vmatprep.subr.mxu0 0.0
        %2195 = vmatpush1.msra.mxu0 0.0
        %2196 = vmatprep.subr.mxu0 0.0
        %2197 = vmatpush1.msra.mxu0 0.0
        %2198 = vmatprep.subr.mxu0 0.0
        %2199 = vmatpush1.msra.mxu0 0.0
        %2200 = vmatprep.subr.mxu0 0.0
        %2201 = vmatpush1.msra.mxu0 0.0
        %2202 = vmatprep.subr.mxu0 0.0
        %2203 = vmatpush1.msra.mxu0 %v2153
        %2204 = vmatprep.subr.mxu0 0.0
        %2205 = vmatpush1.msra.mxu0 %v2152
        %2206 = vmatprep.subr.mxu0 0.0
        %2207 = vmatpush1.msra.mxu0 %v2151
        %2208 = vmatprep.subr.mxu0 0.0
        %2209 = vmatpush1.msra.mxu0 %v2150
        %2210 = vmatprep.subr.mxu0 0.0
        %2211 = vmatpush1.msra.mxu0 %v2149
        %2212 = vmatprep.subr.mxu0 0.0
        %2213 = vmatpush1.msra.mxu0 %v2148
        %2214 = vmatprep.subr.mxu0 0.0
        %2215 = vmatpush1.msra.mxu0 %v2147
        %2216 = vmatprep.subr.mxu0 0.0
        %2217 = vmatpush1.msra.mxu0 %v2146
        %2218 = vmatprep.subr.mxu0 0.0
        %2219 = vmatpush2.msra.mxu0 0.0
        %2220 = vmatprep.subr.mxu0 0.0
        %2221 = vmatpush2.msra.mxu0 0.0
        %2222 = vmatprep.subr.mxu0 0.0
        %2223 = vmatpush2.msra.mxu0 0.0
        %2224 = vmatprep.subr.mxu0 0.0
        %2225 = vmatpush2.msra.mxu0 0.0
        %2226 = vmatprep.subr.mxu0 0.0
        %2227 = vmatpush2.msra.mxu0 0.0
        %2228 = vmatprep.subr.mxu0 0.0
        %2229 = vmatpush2.msra.mxu0 0.0
        %2230 = vmatprep.subr.mxu0 0.0
        %2231 = vmatpush2.msra.mxu0 0.0
        %2232 = vmatprep.subr.mxu0 0.0
        %2233 = vmatpush2.msra.mxu0 0.0
        %2234 = vmatprep.subr.mxu0 0.0
        %2235 = vmatpush2.msra.mxu0 0.0
        %2236 = vmatprep.subr.mxu0 0.0
        %2237 = vmatpush2.msra.mxu0 0.0
        %2238 = vmatprep.subr.mxu0 0.0
        %2239 = vmatpush2.msra.mxu0 0.0
        %2240 = vmatprep.subr.mxu0 0.0
        %2241 = vmatpush2.msra.mxu0 0.0
        %2242 = vmatprep.subr.mxu0 0.0
        %2243 = vmatpush2.msra.mxu0 0.0
        %2244 = vmatprep.subr.mxu0 0.0
        %2245 = vmatpush2.msra.mxu0 0.0
        %2246 = vmatprep.subr.mxu0 0.0
        %2247 = vmatpush2.msra.mxu0 0.0
        %2248 = vmatprep.subr.mxu0 0.0
        %2249 = vmatpush2.msra.mxu0 0.0
        %2250 = vmatprep.mubr.f32.mxu0 0.0
        %2251 = vmatmul.mubr.f32.gmra.mxu0 %v2163
        %v2252 = vpop.f32.mrf.mxu0
        %v2253 = vadd.f32 0.0, %v2252
        %v2254 = vpop.f32.mrf.mxu0
        %2255 = vmatprep.mubr.f32.mxu0 0.0
        %2256 = vmatmul.mubr.f32.gmra.mxu0 %v2166
        %v2257 = vpop.f32.mrf.mxu0
        %v2258 = vadd.f32 0.0, %v2257
        %v2259 = vpop.f32.mrf.mxu0
        %2260 = vmatprep.mubr.f32.mxu0 0.0
        %2261 = vmatmul.mubr.f32.gmra.mxu0 %v2169
        %v2262 = vpop.f32.mrf.mxu0
        %v2263 = vadd.f32 0.0, %v2262
        %v2264 = vpop.f32.mrf.mxu0
        %2265 = vmatprep.mubr.f32.mxu0 0.0
        %2266 = vmatmul.mubr.f32.gmra.mxu0 %v2172
        %v2267 = vpop.f32.mrf.mxu0
        %v2268 = vadd.f32 0.0, %v2267
        %v2269 = vpop.f32.mrf.mxu0
        %2270 = vmatprep.mubr.f32.mxu0 0.0
        %2271 = vmatmul.mubr.f32.gmra.mxu0 %v2175
        %v2272 = vpop.f32.mrf.mxu0
        %v2273 = vadd.f32 0.0, %v2272
        %v2274 = vpop.f32.mrf.mxu0
        %2275 = vmatprep.mubr.f32.mxu0 0.0
        %2276 = vmatmul.mubr.f32.gmra.mxu0 %v2178
        %v2277 = vpop.f32.mrf.mxu0
        %v2278 = vadd.f32 0.0, %v2277
        %v2279 = vpop.f32.mrf.mxu0
        %2280 = vmatprep.mubr.f32.mxu0 0.0
        %2281 = vmatmul.mubr.f32.gmra.mxu0 %v2181
        %v2282 = vpop.f32.mrf.mxu0
        %v2283 = vadd.f32 0.0, %v2282
        %v2284 = vpop.f32.mrf.mxu0
        %2285 = vmatprep.mubr.f32.mxu0 0.0
        %2286 = vmatmul.mubr.f32.gmra.mxu0 %v2184
        %v2287 = vpop.f32.mrf.mxu0
        %v2288 = vadd.f32 0.0, %v2287
        %v2289 = vpop.f32.mrf.mxu0
        %2290 = vdwg.mxu0
        %v2291 = vadd.f32 %v2061, %v2253
        %v2292 = vadd.f32 %v2062, %v2258
        %v2293 = vadd.f32 %v2063, %v2263
        %v2294 = vadd.f32 %v2064, %v2268
        %v2295 = vadd.f32 %v2065, %v2273
        %v2296 = vadd.f32 %v2066, %v2278
        %v2297 = vadd.f32 %v2067, %v2283
        %v2298 = vadd.f32 %v2068, %v2288
        %2299 = vst [vmem:[%s269] sm:$0xff] %v2291
        %2300 = vst [vmem:[%s269 + $0x8] sm:$0xff] %v2292
        %2301 = vst [vmem:[%s269 + $0x10] sm:$0xff] %v2293
        %2302 = vst [vmem:[%s269 + $0x18] sm:$0xff] %v2294
        %2303 = vst [vmem:[%s269 + $0x20] sm:$0xff] %v2295
        %2304 = vst [vmem:[%s269 + $0x28] sm:$0xff] %v2296
        %2305 = vst [vmem:[%s269 + $0x30] sm:$0xff] %v2297
        %2306 = vst [vmem:[%s269 + $0x38] sm:$0xff] %v2298
        %2307 = vadd.xlane.f32.xlu0 %v2291
        %v2308 = vpop.xlane.xlu0 %2307
        %2309 = vadd.xlane.f32.xlu0 %v2292
        %v2310 = vpop.xlane.xlu0 %2309
        %2311 = vadd.xlane.f32.xlu0 %v2293
        %v2312 = vpop.xlane.xlu0 %2311
        %2313 = vadd.xlane.f32.xlu0 %v2294
        %v2314 = vpop.xlane.xlu0 %2313
        %2315 = vadd.xlane.f32.xlu0 %v2295
        %v2316 = vpop.xlane.xlu0 %2315
        %2317 = vadd.xlane.f32.xlu0 %v2296
        %v2318 = vpop.xlane.xlu0 %2317
        %2319 = vadd.xlane.f32.xlu0 %v2297
        %v2320 = vpop.xlane.xlu0 %2319
        %2321 = vadd.xlane.f32.xlu0 %v2298
        %v2322 = vpop.xlane.xlu0 %2321
        %v2323 = vmul.f32 %v2308, 0.0078125
        %v2324 = vmul.f32 %v2310, 0.0078125
        %v2325 = vmul.f32 %v2312, 0.0078125
        %v2326 = vmul.f32 %v2314, 0.0078125
        %v2327 = vmul.f32 %v2316, 0.0078125
        %v2328 = vmul.f32 %v2318, 0.0078125
        %v2329 = vmul.f32 %v2320, 0.0078125
        %v2330 = vmul.f32 %v2322, 0.0078125
        %v2331 = vsub.f32 %v2291, %v2323
        %v2332 = vsub.f32 %v2292, %v2324
        %v2333 = vsub.f32 %v2293, %v2325
        %v2334 = vsub.f32 %v2294, %v2326
        %v2335 = vsub.f32 %v2295, %v2327
        %v2336 = vsub.f32 %v2296, %v2328
        %v2337 = vsub.f32 %v2297, %v2329
        %v2338 = vsub.f32 %v2298, %v2330
        %vm2339 = vcmask 7168
        %2340 = vst.msk [vmem:[%s309] sm:$0xff] %vm2339, %v2308
        %2341 = vst.msk [vmem:[%s309 + $0x8] sm:$0xff] %vm2339, %v2310
        %2342 = vst.msk [vmem:[%s309 + $0x10] sm:$0xff] %vm2339, %v2312
        %2343 = vst.msk [vmem:[%s309 + $0x18] sm:$0xff] %vm2339, %v2314
        %2344 = vst.msk [vmem:[%s309 + $0x20] sm:$0xff] %vm2339, %v2316
        %2345 = vst.msk [vmem:[%s309 + $0x28] sm:$0xff] %vm2339, %v2318
        %2346 = vst.msk [vmem:[%s309 + $0x30] sm:$0xff] %vm2339, %v2320
        %2347 = vst.msk [vmem:[%s309 + $0x38] sm:$0xff] %vm2339, %v2322
        %v2348 = vmul.f32 %v2331, %v2331
        %v2349 = vmul.f32 %v2332, %v2332
        %v2350 = vmul.f32 %v2333, %v2333
        %v2351 = vmul.f32 %v2334, %v2334
        %v2352 = vmul.f32 %v2335, %v2335
        %v2353 = vmul.f32 %v2336, %v2336
        %v2354 = vmul.f32 %v2337, %v2337
        %v2355 = vmul.f32 %v2338, %v2338
        %2356 = vadd.xlane.f32.xlu0 %v2348
        %v2357 = vpop.xlane.xlu0 %2356
        %2358 = vadd.xlane.f32.xlu0 %v2349
        %v2359 = vpop.xlane.xlu0 %2358
        %2360 = vadd.xlane.f32.xlu0 %v2350
        %v2361 = vpop.xlane.xlu0 %2360
        %2362 = vadd.xlane.f32.xlu0 %v2351
        %v2363 = vpop.xlane.xlu0 %2362
        %2364 = vadd.xlane.f32.xlu0 %v2352
        %v2365 = vpop.xlane.xlu0 %2364
        %2366 = vadd.xlane.f32.xlu0 %v2353
        %v2367 = vpop.xlane.xlu0 %2366
        %2368 = vadd.xlane.f32.xlu0 %v2354
        %v2369 = vpop.xlane.xlu0 %2368
        %2370 = vadd.xlane.f32.xlu0 %v2355
        %v2371 = vpop.xlane.xlu0 %2370
        %2372 = vst.msk [vmem:[%s318] sm:$0xff] %vm2339, %v2357
        %2373 = vst.msk [vmem:[%s318 + $0x8] sm:$0xff] %vm2339, %v2359
        %2374 = vst.msk [vmem:[%s318 + $0x10] sm:$0xff] %vm2339, %v2361
        %2375 = vst.msk [vmem:[%s318 + $0x18] sm:$0xff] %vm2339, %v2363
        %2376 = vst.msk [vmem:[%s318 + $0x20] sm:$0xff] %vm2339, %v2365
        %2377 = vst.msk [vmem:[%s318 + $0x28] sm:$0xff] %vm2339, %v2367
        %2378 = vst.msk [vmem:[%s318 + $0x30] sm:$0xff] %vm2339, %v2369
        %2379 = vst.msk [vmem:[%s318 + $0x38] sm:$0xff] %vm2339, %v2371
        %s2380 = sand.u32 %s131, 1
        %s2381 = sand.u32 %s131, 1
        %s2382 = smul.addr %s2381, 64
        %s2383 = scalar_lea.vmem [#allocation2], %s2382
        %p2384 = scmp.lt.s32.totalorder %s22, 1
        %s2385 = scalar_select %p2384, %s22, 1
        %p2386 = scmp.lt.s32.totalorder %s23, 1
        %s2387 = scalar_select %p2386, %s23, 1
        %s2388 = smul.addr %s2387, 8
        %s2389 = smul.addr %s2385, 16
        %s2390 = sadd.s32 %s2388, %s2389
        %s2391 = smul.addr %s2390, 8
        %s2392 = scalar_lea.vmem %s5, %s2391
        %p2393 = scmp.lt.s32.totalorder %s22, 1
        %s2394 = scalar_select %p2393, %s22, 1
        %p2395 = scmp.lt.s32.totalorder %s23, 1
        %s2396 = scalar_select %p2395, %s23, 1
        %s2397 = smul.addr %s2396, 8
        %s2398 = smul.addr %s2394, 16
        %s2399 = sadd.s32 %s2397, %s2398
        %s2400 = smul.addr %s2399, 8
        %s2401 = scalar_lea.vmem %s6, %s2400
        // Predicated region
        $region37: #{cov4_forward.2} parent=35 // pred_check
          %p2402 = pneg %p141
        $region38: #{cov4_forward.2} parent=35 // pred_check_branch
          %2404 = sbr.rel (%p2402) target = $region40
        $region39: #{cov4_forward.2} parent=35 // pred_region
          %s2405 = smul.addr %s22, 16
          %s2406 = sadd.s32 %s23, %s2405
          %s2407 = smul.addr %s2406, 8
          %s2408 = scalar_lea.vmem %s4, %s2407
          // Predicated region
          $region41: #{cov4_forward.2} parent=39 // pred_check
            _
          $region42: #{cov4_forward.2} parent=39 // pred_check_branch
            %2410 = sbr.rel (0) target = $region44
          $region43: #{cov4_forward.2} parent=39 // pred_region
            // Predicated region
            $region45: #{cov4_forward.2} parent=43 // pred_check
              _
            $region46: #{cov4_forward.2} parent=43 // pred_check_branch
              %2412 = sbr.rel (0) target = $region48
            $region47: #{cov4_forward.2} parent=43 // pred_region
              // Predicated region
              $region60: #{cov4_forward.2} parent=47 // pred_check
                _
              $region61: #{cov4_forward.2} parent=47 // pred_check_branch
                %2442 = sbr.rel (0) target = $region63
              $region62: #{cov4_forward.2} parent=47 // pred_region
                loop: start=0, step=1, limit=1
                $region64: #{cov4_forward.2} parent=62 // loop_pre_header
                  _
                $region65: #{cov4_forward.2} parent=62 // loop_header
                  %s2444 = sphi 0, %s2448
                  %p2445 = scmp.ge.s32.totalorder %s2444, 1
                  %s2449 = sphi %s2383, %s2383
                  %s2450 = sphi %s2408, %s2408
                $region66: #{cov4_forward.2} parent=62 // loop_header_branch
                  %2447 = sbr.rel (%p2445) target = $region70
                $region67: #{cov4_forward.2} parent=62 // loop_body
                  %v2451 = vld [vmem:[%s2449] sm:$0xff]
                  %2452 = vst [vmem:[%s2450] sm:$0xff] %v2451
                  %v2453 = vld [vmem:[%s2449 + $0x8] sm:$0xff]
                  %2454 = vst [vmem:[%s2450 + $0x10] sm:$0xff] %v2453
                  %v2455 = vld [vmem:[%s2449 + $0x10] sm:$0xff]
                  %2456 = vst [vmem:[%s2450 + $0x20] sm:$0xff] %v2455
                  %v2457 = vld [vmem:[%s2449 + $0x18] sm:$0xff]
                  %2458 = vst [vmem:[%s2450 + $0x30] sm:$0xff] %v2457
                  %v2459 = vld [vmem:[%s2449 + $0x20] sm:$0xff]
                  %2460 = vst [vmem:[%s2450 + $0x40] sm:$0xff] %v2459
                  %v2461 = vld [vmem:[%s2449 + $0x28] sm:$0xff]
                  %2462 = vst [vmem:[%s2450 + $0x50] sm:$0xff] %v2461
                  %v2463 = vld [vmem:[%s2449 + $0x30] sm:$0xff]
                  %2464 = vst [vmem:[%s2450 + $0x60] sm:$0xff] %v2463
                  %v2465 = vld [vmem:[%s2449 + $0x38] sm:$0xff]
                  %2466 = vst [vmem:[%s2450 + $0x70] sm:$0xff] %v2465
                $region68: #{cov4_forward.2} parent=62 // loop_footer
                  %s2448 = sadd.s32 1, %s2444
                $region69: #{cov4_forward.2} parent=62 // loop_footer_branch
                  %2443 = sbr.rel target = $region65
                $region70: #{cov4_forward.2} parent=62 // loop_exit
                  _
              $region63: #{cov4_forward.2} parent=47 // pred_fallthru
                _
              // Predicated region
              $region71: #{cov4_forward.2} parent=47 // pred_check
                _
              $region72: #{cov4_forward.2} parent=47 // pred_check_branch
                %2468 = sbr.rel target = $region74
              $region73: #{cov4_forward.2} parent=47 // pred_region
                _
              $region74: #{cov4_forward.2} parent=47 // pred_fallthru
                _
            $region48: #{cov4_forward.2} parent=43 // pred_fallthru
              _
            // Predicated region
            $region49: #{cov4_forward.2} parent=43 // pred_check
              _
            $region50: #{cov4_forward.2} parent=43 // pred_check_branch
              %2414 = sbr.rel target = $region52
            $region51: #{cov4_forward.2} parent=43 // pred_region
              %s2416 = ssub.s32 256, 1
              loop: start=0, step=1, limit=1
              $region53: #{cov4_forward.2} parent=51 // loop_pre_header
                _
              $region54: #{cov4_forward.2} parent=51 // loop_header
                %s2418 = sphi 0, %s2422
                %p2419 = scmp.ge.s32.totalorder %s2418, 1
                %s2423 = sphi %s2383, %s2383
                %s2424 = sphi %s2408, %s2408
              $region55: #{cov4_forward.2} parent=51 // loop_header_branch
                %2421 = sbr.rel (%p2419) target = $region59
              $region56: #{cov4_forward.2} parent=51 // loop_body
                %v2425 = vld [vmem:[%s2423] sm:%s2416]
                %2426 = vst [vmem:[%s2424] sm:%s2416] %v2425
                %v2427 = vld [vmem:[%s2423 + $0x8] sm:%s2416]
                %2428 = vst [vmem:[%s2424 + $0x10] sm:%s2416] %v2427
                %v2429 = vld [vmem:[%s2423 + $0x10] sm:%s2416]
                %2430 = vst [vmem:[%s2424 + $0x20] sm:%s2416] %v2429
                %v2431 = vld [vmem:[%s2423 + $0x18] sm:%s2416]
                %2432 = vst [vmem:[%s2424 + $0x30] sm:%s2416] %v2431
                %v2433 = vld [vmem:[%s2423 + $0x20] sm:%s2416]
                %2434 = vst [vmem:[%s2424 + $0x40] sm:%s2416] %v2433
                %v2435 = vld [vmem:[%s2423 + $0x28] sm:%s2416]
                %2436 = vst [vmem:[%s2424 + $0x50] sm:%s2416] %v2435
                %v2437 = vld [vmem:[%s2423 + $0x30] sm:%s2416]
                %2438 = vst [vmem:[%s2424 + $0x60] sm:%s2416] %v2437
                %v2439 = vld [vmem:[%s2423 + $0x38] sm:%s2416]
                %2440 = vst [vmem:[%s2424 + $0x70] sm:%s2416] %v2439
              $region57: #{cov4_forward.2} parent=51 // loop_footer
                %s2422 = sadd.s32 1, %s2418
              $region58: #{cov4_forward.2} parent=51 // loop_footer_branch
                %2417 = sbr.rel target = $region54
              $region59: #{cov4_forward.2} parent=51 // loop_exit
                _
            $region52: #{cov4_forward.2} parent=43 // pred_fallthru
              _
          $region44: #{cov4_forward.2} parent=39 // pred_fallthru
            _
          %2469 = vnop
        $region40: #{cov4_forward.2} parent=35 // pred_fallthru
          _
        // Predicated region
        $region75: #{cov4_forward.2} parent=35 // pred_check
          %p2470 = pneg %p169
        $region76: #{cov4_forward.2} parent=35 // pred_check_branch
          %2472 = sbr.rel (%p2470) target = $region78
        $region77: #{cov4_forward.2} parent=35 // pred_region
          _
        $region78: #{cov4_forward.2} parent=35 // pred_fallthru
          _
        // Predicated region
        $region79: #{cov4_forward.2} parent=35 // pred_check
          %p2473 = pneg %p197
        $region80: #{cov4_forward.2} parent=35 // pred_check_branch
          %2475 = sbr.rel (%p2473) target = $region82
        $region81: #{cov4_forward.2} parent=35 // pred_region
          _
        $region82: #{cov4_forward.2} parent=35 // pred_fallthru
          _
      $region36: #{cov4_forward.2} parent=5 // pred_fallthru
        _
      %p2476 = scmp.le.s32.totalorder 2, %s13
      // Predicated region
      $region83: #{cov4_forward.2} parent=5 // pred_check
        %p2477 = pneg %p2476
      $region84: #{cov4_forward.2} parent=5 // pred_check_branch
        %2479 = sbr.rel (%p2477) target = $region86
      $region85: #{cov4_forward.2} parent=5 // pred_region
        %s2480 = ssub.s32 %s13, 2
        // Predicated region
        $region87: #{cov4_forward.2} parent=85 // pred_check
          %p2481 = pneg %p147
        $region88: #{cov4_forward.2} parent=85 // pred_check_branch
          %2483 = sbr.rel (%p2481) target = $region90
        $region89: #{cov4_forward.2} parent=85 // pred_region
          %s2484 = sand.u32 %s132, 1
          %s2485 = sand.u32 %s132, 1
          %s2486 = smul.addr %s2485, 64
          %s2487 = scalar_lea.vmem [#allocation2], %s2486
        $region90: #{cov4_forward.2} parent=85 // pred_fallthru
          _
        // Predicated region
        $region91: #{cov4_forward.2} parent=85 // pred_check
          %p2488 = pneg %p175
        $region92: #{cov4_forward.2} parent=85 // pred_check_branch
          %2490 = sbr.rel (%p2488) target = $region94
        $region93: #{cov4_forward.2} parent=85 // pred_region
          %p2491 = scmp.lt.s32.totalorder %s24, 1
          %s2492 = scalar_select %p2491, %s24, 1
          %p2493 = scmp.lt.s32.totalorder %s25, 1
          %s2494 = scalar_select %p2493, %s25, 1
          %s2495 = smul.addr %s2494, 8
          %s2496 = smul.addr %s2492, 16
          %s2497 = sadd.s32 %s2495, %s2496
          %s2498 = smul.addr %s2497, 8
          %s2499 = scalar_lea.vmem %s5, %s2498
        $region94: #{cov4_forward.2} parent=85 // pred_fallthru
          _
        // Predicated region
        $region95: #{cov4_forward.2} parent=85 // pred_check
          %p2500 = pneg %p203
        $region96: #{cov4_forward.2} parent=85 // pred_check_branch
          %2502 = sbr.rel (%p2500) target = $region98
        $region97: #{cov4_forward.2} parent=85 // pred_region
          %p2503 = scmp.lt.s32.totalorder %s24, 1
          %s2504 = scalar_select %p2503, %s24, 1
          %p2505 = scmp.lt.s32.totalorder %s25, 1
          %s2506 = scalar_select %p2505, %s25, 1
          %s2507 = smul.addr %s2506, 8
          %s2508 = smul.addr %s2504, 16
          %s2509 = sadd.s32 %s2507, %s2508
          %s2510 = smul.addr %s2509, 8
          %s2511 = scalar_lea.vmem %s6, %s2510
        $region98: #{cov4_forward.2} parent=85 // pred_fallthru
          _
      $region86: #{cov4_forward.2} parent=5 // pred_fallthru
        _
    $region6: #{cov4_forward.2} parent=1 // loop_footer
      %s17 = sadd.s32 1, %s13
    $region7: #{cov4_forward.2} parent=1 // loop_footer_branch
      %12 = sbr.rel target = $region3
    $region8: #{cov4_forward.2} parent=1 // loop_exit
      _

</llo_original>
